<compile_context>
chip_gen: v7x
topology: tpu7x:2x2x1
jax: 0.10.0
libtpu: 0.0.40
codegen_flags: <defaults>
</compile_context>

<pallas_src>
import jax
import jax.numpy as jnp
from jax.experimental import pallas as pl
from jax.experimental.pallas import tpu as pltpu

# ---------------- small synthetic config (same structure, reduced size) -------
BATCH = 2
IN_CH = 3
IMG = 28            # 28/14 = 2 -> 4 patches
PATCH = 14          # DINOv2 patch_size=14
EMBED = 32          # "small" uses 384
HEADS = 2           # "small" uses 6
HEAD_DIM = EMBED // HEADS
DEPTH = 2           # "small" uses 12 blocks; per-block math identical
MLP_HIDDEN = 4 * EMBED
N_REG = 4           # num_register_tokens=4
HIDDEN_CLS = 256
NUM_CLASSES = 5     # nc (derived from CSV in the original script)
EPS = 1e-6          # DINOv2 LayerNorm eps

N_PATCH = (IMG // PATCH) ** 2          # 4
SEQ = 1 + N_REG + N_PATCH              # cls + registers + patches = 9
ROWS = BATCH * SEQ
OUT_PAD = 128                          # lane-dense classifier output (sliced to NUM_CLASSES)
SCALE = HEAD_DIM ** -0.5


# ---------------------------- fused forward kernel -----------------------------
def _vit_forward_kernel(
    # ---- inputs (all full-array VMEM blocks) ----
    patches_ref,                       # (B*NP, C*P*P)
    patch_w_ref, patch_b_ref,          # (C*P*P, E), (1, E)
    cls_tok_ref, reg_tok_ref, pos_ref, # (1,E), (N_REG,E), (1+NP,E)
    n1_g_ref, n1_b_ref,                # (DEPTH,1,E)
    qkv_w_ref, qkv_b_ref,              # (DEPTH,E,3E), (DEPTH,1,3E)
    proj_w_ref, proj_b_ref,            # (DEPTH,E,E), (DEPTH,1,E)
    ls1_ref,                           # (DEPTH,1,E)
    n2_g_ref, n2_b_ref,                # (DEPTH,1,E)
    fc1_w_ref, fc1_b_ref,              # (DEPTH,E,H), (DEPTH,1,H)
    fc2_w_ref, fc2_b_ref,              # (DEPTH,H,E), (DEPTH,1,E)
    ls2_ref,                           # (DEPTH,1,E)
    norm_g_ref, norm_b_ref,            # (1,E)
    cls_w1_ref, cls_b1_ref,            # (E,256), (1,256)
    cls_w2_ref, cls_b2_ref,            # (256,OUT_PAD), (1,OUT_PAD)
    # ---- output ----
    out_ref,                           # (B, OUT_PAD)
    # ---- VMEM scratch ----
    x_scr,                             # (B*S, E)
    qkv_scr,                           # (B*S, 3E)
    attn_scr,                          # (B*S, E)
    cls_scr,                           # (B, E)
):
    f32 = jnp.float32

    def ln(v, g, b):
        mu = jnp.mean(v, axis=-1, keepdims=True)
        var = jnp.mean(jnp.square(v - mu), axis=-1, keepdims=True)
        return (v - mu) * jax.lax.rsqrt(var + EPS) * g + b

    def gelu_exact(v):
        # exact-erf GELU: erf via Abramowitz & Stegun 7.1.26 (max abs err 1.5e-7 ~= f32 eps),
        # built only from exp/mul/add so it is guaranteed to lower in Mosaic.
        # TODO(synk): switch to jax.lax.erf once its Mosaic lowering is guaranteed.
        z = v * 0.7071067811865476
        sgn = jnp.where(z >= 0.0, 1.0, -1.0)
        az = jnp.abs(z)
        t = 1.0 / (1.0 + 0.3275911 * az)
        poly = ((((1.061405429 * t - 1.453152027) * t + 1.421413741) * t
                 - 0.284496736) * t + 0.254829592) * t
        erf = sgn * (1.0 - poly * jnp.exp(-az * az))
        return 0.5 * v * (1.0 + erf)

    patch_w = patch_w_ref[...]
    patch_b = patch_b_ref[...]
    cls_tok = cls_tok_ref[...]
    reg_tok = reg_tok_ref[...]
    pos_cls = pos_ref[pl.ds(0, 1), :]           # (1, E)
    pos_patch = pos_ref[pl.ds(1, N_PATCH), :]   # (NP, E)

    # --- patch embed (Conv2d stride==kernel as matmul) + token assembly, in VMEM ---
    # layout per batch: [cls+pos | registers (no pos) | patches+pos]  (DINOv2 prepare_tokens)
    for b in range(BATCH):
        base = b * SEQ
        x_scr[pl.ds(base, 1), :] = cls_tok + pos_cls
        x_scr[pl.ds(base + 1, N_REG), :] = reg_tok
        pb = patches_ref[pl.ds(b * N_PATCH, N_PATCH), :]
        tok = jnp.dot(pb, patch_w, preferred_element_type=f32) + patch_b
        x_scr[pl.ds(base + 1 + N_REG, N_PATCH), :] = tok + pos_patch

    x = x_scr[...]                               # (B*S, E), kept as a value (vreg/VMEM)

    # --- transformer blocks, fully VMEM-resident (no HBM bounces between sub-ops) ---
    for d in range(DEPTH):
        # attention sub-block: norm1 -> qkv -> per-(b,h) softmax attn -> proj -> ls1 + residual
        y = ln(x, n1_g_ref[d], n1_b_ref[d])
        qkv_scr[...] = jnp.dot(y, qkv_w_ref[d], preferred_element_type=f32) + qkv_b_ref[d]
        for b in range(BATCH):
            rows = pl.ds(b * SEQ, SEQ)
            for h in range(HEADS):
                q = qkv_scr[rows, pl.ds(h * HEAD_DIM, HEAD_DIM)] * SCALE
                k = qkv_scr[rows, pl.ds(EMBED + h * HEAD_DIM, HEAD_DIM)]
                v = qkv_scr[rows, pl.ds(2 * EMBED + h * HEAD_DIM, HEAD_DIM)]
                # q @ k^T without materializing a transpose (NT dot_general)
                s = jax.lax.dot_general(q, k, (((1,), (1,)), ((), ())),
                                        preferred_element_type=f32)
                s = s - jnp.max(s, axis=-1, keepdims=True)
                p = jnp.exp(s)
                p = p * pl.reciprocal(jnp.sum(p, axis=-1, keepdims=True), approx=True)
                o = jnp.dot(p, v, preferred_element_type=f32)
                attn_scr[rows, pl.ds(h * HEAD_DIM, HEAD_DIM)] = o
        o_proj = (jnp.dot(attn_scr[...], proj_w_ref[d], preferred_element_type=f32)
                  + proj_b_ref[d])
        x = x + o_proj * ls1_ref[d]              # LayerScale + residual

        # MLP sub-block: norm2 -> fc1 -> GELU -> fc2 -> ls2 + residual
        y = ln(x, n2_g_ref[d], n2_b_ref[d])
        hdn = jnp.dot(y, fc1_w_ref[d], preferred_element_type=f32) + fc1_b_ref[d]
        hdn = gelu_exact(hdn)
        hdn = jnp.dot(hdn, fc2_w_ref[d], preferred_element_type=f32) + fc2_b_ref[d]
        x = x + hdn * ls2_ref[d]

    # --- final ViT norm on CLS, second norm (module applies transformer.norm again),
    #     then classifier head: Linear(E,256) -> ReLU -> Linear(256, OUT_PAD) ---
    x_scr[...] = x
    for b in range(BATCH):
        cls_scr[pl.ds(b, 1), :] = x_scr[pl.ds(b * SEQ, 1), :]
    ng = norm_g_ref[...]
    nb = norm_b_ref[...]
    h0 = ln(ln(cls_scr[...], ng, nb), ng, nb)    # LayerNorm is row-wise -> CLS-only is exact
    h1 = jnp.maximum(
        jnp.dot(h0, cls_w1_ref[...], preferred_element_type=f32) + cls_b1_ref[...], 0.0)
    logits = jnp.dot(h1, cls_w2_ref[...], preferred_element_type=f32) + cls_b2_ref[...]
    out_ref[...] = logits.astype(out_ref.dtype)


# ---------------------------- parameters ---------------------------------------
def init_params(key):
    keys = jax.random.split(key, 64)
    ki = iter(keys)

    def nrm(shape, std=0.02):
        return (std * jax.random.normal(next(ki), shape)).astype(jnp.float32)

    def stack(fn):
        return jnp.stack([fn() for _ in range(DEPTH)], axis=0)

    params = {
        "patch_w": nrm((IN_CH * PATCH * PATCH, EMBED)),   # Conv2d(3,D,14,14) as matmul
        "patch_b": jnp.zeros((1, EMBED), jnp.float32),
        "cls_token": nrm((1, EMBED)),
        "reg_tokens": nrm((N_REG, EMBED)),
        "pos_embed": nrm((1 + N_PATCH, EMBED)),
        "norm_g": jnp.ones((1, EMBED), jnp.float32),
        "norm_b": jnp.zeros((1, EMBED), jnp.float32),
        "cls_w1": nrm((EMBED, HIDDEN_CLS)),
        "cls_b1": jnp.zeros((1, HIDDEN_CLS), jnp.float32),
        # classifier output padded to 128 lanes (lane-dense store); extra cols are zero
        "cls_w2": jnp.zeros((HIDDEN_CLS, OUT_PAD), jnp.float32)
                    .at[:, :NUM_CLASSES].set(nrm((HIDDEN_CLS, NUM_CLASSES))),
        "cls_b2": jnp.zeros((1, OUT_PAD), jnp.float32),
        # per-block params stacked along a leading DEPTH axis (statically unrolled in-kernel)
        "blk_n1_g": jnp.ones((DEPTH, 1, EMBED), jnp.float32),
        "blk_n1_b": jnp.zeros((DEPTH, 1, EMBED), jnp.float32),
        "blk_qkv_w": stack(lambda: nrm((EMBED, 3 * EMBED))),
        "blk_qkv_b": jnp.zeros((DEPTH, 1, 3 * EMBED), jnp.float32),
        "blk_proj_w": stack(lambda: nrm((EMBED, EMBED))),
        "blk_proj_b": jnp.zeros((DEPTH, 1, EMBED), jnp.float32),
        "blk_ls1": jnp.ones((DEPTH, 1, EMBED), jnp.float32),   # LayerScale init_values=1.0
        "blk_n2_g": jnp.ones((DEPTH, 1, EMBED), jnp.float32),
        "blk_n2_b": jnp.zeros((DEPTH, 1, EMBED), jnp.float32),
        "blk_fc1_w": stack(lambda: nrm((EMBED, MLP_HIDDEN))),
        "blk_fc1_b": jnp.zeros((DEPTH, 1, MLP_HIDDEN), jnp.float32),
        "blk_fc2_w": stack(lambda: nrm((MLP_HIDDEN, EMBED))),
        "blk_fc2_b": jnp.zeros((DEPTH, 1, EMBED), jnp.float32),
        "blk_ls2": jnp.ones((DEPTH, 1, EMBED), jnp.float32),
    }
    return params


# ---------------------------- wrapper -------------------------------------------
def _full_spec(a):
    zeros = (0,) * a.ndim
    return pl.BlockSpec(a.shape, lambda i: zeros)


def _cost_estimate(args):
    flops = 2 * BATCH * N_PATCH * (IN_CH * PATCH * PATCH) * EMBED
    flops += DEPTH * (2 * ROWS * EMBED * 3 * EMBED
                      + BATCH * HEADS * 4 * SEQ * SEQ * HEAD_DIM
                      + 2 * ROWS * EMBED * EMBED
                      + 4 * ROWS * EMBED * MLP_HIDDEN)
    flops += 2 * BATCH * EMBED * HIDDEN_CLS + 2 * BATCH * HIDDEN_CLS * OUT_PAD
    transc = DEPTH * (BATCH * HEADS * SEQ * SEQ + ROWS * MLP_HIDDEN) + 4 * ROWS
    bytes_accessed = sum(int(a.size) * a.dtype.itemsize for a in args)
    bytes_accessed += BATCH * OUT_PAD * 4
    return pl.CostEstimate(flops=flops, transcendentals=transc,
                           bytes_accessed=bytes_accessed)


def forward(x_nchw, params):
    b, c, hh, ww = x_nchw.shape
    assert (b, c) == (BATCH, IN_CH) and hh % PATCH == 0 and ww % PATCH == 0
    nh, nw = hh // PATCH, ww // PATCH

    # patchify (XLA glue on the raw input only); features land on the lane axis
    patches = x_nchw.reshape(b, c, nh, PATCH, nw, PATCH)
    patches = patches.transpose(0, 2, 4, 1, 3, 5).reshape(b * nh * nw, c * PATCH * PATCH)

    inputs = [
        patches,
        params["patch_w"], params["patch_b"],
        params["cls_token"], params["reg_tokens"], params["pos_embed"],
        params["blk_n1_g"], params["blk_n1_b"],
        params["blk_qkv_w"], params["blk_qkv_b"],
        params["blk_proj_w"], params["blk_proj_b"],
        params["blk_ls1"],
        params["blk_n2_g"], params["blk_n2_b"],
        params["blk_fc1_w"], params["blk_fc1_b"],
        params["blk_fc2_w"], params["blk_fc2_b"],
        params["blk_ls2"],
        params["norm_g"], params["norm_b"],
        params["cls_w1"], params["cls_b1"],
        params["cls_w2"], params["cls_b2"],
    ]

    logits_padded = pl.pallas_call(
        _vit_forward_kernel,
        out_shape=jax.ShapeDtypeStruct((BATCH, OUT_PAD), jnp.float32),
        grid=(1,),
        in_specs=[_full_spec(a) for a in inputs],
        out_specs=pl.BlockSpec((BATCH, OUT_PAD), lambda i: (0, 0)),
        scratch_shapes=[
            pltpu.VMEM((ROWS, EMBED), jnp.float32),       # x / token assembly
            pltpu.VMEM((ROWS, 3 * EMBED), jnp.float32),   # fused qkv
            pltpu.VMEM((ROWS, EMBED), jnp.float32),       # attention output (heads merged)
            pltpu.VMEM((BATCH, EMBED), jnp.float32),      # CLS rows
        ],
        compiler_params=pltpu.CompilerParams(dimension_semantics=("arbitrary",)),
        cost_estimate=_cost_estimate(inputs),
    )(*inputs)

    return logits_padded[:, :NUM_CLASSES]                 # (B, NUM_CLASSES)


if __name__ == "__main__":
    key = jax.random.PRNGKey(0)
    pkey, xkey = jax.random.split(key)
    params = init_params(pkey)
    x = jax.random.normal(xkey, (BATCH, IN_CH, IMG, IMG), dtype=jnp.float32)  # NCHW
    out = jax.jit(forward)(x, params)
    out = jax.block_until_ready(out)
    assert out.shape == (BATCH, NUM_CLASSES) and out.dtype == jnp.float32
    assert bool(jnp.all(jnp.isfinite(out)))
    print("KERNEL_OK")
</pallas_src>

<mosaic_0001>
module attributes {stable_mosaic.version = 11 : i64} {
  func.func @_vit_forward_kernel(%arg0: i32, %arg1: memref<8x588xf32, #tpu.memory_space<vmem>>, %arg2: memref<588x32xf32, #tpu.memory_space<vmem>>, %arg3: memref<1x32xf32, #tpu.memory_space<vmem>>, %arg4: memref<1x32xf32, #tpu.memory_space<vmem>>, %arg5: memref<4x32xf32, #tpu.memory_space<vmem>>, %arg6: memref<5x32xf32, #tpu.memory_space<vmem>>, %arg7: memref<2x1x32xf32, #tpu.memory_space<vmem>>, %arg8: memref<2x1x32xf32, #tpu.memory_space<vmem>>, %arg9: memref<2x32x96xf32, #tpu.memory_space<vmem>>, %arg10: memref<2x1x96xf32, #tpu.memory_space<vmem>>, %arg11: memref<2x32x32xf32, #tpu.memory_space<vmem>>, %arg12: memref<2x1x32xf32, #tpu.memory_space<vmem>>, %arg13: memref<2x1x32xf32, #tpu.memory_space<vmem>>, %arg14: memref<2x1x32xf32, #tpu.memory_space<vmem>>, %arg15: memref<2x1x32xf32, #tpu.memory_space<vmem>>, %arg16: memref<2x32x128xf32, #tpu.memory_space<vmem>>, %arg17: memref<2x1x128xf32, #tpu.memory_space<vmem>>, %arg18: memref<2x128x32xf32, #tpu.memory_space<vmem>>, %arg19: memref<2x1x32xf32, #tpu.memory_space<vmem>>, %arg20: memref<2x1x32xf32, #tpu.memory_space<vmem>>, %arg21: memref<1x32xf32, #tpu.memory_space<vmem>>, %arg22: memref<1x32xf32, #tpu.memory_space<vmem>>, %arg23: memref<32x256xf32, #tpu.memory_space<vmem>>, %arg24: memref<1x256xf32, #tpu.memory_space<vmem>>, %arg25: memref<256x128xf32, #tpu.memory_space<vmem>>, %arg26: memref<1x128xf32, #tpu.memory_space<vmem>>, %arg27: memref<2x128xf32, #tpu.memory_space<vmem>>, %arg28: memref<18x32xf32, #tpu.memory_space<vmem>>, %arg29: memref<18x96xf32, #tpu.memory_space<vmem>>, %arg30: memref<18x32xf32, #tpu.memory_space<vmem>>, %arg31: memref<2x32xf32, #tpu.memory_space<vmem>>) attributes {dimension_semantics = [#tpu.dimension_semantics<arbitrary>], iteration_bounds = array<i64: 1>, scalar_prefetch = 0 : i64, scratch_operands = 4 : i64, tpu.core_type = #tpu.core_type<tc>, window_params = [{pipeline_mode = #tpu.pipeline_mode<synchronous>, transform_indices = @transform_0, window_bounds = array<i64: 8, 588>}, {pipeline_mode = #tpu.pipeline_mode<synchronous>, transform_indices = @transform_1, window_bounds = array<i64: 588, 32>}, {pipeline_mode = #tpu.pipeline_mode<synchronous>, transform_indices = @transform_2, window_bounds = array<i64: 1, 32>}, {pipeline_mode = #tpu.pipeline_mode<synchronous>, transform_indices = @transform_3, window_bounds = array<i64: 1, 32>}, {pipeline_mode = #tpu.pipeline_mode<synchronous>, transform_indices = @transform_4, window_bounds = array<i64: 4, 32>}, {pipeline_mode = #tpu.pipeline_mode<synchronous>, transform_indices = @transform_5, window_bounds = array<i64: 5, 32>}, {pipeline_mode = #tpu.pipeline_mode<synchronous>, transform_indices = @transform_6, window_bounds = array<i64: 2, 1, 32>}, {pipeline_mode = #tpu.pipeline_mode<synchronous>, transform_indices = @transform_7, window_bounds = array<i64: 2, 1, 32>}, {pipeline_mode = #tpu.pipeline_mode<synchronous>, transform_indices = @transform_8, window_bounds = array<i64: 2, 32, 96>}, {pipeline_mode = #tpu.pipeline_mode<synchronous>, transform_indices = @transform_9, window_bounds = array<i64: 2, 1, 96>}, {pipeline_mode = #tpu.pipeline_mode<synchronous>, transform_indices = @transform_10, window_bounds = array<i64: 2, 32, 32>}, {pipeline_mode = #tpu.pipeline_mode<synchronous>, transform_indices = @transform_11, window_bounds = array<i64: 2, 1, 32>}, {pipeline_mode = #tpu.pipeline_mode<synchronous>, transform_indices = @transform_12, window_bounds = array<i64: 2, 1, 32>}, {pipeline_mode = #tpu.pipeline_mode<synchronous>, transform_indices = @transform_13, window_bounds = array<i64: 2, 1, 32>}, {pipeline_mode = #tpu.pipeline_mode<synchronous>, transform_indices = @transform_14, window_bounds = array<i64: 2, 1, 32>}, {pipeline_mode = #tpu.pipeline_mode<synchronous>, transform_indices = @transform_15, window_bounds = array<i64: 2, 32, 128>}, {pipeline_mode = #tpu.pipeline_mode<synchronous>, transform_indices = @transform_16, window_bounds = array<i64: 2, 1, 128>}, {pipeline_mode = #tpu.pipeline_mode<synchronous>, transform_indices = @transform_17, window_bounds = array<i64: 2, 128, 32>}, {pipeline_mode = #tpu.pipeline_mode<synchronous>, transform_indices = @transform_18, window_bounds = array<i64: 2, 1, 32>}, {pipeline_mode = #tpu.pipeline_mode<synchronous>, transform_indices = @transform_19, window_bounds = array<i64: 2, 1, 32>}, {pipeline_mode = #tpu.pipeline_mode<synchronous>, transform_indices = @transform_20, window_bounds = array<i64: 1, 32>}, {pipeline_mode = #tpu.pipeline_mode<synchronous>, transform_indices = @transform_21, window_bounds = array<i64: 1, 32>}, {pipeline_mode = #tpu.pipeline_mode<synchronous>, transform_indices = @transform_22, window_bounds = array<i64: 32, 256>}, {pipeline_mode = #tpu.pipeline_mode<synchronous>, transform_indices = @transform_23, window_bounds = array<i64: 1, 256>}, {pipeline_mode = #tpu.pipeline_mode<synchronous>, transform_indices = @transform_24, window_bounds = array<i64: 256, 128>}, {pipeline_mode = #tpu.pipeline_mode<synchronous>, transform_indices = @transform_25, window_bounds = array<i64: 1, 128>}, {pipeline_mode = #tpu.pipeline_mode<synchronous>, transform_indices = @transform_26, window_bounds = array<i64: 2, 128>}]} {
    %c0 = arith.constant 0 : index
    %c0_0 = arith.constant 0 : index
    %0 = vector.load %arg2[%c0, %c0_0] : memref<588x32xf32, #tpu.memory_space<vmem>>, vector<588x32xf32>
    %c0_1 = arith.constant 0 : index
    %c0_2 = arith.constant 0 : index
    %1 = vector.load %arg3[%c0_1, %c0_2] : memref<1x32xf32, #tpu.memory_space<vmem>>, vector<1x32xf32>
    %c0_3 = arith.constant 0 : index
    %c0_4 = arith.constant 0 : index
    %2 = vector.load %arg4[%c0_3, %c0_4] : memref<1x32xf32, #tpu.memory_space<vmem>>, vector<1x32xf32>
    %c0_5 = arith.constant 0 : index
    %c0_6 = arith.constant 0 : index
    %3 = vector.load %arg5[%c0_5, %c0_6] : memref<4x32xf32, #tpu.memory_space<vmem>>, vector<4x32xf32>
    %c0_7 = arith.constant 0 : index
    %c0_8 = arith.constant 0 : index
    %4 = vector.load %arg6[%c0_7, %c0_8] : memref<5x32xf32, #tpu.memory_space<vmem>>, vector<1x32xf32>
    %c1 = arith.constant 1 : index
    %c0_9 = arith.constant 0 : index
    %5 = vector.load %arg6[%c1, %c0_9] : memref<5x32xf32, #tpu.memory_space<vmem>>, vector<4x32xf32>
    %6 = arith.addf %2, %4 : vector<1x32xf32>
    %c0_10 = arith.constant 0 : index
    %c0_11 = arith.constant 0 : index
    %7 = vector.load %arg28[%c0_10, %c0_11] : memref<18x32xf32, #tpu.memory_space<vmem>>, vector<1x32xf32>
    tpu.vector_store %arg28[%c0_10, %c0_11], %6 {strides = array<i32>} : memref<18x32xf32, #tpu.memory_space<vmem>>, vector<1x32xf32>,
    %c1_12 = arith.constant 1 : index
    %c0_13 = arith.constant 0 : index
    %8 = vector.load %arg28[%c1_12, %c0_13] : memref<18x32xf32, #tpu.memory_space<vmem>>, vector<4x32xf32>
    tpu.vector_store %arg28[%c1_12, %c0_13], %3 {strides = array<i32>} : memref<18x32xf32, #tpu.memory_space<vmem>>, vector<4x32xf32>,
    %c0_14 = arith.constant 0 : index
    %c0_15 = arith.constant 0 : index
    %9 = vector.load %arg1[%c0_14, %c0_15] : memref<8x588xf32, #tpu.memory_space<vmem>>, vector<4x588xf32>
    %cst = arith.constant dense<0.000000e+00> : vector<4x32xf32>
    %10 = tpu.matmul %9, %0, %cst {dimension_numbers = #tpu.dot_dimension_numbers<[1], [0], [0], [1], [0, 0, 1, 1], [], []>} : vector<4x588xf32>, vector<588x32xf32>, vector<4x32xf32> -> vector<4x32xf32>
    %11 = vector.broadcast %1 : vector<1x32xf32> to vector<4x32xf32>
    %12 = arith.addf %10, %11 : vector<4x32xf32>
    %13 = arith.addf %12, %5 : vector<4x32xf32>
    %c5 = arith.constant 5 : index
    %c0_16 = arith.constant 0 : index
    %14 = vector.load %arg28[%c5, %c0_16] : memref<18x32xf32, #tpu.memory_space<vmem>>, vector<4x32xf32>
    tpu.vector_store %arg28[%c5, %c0_16], %13 {strides = array<i32>} : memref<18x32xf32, #tpu.memory_space<vmem>>, vector<4x32xf32>,
    %15 = arith.addf %2, %4 : vector<1x32xf32>
    %c9 = arith.constant 9 : index
    %c0_17 = arith.constant 0 : index
    %16 = vector.load %arg28[%c9, %c0_17] : memref<18x32xf32, #tpu.memory_space<vmem>>, vector<1x32xf32>
    tpu.vector_store %arg28[%c9, %c0_17], %15 {strides = array<i32>} : memref<18x32xf32, #tpu.memory_space<vmem>>, vector<1x32xf32>,
    %c10 = arith.constant 10 : index
    %c0_18 = arith.constant 0 : index
    %17 = vector.load %arg28[%c10, %c0_18] : memref<18x32xf32, #tpu.memory_space<vmem>>, vector<4x32xf32>
    tpu.vector_store %arg28[%c10, %c0_18], %3 {strides = array<i32>} : memref<18x32xf32, #tpu.memory_space<vmem>>, vector<4x32xf32>,
    %c4 = arith.constant 4 : index
    %c0_19 = arith.constant 0 : index
    %18 = vector.load %arg1[%c4, %c0_19] : memref<8x588xf32, #tpu.memory_space<vmem>>, vector<4x588xf32>
    %cst_20 = arith.constant dense<0.000000e+00> : vector<4x32xf32>
    %19 = tpu.matmul %18, %0, %cst_20 {dimension_numbers = #tpu.dot_dimension_numbers<[1], [0], [0], [1], [0, 0, 1, 1], [], []>} : vector<4x588xf32>, vector<588x32xf32>, vector<4x32xf32> -> vector<4x32xf32>
    %20 = vector.broadcast %1 : vector<1x32xf32> to vector<4x32xf32>
    %21 = arith.addf %19, %20 : vector<4x32xf32>
    %22 = arith.addf %21, %5 : vector<4x32xf32>
    %c14 = arith.constant 14 : index
    %c0_21 = arith.constant 0 : index
    %23 = vector.load %arg28[%c14, %c0_21] : memref<18x32xf32, #tpu.memory_space<vmem>>, vector<4x32xf32>
    tpu.vector_store %arg28[%c14, %c0_21], %22 {strides = array<i32>} : memref<18x32xf32, #tpu.memory_space<vmem>>, vector<4x32xf32>,
    %c0_22 = arith.constant 0 : index
    %c0_23 = arith.constant 0 : index
    %24 = vector.load %arg28[%c0_22, %c0_23] : memref<18x32xf32, #tpu.memory_space<vmem>>, vector<18x32xf32>
    %c0_24 = arith.constant 0 : index
    %c0_25 = arith.constant 0 : index
    %c0_26 = arith.constant 0 : index
    %25 = vector.load %arg7[%c0_24, %c0_25, %c0_26] : memref<2x1x32xf32, #tpu.memory_space<vmem>>, vector<1x1x32xf32>
    %26 = vector.shape_cast %25 : vector<1x1x32xf32> to vector<1x32xf32>
    %c0_27 = arith.constant 0 : index
    %c0_28 = arith.constant 0 : index
    %c0_29 = arith.constant 0 : index
    %27 = vector.load %arg8[%c0_27, %c0_28, %c0_29] : memref<2x1x32xf32, #tpu.memory_space<vmem>>, vector<1x1x32xf32>
    %28 = vector.shape_cast %27 : vector<1x1x32xf32> to vector<1x32xf32>
    %cst_30 = arith.constant dense<0.000000e+00> : vector<18xf32>
    %29 = vector.multi_reduction <add>, %24, %cst_30 [1] : vector<18x32xf32> to vector<18xf32>
    %30 = vector.shape_cast %29 : vector<18xf32> to vector<18x1xf32>
    %cst_31 = arith.constant 3.200000e+01 : f32
    %31 = vector.broadcast %cst_31 : f32 to vector<18x1xf32>
    %32 = arith.divf %30, %31 : vector<18x1xf32>
    %33 = vector.broadcast %32 : vector<18x1xf32> to vector<18x32xf32>
    %34 = arith.subf %24, %33 : vector<18x32xf32>
    %35 = arith.mulf %34, %34 : vector<18x32xf32>
    %cst_32 = arith.constant dense<0.000000e+00> : vector<18xf32>
    %36 = vector.multi_reduction <add>, %35, %cst_32 [1] : vector<18x32xf32> to vector<18xf32>
    %37 = vector.shape_cast %36 : vector<18xf32> to vector<18x1xf32>
    %cst_33 = arith.constant 3.200000e+01 : f32
    %38 = vector.broadcast %cst_33 : f32 to vector<18x1xf32>
    %39 = arith.divf %37, %38 : vector<18x1xf32>
    %40 = vector.broadcast %32 : vector<18x1xf32> to vector<18x32xf32>
    %41 = arith.subf %24, %40 : vector<18x32xf32>
    %cst_34 = arith.constant 9.99999997E-7 : f32
    %42 = vector.broadcast %cst_34 : f32 to vector<18x1xf32>
    %43 = arith.addf %39, %42 : vector<18x1xf32>
    %44 = math.rsqrt %43 : vector<18x1xf32>
    %45 = vector.broadcast %44 : vector<18x1xf32> to vector<18x32xf32>
    %46 = arith.mulf %41, %45 : vector<18x32xf32>
    %47 = vector.broadcast %26 : vector<1x32xf32> to vector<18x32xf32>
    %48 = arith.mulf %46, %47 : vector<18x32xf32>
    %49 = vector.broadcast %28 : vector<1x32xf32> to vector<18x32xf32>
    %50 = arith.addf %48, %49 : vector<18x32xf32>
    %c0_35 = arith.constant 0 : index
    %c0_36 = arith.constant 0 : index
    %c0_37 = arith.constant 0 : index
    %51 = vector.load %arg9[%c0_35, %c0_36, %c0_37] : memref<2x32x96xf32, #tpu.memory_space<vmem>>, vector<1x32x96xf32>
    %52 = vector.shape_cast %51 : vector<1x32x96xf32> to vector<32x96xf32>
    %cst_38 = arith.constant dense<0.000000e+00> : vector<18x96xf32>
    %53 = tpu.matmul %50, %52, %cst_38 {dimension_numbers = #tpu.dot_dimension_numbers<[1], [0], [0], [1], [0, 0, 1, 1], [], []>} : vector<18x32xf32>, vector<32x96xf32>, vector<18x96xf32> -> vector<18x96xf32>
    %c0_39 = arith.constant 0 : index
    %c0_40 = arith.constant 0 : index
    %c0_41 = arith.constant 0 : index
    %54 = vector.load %arg10[%c0_39, %c0_40, %c0_41] : memref<2x1x96xf32, #tpu.memory_space<vmem>>, vector<1x1x96xf32>
    %55 = vector.shape_cast %54 : vector<1x1x96xf32> to vector<1x96xf32>
    %56 = vector.broadcast %55 : vector<1x96xf32> to vector<18x96xf32>
    %57 = arith.addf %53, %56 : vector<18x96xf32>
    %c0_42 = arith.constant 0 : index
    %c0_43 = arith.constant 0 : index
    %58 = vector.load %arg29[%c0_42, %c0_43] : memref<18x96xf32, #tpu.memory_space<vmem>>, vector<18x96xf32>
    tpu.vector_store %arg29[%c0_42, %c0_43], %57 {strides = array<i32>} : memref<18x96xf32, #tpu.memory_space<vmem>>, vector<18x96xf32>,
    %c0_44 = arith.constant 0 : index
    %c0_45 = arith.constant 0 : index
    %59 = vector.load %arg29[%c0_44, %c0_45] : memref<18x96xf32, #tpu.memory_space<vmem>>, vector<9x16xf32>
    %cst_46 = arith.constant 2.500000e-01 : f32
    %60 = vector.broadcast %cst_46 : f32 to vector<9x16xf32>
    %61 = arith.mulf %59, %60 : vector<9x16xf32>
    %c0_47 = arith.constant 0 : index
    %c32 = arith.constant 32 : index
    %62 = vector.load %arg29[%c0_47, %c32] : memref<18x96xf32, #tpu.memory_space<vmem>>, vector<9x16xf32>
    %c0_48 = arith.constant 0 : index
    %c64 = arith.constant 64 : index
    %63 = vector.load %arg29[%c0_48, %c64] : memref<18x96xf32, #tpu.memory_space<vmem>>, vector<9x16xf32>
    %cst_49 = arith.constant dense<0.000000e+00> : vector<9x9xf32>
    %64 = tpu.matmul %61, %62, %cst_49 {dimension_numbers = #tpu.dot_dimension_numbers<[1], [1], [0], [0], [0, 0, 1, 0], [], []>} : vector<9x16xf32>, vector<9x16xf32>, vector<9x9xf32> -> vector<9x9xf32>
    %cst_50 = arith.constant dense<0xFF800000> : vector<9xf32>
    %65 = vector.multi_reduction <maximumf>, %64, %cst_50 [1] : vector<9x9xf32> to vector<9xf32>
    %66 = vector.shape_cast %65 : vector<9xf32> to vector<9x1xf32>
    %67 = vector.broadcast %66 : vector<9x1xf32> to vector<9x9xf32>
    %68 = arith.subf %64, %67 : vector<9x9xf32>
    %69 = math.exp %68 : vector<9x9xf32>
    %cst_51 = arith.constant dense<0.000000e+00> : vector<9xf32>
    %70 = vector.multi_reduction <add>, %69, %cst_51 [1] : vector<9x9xf32> to vector<9xf32>
    %71 = vector.shape_cast %70 : vector<9xf32> to vector<9x1xf32>
    %72 = tpu.reciprocal %71 {approx = true} : vector<9x1xf32> -> vector<9x1xf32>
    %73 = vector.broadcast %72 : vector<9x1xf32> to vector<9x9xf32>
    %74 = arith.mulf %69, %73 : vector<9x9xf32>
    %cst_52 = arith.constant dense<0.000000e+00> : vector<9x16xf32>
    %75 = tpu.matmul %74, %63, %cst_52 {dimension_numbers = #tpu.dot_dimension_numbers<[1], [0], [0], [1], [0, 0, 1, 1], [], []>} : vector<9x9xf32>, vector<9x16xf32>, vector<9x16xf32> -> vector<9x16xf32>
    %c0_53 = arith.constant 0 : index
    %c0_54 = arith.constant 0 : index
    %76 = vector.load %arg30[%c0_53, %c0_54] : memref<18x32xf32, #tpu.memory_space<vmem>>, vector<9x16xf32>
    tpu.vector_store %arg30[%c0_53, %c0_54], %75 {strides = array<i32>} : memref<18x32xf32, #tpu.memory_space<vmem>>, vector<9x16xf32>,
    %c0_55 = arith.constant 0 : index
    %c16 = arith.constant 16 : index
    %77 = vector.load %arg29[%c0_55, %c16] : memref<18x96xf32, #tpu.memory_space<vmem>>, vector<9x16xf32>
    %cst_56 = arith.constant 2.500000e-01 : f32
    %78 = vector.broadcast %cst_56 : f32 to vector<9x16xf32>
    %79 = arith.mulf %77, %78 : vector<9x16xf32>
    %c0_57 = arith.constant 0 : index
    %c48 = arith.constant 48 : index
    %80 = vector.load %arg29[%c0_57, %c48] : memref<18x96xf32, #tpu.memory_space<vmem>>, vector<9x16xf32>
    %c0_58 = arith.constant 0 : index
    %c80 = arith.constant 80 : index
    %81 = vector.load %arg29[%c0_58, %c80] : memref<18x96xf32, #tpu.memory_space<vmem>>, vector<9x16xf32>
    %cst_59 = arith.constant dense<0.000000e+00> : vector<9x9xf32>
    %82 = tpu.matmul %79, %80, %cst_59 {dimension_numbers = #tpu.dot_dimension_numbers<[1], [1], [0], [0], [0, 0, 1, 0], [], []>} : vector<9x16xf32>, vector<9x16xf32>, vector<9x9xf32> -> vector<9x9xf32>
    %cst_60 = arith.constant dense<0xFF800000> : vector<9xf32>
    %83 = vector.multi_reduction <maximumf>, %82, %cst_60 [1] : vector<9x9xf32> to vector<9xf32>
    %84 = vector.shape_cast %83 : vector<9xf32> to vector<9x1xf32>
    %85 = vector.broadcast %84 : vector<9x1xf32> to vector<9x9xf32>
    %86 = arith.subf %82, %85 : vector<9x9xf32>
    %87 = math.exp %86 : vector<9x9xf32>
    %cst_61 = arith.constant dense<0.000000e+00> : vector<9xf32>
    %88 = vector.multi_reduction <add>, %87, %cst_61 [1] : vector<9x9xf32> to vector<9xf32>
    %89 = vector.shape_cast %88 : vector<9xf32> to vector<9x1xf32>
    %90 = tpu.reciprocal %89 {approx = true} : vector<9x1xf32> -> vector<9x1xf32>
    %91 = vector.broadcast %90 : vector<9x1xf32> to vector<9x9xf32>
    %92 = arith.mulf %87, %91 : vector<9x9xf32>
    %cst_62 = arith.constant dense<0.000000e+00> : vector<9x16xf32>
    %93 = tpu.matmul %92, %81, %cst_62 {dimension_numbers = #tpu.dot_dimension_numbers<[1], [0], [0], [1], [0, 0, 1, 1], [], []>} : vector<9x9xf32>, vector<9x16xf32>, vector<9x16xf32> -> vector<9x16xf32>
    %c0_63 = arith.constant 0 : index
    %c16_64 = arith.constant 16 : index
    %94 = vector.load %arg30[%c0_63, %c16_64] : memref<18x32xf32, #tpu.memory_space<vmem>>, vector<9x16xf32>
    tpu.vector_store %arg30[%c0_63, %c16_64], %93 {strides = array<i32>} : memref<18x32xf32, #tpu.memory_space<vmem>>, vector<9x16xf32>,
    %c9_65 = arith.constant 9 : index
    %c0_66 = arith.constant 0 : index
    %95 = vector.load %arg29[%c9_65, %c0_66] : memref<18x96xf32, #tpu.memory_space<vmem>>, vector<9x16xf32>
    %cst_67 = arith.constant 2.500000e-01 : f32
    %96 = vector.broadcast %cst_67 : f32 to vector<9x16xf32>
    %97 = arith.mulf %95, %96 : vector<9x16xf32>
    %c9_68 = arith.constant 9 : index
    %c32_69 = arith.constant 32 : index
    %98 = vector.load %arg29[%c9_68, %c32_69] : memref<18x96xf32, #tpu.memory_space<vmem>>, vector<9x16xf32>
    %c9_70 = arith.constant 9 : index
    %c64_71 = arith.constant 64 : index
    %99 = vector.load %arg29[%c9_70, %c64_71] : memref<18x96xf32, #tpu.memory_space<vmem>>, vector<9x16xf32>
    %cst_72 = arith.constant dense<0.000000e+00> : vector<9x9xf32>
    %100 = tpu.matmul %97, %98, %cst_72 {dimension_numbers = #tpu.dot_dimension_numbers<[1], [1], [0], [0], [0, 0, 1, 0], [], []>} : vector<9x16xf32>, vector<9x16xf32>, vector<9x9xf32> -> vector<9x9xf32>
    %cst_73 = arith.constant dense<0xFF800000> : vector<9xf32>
    %101 = vector.multi_reduction <maximumf>, %100, %cst_73 [1] : vector<9x9xf32> to vector<9xf32>
    %102 = vector.shape_cast %101 : vector<9xf32> to vector<9x1xf32>
    %103 = vector.broadcast %102 : vector<9x1xf32> to vector<9x9xf32>
    %104 = arith.subf %100, %103 : vector<9x9xf32>
    %105 = math.exp %104 : vector<9x9xf32>
    %cst_74 = arith.constant dense<0.000000e+00> : vector<9xf32>
    %106 = vector.multi_reduction <add>, %105, %cst_74 [1] : vector<9x9xf32> to vector<9xf32>
    %107 = vector.shape_cast %106 : vector<9xf32> to vector<9x1xf32>
    %108 = tpu.reciprocal %107 {approx = true} : vector<9x1xf32> -> vector<9x1xf32>
    %109 = vector.broadcast %108 : vector<9x1xf32> to vector<9x9xf32>
    %110 = arith.mulf %105, %109 : vector<9x9xf32>
    %cst_75 = arith.constant dense<0.000000e+00> : vector<9x16xf32>
    %111 = tpu.matmul %110, %99, %cst_75 {dimension_numbers = #tpu.dot_dimension_numbers<[1], [0], [0], [1], [0, 0, 1, 1], [], []>} : vector<9x9xf32>, vector<9x16xf32>, vector<9x16xf32> -> vector<9x16xf32>
    %c9_76 = arith.constant 9 : index
    %c0_77 = arith.constant 0 : index
    %112 = vector.load %arg30[%c9_76, %c0_77] : memref<18x32xf32, #tpu.memory_space<vmem>>, vector<9x16xf32>
    tpu.vector_store %arg30[%c9_76, %c0_77], %111 {strides = array<i32>} : memref<18x32xf32, #tpu.memory_space<vmem>>, vector<9x16xf32>,
    %c9_78 = arith.constant 9 : index
    %c16_79 = arith.constant 16 : index
    %113 = vector.load %arg29[%c9_78, %c16_79] : memref<18x96xf32, #tpu.memory_space<vmem>>, vector<9x16xf32>
    %cst_80 = arith.constant 2.500000e-01 : f32
    %114 = vector.broadcast %cst_80 : f32 to vector<9x16xf32>
    %115 = arith.mulf %113, %114 : vector<9x16xf32>
    %c9_81 = arith.constant 9 : index
    %c48_82 = arith.constant 48 : index
    %116 = vector.load %arg29[%c9_81, %c48_82] : memref<18x96xf32, #tpu.memory_space<vmem>>, vector<9x16xf32>
    %c9_83 = arith.constant 9 : index
    %c80_84 = arith.constant 80 : index
    %117 = vector.load %arg29[%c9_83, %c80_84] : memref<18x96xf32, #tpu.memory_space<vmem>>, vector<9x16xf32>
    %cst_85 = arith.constant dense<0.000000e+00> : vector<9x9xf32>
    %118 = tpu.matmul %115, %116, %cst_85 {dimension_numbers = #tpu.dot_dimension_numbers<[1], [1], [0], [0], [0, 0, 1, 0], [], []>} : vector<9x16xf32>, vector<9x16xf32>, vector<9x9xf32> -> vector<9x9xf32>
    %cst_86 = arith.constant dense<0xFF800000> : vector<9xf32>
    %119 = vector.multi_reduction <maximumf>, %118, %cst_86 [1] : vector<9x9xf32> to vector<9xf32>
    %120 = vector.shape_cast %119 : vector<9xf32> to vector<9x1xf32>
    %121 = vector.broadcast %120 : vector<9x1xf32> to vector<9x9xf32>
    %122 = arith.subf %118, %121 : vector<9x9xf32>
    %123 = math.exp %122 : vector<9x9xf32>
    %cst_87 = arith.constant dense<0.000000e+00> : vector<9xf32>
    %124 = vector.multi_reduction <add>, %123, %cst_87 [1] : vector<9x9xf32> to vector<9xf32>
    %125 = vector.shape_cast %124 : vector<9xf32> to vector<9x1xf32>
    %126 = tpu.reciprocal %125 {approx = true} : vector<9x1xf32> -> vector<9x1xf32>
    %127 = vector.broadcast %126 : vector<9x1xf32> to vector<9x9xf32>
    %128 = arith.mulf %123, %127 : vector<9x9xf32>
    %cst_88 = arith.constant dense<0.000000e+00> : vector<9x16xf32>
    %129 = tpu.matmul %128, %117, %cst_88 {dimension_numbers = #tpu.dot_dimension_numbers<[1], [0], [0], [1], [0, 0, 1, 1], [], []>} : vector<9x9xf32>, vector<9x16xf32>, vector<9x16xf32> -> vector<9x16xf32>
    %c9_89 = arith.constant 9 : index
    %c16_90 = arith.constant 16 : index
    %130 = vector.load %arg30[%c9_89, %c16_90] : memref<18x32xf32, #tpu.memory_space<vmem>>, vector<9x16xf32>
    tpu.vector_store %arg30[%c9_89, %c16_90], %129 {strides = array<i32>} : memref<18x32xf32, #tpu.memory_space<vmem>>, vector<9x16xf32>,
    %c0_91 = arith.constant 0 : index
    %c0_92 = arith.constant 0 : index
    %131 = vector.load %arg30[%c0_91, %c0_92] : memref<18x32xf32, #tpu.memory_space<vmem>>, vector<18x32xf32>
    %c0_93 = arith.constant 0 : index
    %c0_94 = arith.constant 0 : index
    %c0_95 = arith.constant 0 : index
    %132 = vector.load %arg11[%c0_93, %c0_94, %c0_95] : memref<2x32x32xf32, #tpu.memory_space<vmem>>, vector<1x32x32xf32>
    %133 = vector.shape_cast %132 : vector<1x32x32xf32> to vector<32x32xf32>
    %cst_96 = arith.constant dense<0.000000e+00> : vector<18x32xf32>
    %134 = tpu.matmul %131, %133, %cst_96 {dimension_numbers = #tpu.dot_dimension_numbers<[1], [0], [0], [1], [0, 0, 1, 1], [], []>} : vector<18x32xf32>, vector<32x32xf32>, vector<18x32xf32> -> vector<18x32xf32>
    %c0_97 = arith.constant 0 : index
    %c0_98 = arith.constant 0 : index
    %c0_99 = arith.constant 0 : index
    %135 = vector.load %arg12[%c0_97, %c0_98, %c0_99] : memref<2x1x32xf32, #tpu.memory_space<vmem>>, vector<1x1x32xf32>
    %136 = vector.shape_cast %135 : vector<1x1x32xf32> to vector<1x32xf32>
    %137 = vector.broadcast %136 : vector<1x32xf32> to vector<18x32xf32>
    %138 = arith.addf %134, %137 : vector<18x32xf32>
    %c0_100 = arith.constant 0 : index
    %c0_101 = arith.constant 0 : index
    %c0_102 = arith.constant 0 : index
    %139 = vector.load %arg13[%c0_100, %c0_101, %c0_102] : memref<2x1x32xf32, #tpu.memory_space<vmem>>, vector<1x1x32xf32>
    %140 = vector.shape_cast %139 : vector<1x1x32xf32> to vector<1x32xf32>
    %141 = vector.broadcast %140 : vector<1x32xf32> to vector<18x32xf32>
    %142 = arith.mulf %138, %141 : vector<18x32xf32>
    %143 = arith.addf %24, %142 : vector<18x32xf32>
    %c0_103 = arith.constant 0 : index
    %c0_104 = arith.constant 0 : index
    %c0_105 = arith.constant 0 : index
    %144 = vector.load %arg14[%c0_103, %c0_104, %c0_105] : memref<2x1x32xf32, #tpu.memory_space<vmem>>, vector<1x1x32xf32>
    %145 = vector.shape_cast %144 : vector<1x1x32xf32> to vector<1x32xf32>
    %c0_106 = arith.constant 0 : index
    %c0_107 = arith.constant 0 : index
    %c0_108 = arith.constant 0 : index
    %146 = vector.load %arg15[%c0_106, %c0_107, %c0_108] : memref<2x1x32xf32, #tpu.memory_space<vmem>>, vector<1x1x32xf32>
    %147 = vector.shape_cast %146 : vector<1x1x32xf32> to vector<1x32xf32>
    %cst_109 = arith.constant dense<0.000000e+00> : vector<18xf32>
    %148 = vector.multi_reduction <add>, %143, %cst_109 [1] : vector<18x32xf32> to vector<18xf32>
    %149 = vector.shape_cast %148 : vector<18xf32> to vector<18x1xf32>
    %cst_110 = arith.constant 3.200000e+01 : f32
    %150 = vector.broadcast %cst_110 : f32 to vector<18x1xf32>
    %151 = arith.divf %149, %150 : vector<18x1xf32>
    %152 = vector.broadcast %151 : vector<18x1xf32> to vector<18x32xf32>
    %153 = arith.subf %143, %152 : vector<18x32xf32>
    %154 = arith.mulf %153, %153 : vector<18x32xf32>
    %cst_111 = arith.constant dense<0.000000e+00> : vector<18xf32>
    %155 = vector.multi_reduction <add>, %154, %cst_111 [1] : vector<18x32xf32> to vector<18xf32>
    %156 = vector.shape_cast %155 : vector<18xf32> to vector<18x1xf32>
    %cst_112 = arith.constant 3.200000e+01 : f32
    %157 = vector.broadcast %cst_112 : f32 to vector<18x1xf32>
    %158 = arith.divf %156, %157 : vector<18x1xf32>
    %159 = vector.broadcast %151 : vector<18x1xf32> to vector<18x32xf32>
    %160 = arith.subf %143, %159 : vector<18x32xf32>
    %cst_113 = arith.constant 9.99999997E-7 : f32
    %161 = vector.broadcast %cst_113 : f32 to vector<18x1xf32>
    %162 = arith.addf %158, %161 : vector<18x1xf32>
    %163 = math.rsqrt %162 : vector<18x1xf32>
    %164 = vector.broadcast %163 : vector<18x1xf32> to vector<18x32xf32>
    %165 = arith.mulf %160, %164 : vector<18x32xf32>
    %166 = vector.broadcast %145 : vector<1x32xf32> to vector<18x32xf32>
    %167 = arith.mulf %165, %166 : vector<18x32xf32>
    %168 = vector.broadcast %147 : vector<1x32xf32> to vector<18x32xf32>
    %169 = arith.addf %167, %168 : vector<18x32xf32>
    %c0_114 = arith.constant 0 : index
    %c0_115 = arith.constant 0 : index
    %c0_116 = arith.constant 0 : index
    %170 = vector.load %arg16[%c0_114, %c0_115, %c0_116] : memref<2x32x128xf32, #tpu.memory_space<vmem>>, vector<1x32x128xf32>
    %171 = vector.shape_cast %170 : vector<1x32x128xf32> to vector<32x128xf32>
    %cst_117 = arith.constant dense<0.000000e+00> : vector<18x128xf32>
    %172 = tpu.matmul %169, %171, %cst_117 {dimension_numbers = #tpu.dot_dimension_numbers<[1], [0], [0], [1], [0, 0, 1, 1], [], []>} : vector<18x32xf32>, vector<32x128xf32>, vector<18x128xf32> -> vector<18x128xf32>
    %c0_118 = arith.constant 0 : index
    %c0_119 = arith.constant 0 : index
    %c0_120 = arith.constant 0 : index
    %173 = vector.load %arg17[%c0_118, %c0_119, %c0_120] : memref<2x1x128xf32, #tpu.memory_space<vmem>>, vector<1x1x128xf32>
    %174 = vector.shape_cast %173 : vector<1x1x128xf32> to vector<1x128xf32>
    %175 = vector.broadcast %174 : vector<1x128xf32> to vector<18x128xf32>
    %176 = arith.addf %172, %175 : vector<18x128xf32>
    %cst_121 = arith.constant 0.707106769 : f32
    %177 = vector.broadcast %cst_121 : f32 to vector<18x128xf32>
    %178 = arith.mulf %176, %177 : vector<18x128xf32>
    %cst_122 = arith.constant 0.000000e+00 : f32
    %179 = vector.broadcast %cst_122 : f32 to vector<18x128xf32>
    %180 = arith.cmpf oge, %178, %179 : vector<18x128xf32>
    %cst_123 = arith.constant 1.000000e+00 : f32
    %cst_124 = arith.constant -1.000000e+00 : f32
    %181 = vector.broadcast %cst_123 : f32 to vector<18x128xf32>
    %182 = vector.broadcast %cst_124 : f32 to vector<18x128xf32>
    %183 = arith.select %180, %181, %182 : vector<18x128xi1>, vector<18x128xf32>
    %184 = math.absf %178 : vector<18x128xf32>
    %cst_125 = arith.constant 0.327591091 : f32
    %185 = vector.broadcast %cst_125 : f32 to vector<18x128xf32>
    %186 = arith.mulf %185, %184 : vector<18x128xf32>
    %cst_126 = arith.constant 1.000000e+00 : f32
    %187 = vector.broadcast %cst_126 : f32 to vector<18x128xf32>
    %188 = arith.addf %187, %186 : vector<18x128xf32>
    %cst_127 = arith.constant 1.000000e+00 : f32
    %189 = vector.broadcast %cst_127 : f32 to vector<18x128xf32>
    %190 = arith.divf %189, %188 : vector<18x128xf32>
    %cst_128 = arith.constant 1.06140542 : f32
    %191 = vector.broadcast %cst_128 : f32 to vector<18x128xf32>
    %192 = arith.mulf %191, %190 : vector<18x128xf32>
    %cst_129 = arith.constant 1.45315206 : f32
    %193 = vector.broadcast %cst_129 : f32 to vector<18x128xf32>
    %194 = arith.subf %192, %193 : vector<18x128xf32>
    %195 = arith.mulf %194, %190 : vector<18x128xf32>
    %cst_130 = arith.constant 1.42141378 : f32
    %196 = vector.broadcast %cst_130 : f32 to vector<18x128xf32>
    %197 = arith.addf %195, %196 : vector<18x128xf32>
    %198 = arith.mulf %197, %190 : vector<18x128xf32>
    %cst_131 = arith.constant 0.284496725 : f32
    %199 = vector.broadcast %cst_131 : f32 to vector<18x128xf32>
    %200 = arith.subf %198, %199 : vector<18x128xf32>
    %201 = arith.mulf %200, %190 : vector<18x128xf32>
    %cst_132 = arith.constant 0.254829586 : f32
    %202 = vector.broadcast %cst_132 : f32 to vector<18x128xf32>
    %203 = arith.addf %201, %202 : vector<18x128xf32>
    %204 = arith.mulf %203, %190 : vector<18x128xf32>
    %cst_133 = arith.constant 0.000000e+00 : f32
    %205 = vector.broadcast %cst_133 : f32 to vector<18x128xf32>
    %206 = arith.subf %205, %184 : vector<18x128xf32>
    %207 = arith.mulf %206, %184 : vector<18x128xf32>
    %208 = math.exp %207 : vector<18x128xf32>
    %209 = arith.mulf %204, %208 : vector<18x128xf32>
    %cst_134 = arith.constant 1.000000e+00 : f32
    %210 = vector.broadcast %cst_134 : f32 to vector<18x128xf32>
    %211 = arith.subf %210, %209 : vector<18x128xf32>
    %212 = arith.mulf %183, %211 : vector<18x128xf32>
    %cst_135 = arith.constant 5.000000e-01 : f32
    %213 = vector.broadcast %cst_135 : f32 to vector<18x128xf32>
    %214 = arith.mulf %213, %176 : vector<18x128xf32>
    %cst_136 = arith.constant 1.000000e+00 : f32
    %215 = vector.broadcast %cst_136 : f32 to vector<18x128xf32>
    %216 = arith.addf %215, %212 : vector<18x128xf32>
    %217 = arith.mulf %214, %216 : vector<18x128xf32>
    %c0_137 = arith.constant 0 : index
    %c0_138 = arith.constant 0 : index
    %c0_139 = arith.constant 0 : index
    %218 = vector.load %arg18[%c0_137, %c0_138, %c0_139] : memref<2x128x32xf32, #tpu.memory_space<vmem>>, vector<1x128x32xf32>
    %219 = vector.shape_cast %218 : vector<1x128x32xf32> to vector<128x32xf32>
    %cst_140 = arith.constant dense<0.000000e+00> : vector<18x32xf32>
    %220 = tpu.matmul %217, %219, %cst_140 {dimension_numbers = #tpu.dot_dimension_numbers<[1], [0], [0], [1], [0, 0, 1, 1], [], []>} : vector<18x128xf32>, vector<128x32xf32>, vector<18x32xf32> -> vector<18x32xf32>
    %c0_141 = arith.constant 0 : index
    %c0_142 = arith.constant 0 : index
    %c0_143 = arith.constant 0 : index
    %221 = vector.load %arg19[%c0_141, %c0_142, %c0_143] : memref<2x1x32xf32, #tpu.memory_space<vmem>>, vector<1x1x32xf32>
    %222 = vector.shape_cast %221 : vector<1x1x32xf32> to vector<1x32xf32>
    %223 = vector.broadcast %222 : vector<1x32xf32> to vector<18x32xf32>
    %224 = arith.addf %220, %223 : vector<18x32xf32>
    %c0_144 = arith.constant 0 : index
    %c0_145 = arith.constant 0 : index
    %c0_146 = arith.constant 0 : index
    %225 = vector.load %arg20[%c0_144, %c0_145, %c0_146] : memref<2x1x32xf32, #tpu.memory_space<vmem>>, vector<1x1x32xf32>
    %226 = vector.shape_cast %225 : vector<1x1x32xf32> to vector<1x32xf32>
    %227 = vector.broadcast %226 : vector<1x32xf32> to vector<18x32xf32>
    %228 = arith.mulf %224, %227 : vector<18x32xf32>
    %229 = arith.addf %143, %228 : vector<18x32xf32>
    %c1_147 = arith.constant 1 : index
    %c0_148 = arith.constant 0 : index
    %c0_149 = arith.constant 0 : index
    %230 = vector.load %arg7[%c1_147, %c0_148, %c0_149] : memref<2x1x32xf32, #tpu.memory_space<vmem>>, vector<1x1x32xf32>
    %231 = vector.shape_cast %230 : vector<1x1x32xf32> to vector<1x32xf32>
    %c1_150 = arith.constant 1 : index
    %c0_151 = arith.constant 0 : index
    %c0_152 = arith.constant 0 : index
    %232 = vector.load %arg8[%c1_150, %c0_151, %c0_152] : memref<2x1x32xf32, #tpu.memory_space<vmem>>, vector<1x1x32xf32>
    %233 = vector.shape_cast %232 : vector<1x1x32xf32> to vector<1x32xf32>
    %cst_153 = arith.constant dense<0.000000e+00> : vector<18xf32>
    %234 = vector.multi_reduction <add>, %229, %cst_153 [1] : vector<18x32xf32> to vector<18xf32>
    %235 = vector.shape_cast %234 : vector<18xf32> to vector<18x1xf32>
    %cst_154 = arith.constant 3.200000e+01 : f32
    %236 = vector.broadcast %cst_154 : f32 to vector<18x1xf32>
    %237 = arith.divf %235, %236 : vector<18x1xf32>
    %238 = vector.broadcast %237 : vector<18x1xf32> to vector<18x32xf32>
    %239 = arith.subf %229, %238 : vector<18x32xf32>
    %240 = arith.mulf %239, %239 : vector<18x32xf32>
    %cst_155 = arith.constant dense<0.000000e+00> : vector<18xf32>
    %241 = vector.multi_reduction <add>, %240, %cst_155 [1] : vector<18x32xf32> to vector<18xf32>
    %242 = vector.shape_cast %241 : vector<18xf32> to vector<18x1xf32>
    %cst_156 = arith.constant 3.200000e+01 : f32
    %243 = vector.broadcast %cst_156 : f32 to vector<18x1xf32>
    %244 = arith.divf %242, %243 : vector<18x1xf32>
    %245 = vector.broadcast %237 : vector<18x1xf32> to vector<18x32xf32>
    %246 = arith.subf %229, %245 : vector<18x32xf32>
    %cst_157 = arith.constant 9.99999997E-7 : f32
    %247 = vector.broadcast %cst_157 : f32 to vector<18x1xf32>
    %248 = arith.addf %244, %247 : vector<18x1xf32>
    %249 = math.rsqrt %248 : vector<18x1xf32>
    %250 = vector.broadcast %249 : vector<18x1xf32> to vector<18x32xf32>
    %251 = arith.mulf %246, %250 : vector<18x32xf32>
    %252 = vector.broadcast %231 : vector<1x32xf32> to vector<18x32xf32>
    %253 = arith.mulf %251, %252 : vector<18x32xf32>
    %254 = vector.broadcast %233 : vector<1x32xf32> to vector<18x32xf32>
    %255 = arith.addf %253, %254 : vector<18x32xf32>
    %c1_158 = arith.constant 1 : index
    %c0_159 = arith.constant 0 : index
    %c0_160 = arith.constant 0 : index
    %256 = vector.load %arg9[%c1_158, %c0_159, %c0_160] : memref<2x32x96xf32, #tpu.memory_space<vmem>>, vector<1x32x96xf32>
    %257 = vector.shape_cast %256 : vector<1x32x96xf32> to vector<32x96xf32>
    %cst_161 = arith.constant dense<0.000000e+00> : vector<18x96xf32>
    %258 = tpu.matmul %255, %257, %cst_161 {dimension_numbers = #tpu.dot_dimension_numbers<[1], [0], [0], [1], [0, 0, 1, 1], [], []>} : vector<18x32xf32>, vector<32x96xf32>, vector<18x96xf32> -> vector<18x96xf32>
    %c1_162 = arith.constant 1 : index
    %c0_163 = arith.constant 0 : index
    %c0_164 = arith.constant 0 : index
    %259 = vector.load %arg10[%c1_162, %c0_163, %c0_164] : memref<2x1x96xf32, #tpu.memory_space<vmem>>, vector<1x1x96xf32>
    %260 = vector.shape_cast %259 : vector<1x1x96xf32> to vector<1x96xf32>
    %261 = vector.broadcast %260 : vector<1x96xf32> to vector<18x96xf32>
    %262 = arith.addf %258, %261 : vector<18x96xf32>
    %c0_165 = arith.constant 0 : index
    %c0_166 = arith.constant 0 : index
    %263 = vector.load %arg29[%c0_165, %c0_166] : memref<18x96xf32, #tpu.memory_space<vmem>>, vector<18x96xf32>
    tpu.vector_store %arg29[%c0_165, %c0_166], %262 {strides = array<i32>} : memref<18x96xf32, #tpu.memory_space<vmem>>, vector<18x96xf32>,
    %c0_167 = arith.constant 0 : index
    %c0_168 = arith.constant 0 : index
    %264 = vector.load %arg29[%c0_167, %c0_168] : memref<18x96xf32, #tpu.memory_space<vmem>>, vector<9x16xf32>
    %cst_169 = arith.constant 2.500000e-01 : f32
    %265 = vector.broadcast %cst_169 : f32 to vector<9x16xf32>
    %266 = arith.mulf %264, %265 : vector<9x16xf32>
    %c0_170 = arith.constant 0 : index
    %c32_171 = arith.constant 32 : index
    %267 = vector.load %arg29[%c0_170, %c32_171] : memref<18x96xf32, #tpu.memory_space<vmem>>, vector<9x16xf32>
    %c0_172 = arith.constant 0 : index
    %c64_173 = arith.constant 64 : index
    %268 = vector.load %arg29[%c0_172, %c64_173] : memref<18x96xf32, #tpu.memory_space<vmem>>, vector<9x16xf32>
    %cst_174 = arith.constant dense<0.000000e+00> : vector<9x9xf32>
    %269 = tpu.matmul %266, %267, %cst_174 {dimension_numbers = #tpu.dot_dimension_numbers<[1], [1], [0], [0], [0, 0, 1, 0], [], []>} : vector<9x16xf32>, vector<9x16xf32>, vector<9x9xf32> -> vector<9x9xf32>
    %cst_175 = arith.constant dense<0xFF800000> : vector<9xf32>
    %270 = vector.multi_reduction <maximumf>, %269, %cst_175 [1] : vector<9x9xf32> to vector<9xf32>
    %271 = vector.shape_cast %270 : vector<9xf32> to vector<9x1xf32>
    %272 = vector.broadcast %271 : vector<9x1xf32> to vector<9x9xf32>
    %273 = arith.subf %269, %272 : vector<9x9xf32>
    %274 = math.exp %273 : vector<9x9xf32>
    %cst_176 = arith.constant dense<0.000000e+00> : vector<9xf32>
    %275 = vector.multi_reduction <add>, %274, %cst_176 [1] : vector<9x9xf32> to vector<9xf32>
    %276 = vector.shape_cast %275 : vector<9xf32> to vector<9x1xf32>
    %277 = tpu.reciprocal %276 {approx = true} : vector<9x1xf32> -> vector<9x1xf32>
    %278 = vector.broadcast %277 : vector<9x1xf32> to vector<9x9xf32>
    %279 = arith.mulf %274, %278 : vector<9x9xf32>
    %cst_177 = arith.constant dense<0.000000e+00> : vector<9x16xf32>
    %280 = tpu.matmul %279, %268, %cst_177 {dimension_numbers = #tpu.dot_dimension_numbers<[1], [0], [0], [1], [0, 0, 1, 1], [], []>} : vector<9x9xf32>, vector<9x16xf32>, vector<9x16xf32> -> vector<9x16xf32>
    %c0_178 = arith.constant 0 : index
    %c0_179 = arith.constant 0 : index
    %281 = vector.load %arg30[%c0_178, %c0_179] : memref<18x32xf32, #tpu.memory_space<vmem>>, vector<9x16xf32>
    tpu.vector_store %arg30[%c0_178, %c0_179], %280 {strides = array<i32>} : memref<18x32xf32, #tpu.memory_space<vmem>>, vector<9x16xf32>,
    %c0_180 = arith.constant 0 : index
    %c16_181 = arith.constant 16 : index
    %282 = vector.load %arg29[%c0_180, %c16_181] : memref<18x96xf32, #tpu.memory_space<vmem>>, vector<9x16xf32>
    %cst_182 = arith.constant 2.500000e-01 : f32
    %283 = vector.broadcast %cst_182 : f32 to vector<9x16xf32>
    %284 = arith.mulf %282, %283 : vector<9x16xf32>
    %c0_183 = arith.constant 0 : index
    %c48_184 = arith.constant 48 : index
    %285 = vector.load %arg29[%c0_183, %c48_184] : memref<18x96xf32, #tpu.memory_space<vmem>>, vector<9x16xf32>
    %c0_185 = arith.constant 0 : index
    %c80_186 = arith.constant 80 : index
    %286 = vector.load %arg29[%c0_185, %c80_186] : memref<18x96xf32, #tpu.memory_space<vmem>>, vector<9x16xf32>
    %cst_187 = arith.constant dense<0.000000e+00> : vector<9x9xf32>
    %287 = tpu.matmul %284, %285, %cst_187 {dimension_numbers = #tpu.dot_dimension_numbers<[1], [1], [0], [0], [0, 0, 1, 0], [], []>} : vector<9x16xf32>, vector<9x16xf32>, vector<9x9xf32> -> vector<9x9xf32>
    %cst_188 = arith.constant dense<0xFF800000> : vector<9xf32>
    %288 = vector.multi_reduction <maximumf>, %287, %cst_188 [1] : vector<9x9xf32> to vector<9xf32>
    %289 = vector.shape_cast %288 : vector<9xf32> to vector<9x1xf32>
    %290 = vector.broadcast %289 : vector<9x1xf32> to vector<9x9xf32>
    %291 = arith.subf %287, %290 : vector<9x9xf32>
    %292 = math.exp %291 : vector<9x9xf32>
    %cst_189 = arith.constant dense<0.000000e+00> : vector<9xf32>
    %293 = vector.multi_reduction <add>, %292, %cst_189 [1] : vector<9x9xf32> to vector<9xf32>
    %294 = vector.shape_cast %293 : vector<9xf32> to vector<9x1xf32>
    %295 = tpu.reciprocal %294 {approx = true} : vector<9x1xf32> -> vector<9x1xf32>
    %296 = vector.broadcast %295 : vector<9x1xf32> to vector<9x9xf32>
    %297 = arith.mulf %292, %296 : vector<9x9xf32>
    %cst_190 = arith.constant dense<0.000000e+00> : vector<9x16xf32>
    %298 = tpu.matmul %297, %286, %cst_190 {dimension_numbers = #tpu.dot_dimension_numbers<[1], [0], [0], [1], [0, 0, 1, 1], [], []>} : vector<9x9xf32>, vector<9x16xf32>, vector<9x16xf32> -> vector<9x16xf32>
    %c0_191 = arith.constant 0 : index
    %c16_192 = arith.constant 16 : index
    %299 = vector.load %arg30[%c0_191, %c16_192] : memref<18x32xf32, #tpu.memory_space<vmem>>, vector<9x16xf32>
    tpu.vector_store %arg30[%c0_191, %c16_192], %298 {strides = array<i32>} : memref<18x32xf32, #tpu.memory_space<vmem>>, vector<9x16xf32>,
    %c9_193 = arith.constant 9 : index
    %c0_194 = arith.constant 0 : index
    %300 = vector.load %arg29[%c9_193, %c0_194] : memref<18x96xf32, #tpu.memory_space<vmem>>, vector<9x16xf32>
    %cst_195 = arith.constant 2.500000e-01 : f32
    %301 = vector.broadcast %cst_195 : f32 to vector<9x16xf32>
    %302 = arith.mulf %300, %301 : vector<9x16xf32>
    %c9_196 = arith.constant 9 : index
    %c32_197 = arith.constant 32 : index
    %303 = vector.load %arg29[%c9_196, %c32_197] : memref<18x96xf32, #tpu.memory_space<vmem>>, vector<9x16xf32>
    %c9_198 = arith.constant 9 : index
    %c64_199 = arith.constant 64 : index
    %304 = vector.load %arg29[%c9_198, %c64_199] : memref<18x96xf32, #tpu.memory_space<vmem>>, vector<9x16xf32>
    %cst_200 = arith.constant dense<0.000000e+00> : vector<9x9xf32>
    %305 = tpu.matmul %302, %303, %cst_200 {dimension_numbers = #tpu.dot_dimension_numbers<[1], [1], [0], [0], [0, 0, 1, 0], [], []>} : vector<9x16xf32>, vector<9x16xf32>, vector<9x9xf32> -> vector<9x9xf32>
    %cst_201 = arith.constant dense<0xFF800000> : vector<9xf32>
    %306 = vector.multi_reduction <maximumf>, %305, %cst_201 [1] : vector<9x9xf32> to vector<9xf32>
    %307 = vector.shape_cast %306 : vector<9xf32> to vector<9x1xf32>
    %308 = vector.broadcast %307 : vector<9x1xf32> to vector<9x9xf32>
    %309 = arith.subf %305, %308 : vector<9x9xf32>
    %310 = math.exp %309 : vector<9x9xf32>
    %cst_202 = arith.constant dense<0.000000e+00> : vector<9xf32>
    %311 = vector.multi_reduction <add>, %310, %cst_202 [1] : vector<9x9xf32> to vector<9xf32>
    %312 = vector.shape_cast %311 : vector<9xf32> to vector<9x1xf32>
    %313 = tpu.reciprocal %312 {approx = true} : vector<9x1xf32> -> vector<9x1xf32>
    %314 = vector.broadcast %313 : vector<9x1xf32> to vector<9x9xf32>
    %315 = arith.mulf %310, %314 : vector<9x9xf32>
    %cst_203 = arith.constant dense<0.000000e+00> : vector<9x16xf32>
    %316 = tpu.matmul %315, %304, %cst_203 {dimension_numbers = #tpu.dot_dimension_numbers<[1], [0], [0], [1], [0, 0, 1, 1], [], []>} : vector<9x9xf32>, vector<9x16xf32>, vector<9x16xf32> -> vector<9x16xf32>
    %c9_204 = arith.constant 9 : index
    %c0_205 = arith.constant 0 : index
    %317 = vector.load %arg30[%c9_204, %c0_205] : memref<18x32xf32, #tpu.memory_space<vmem>>, vector<9x16xf32>
    tpu.vector_store %arg30[%c9_204, %c0_205], %316 {strides = array<i32>} : memref<18x32xf32, #tpu.memory_space<vmem>>, vector<9x16xf32>,
    %c9_206 = arith.constant 9 : index
    %c16_207 = arith.constant 16 : index
    %318 = vector.load %arg29[%c9_206, %c16_207] : memref<18x96xf32, #tpu.memory_space<vmem>>, vector<9x16xf32>
    %cst_208 = arith.constant 2.500000e-01 : f32
    %319 = vector.broadcast %cst_208 : f32 to vector<9x16xf32>
    %320 = arith.mulf %318, %319 : vector<9x16xf32>
    %c9_209 = arith.constant 9 : index
    %c48_210 = arith.constant 48 : index
    %321 = vector.load %arg29[%c9_209, %c48_210] : memref<18x96xf32, #tpu.memory_space<vmem>>, vector<9x16xf32>
    %c9_211 = arith.constant 9 : index
    %c80_212 = arith.constant 80 : index
    %322 = vector.load %arg29[%c9_211, %c80_212] : memref<18x96xf32, #tpu.memory_space<vmem>>, vector<9x16xf32>
    %cst_213 = arith.constant dense<0.000000e+00> : vector<9x9xf32>
    %323 = tpu.matmul %320, %321, %cst_213 {dimension_numbers = #tpu.dot_dimension_numbers<[1], [1], [0], [0], [0, 0, 1, 0], [], []>} : vector<9x16xf32>, vector<9x16xf32>, vector<9x9xf32> -> vector<9x9xf32>
    %cst_214 = arith.constant dense<0xFF800000> : vector<9xf32>
    %324 = vector.multi_reduction <maximumf>, %323, %cst_214 [1] : vector<9x9xf32> to vector<9xf32>
    %325 = vector.shape_cast %324 : vector<9xf32> to vector<9x1xf32>
    %326 = vector.broadcast %325 : vector<9x1xf32> to vector<9x9xf32>
    %327 = arith.subf %323, %326 : vector<9x9xf32>
    %328 = math.exp %327 : vector<9x9xf32>
    %cst_215 = arith.constant dense<0.000000e+00> : vector<9xf32>
    %329 = vector.multi_reduction <add>, %328, %cst_215 [1] : vector<9x9xf32> to vector<9xf32>
    %330 = vector.shape_cast %329 : vector<9xf32> to vector<9x1xf32>
    %331 = tpu.reciprocal %330 {approx = true} : vector<9x1xf32> -> vector<9x1xf32>
    %332 = vector.broadcast %331 : vector<9x1xf32> to vector<9x9xf32>
    %333 = arith.mulf %328, %332 : vector<9x9xf32>
    %cst_216 = arith.constant dense<0.000000e+00> : vector<9x16xf32>
    %334 = tpu.matmul %333, %322, %cst_216 {dimension_numbers = #tpu.dot_dimension_numbers<[1], [0], [0], [1], [0, 0, 1, 1], [], []>} : vector<9x9xf32>, vector<9x16xf32>, vector<9x16xf32> -> vector<9x16xf32>
    %c9_217 = arith.constant 9 : index
    %c16_218 = arith.constant 16 : index
    %335 = vector.load %arg30[%c9_217, %c16_218] : memref<18x32xf32, #tpu.memory_space<vmem>>, vector<9x16xf32>
    tpu.vector_store %arg30[%c9_217, %c16_218], %334 {strides = array<i32>} : memref<18x32xf32, #tpu.memory_space<vmem>>, vector<9x16xf32>,
    %c0_219 = arith.constant 0 : index
    %c0_220 = arith.constant 0 : index
    %336 = vector.load %arg30[%c0_219, %c0_220] : memref<18x32xf32, #tpu.memory_space<vmem>>, vector<18x32xf32>
    %c1_221 = arith.constant 1 : index
    %c0_222 = arith.constant 0 : index
    %c0_223 = arith.constant 0 : index
    %337 = vector.load %arg11[%c1_221, %c0_222, %c0_223] : memref<2x32x32xf32, #tpu.memory_space<vmem>>, vector<1x32x32xf32>
    %338 = vector.shape_cast %337 : vector<1x32x32xf32> to vector<32x32xf32>
    %cst_224 = arith.constant dense<0.000000e+00> : vector<18x32xf32>
    %339 = tpu.matmul %336, %338, %cst_224 {dimension_numbers = #tpu.dot_dimension_numbers<[1], [0], [0], [1], [0, 0, 1, 1], [], []>} : vector<18x32xf32>, vector<32x32xf32>, vector<18x32xf32> -> vector<18x32xf32>
    %c1_225 = arith.constant 1 : index
    %c0_226 = arith.constant 0 : index
    %c0_227 = arith.constant 0 : index
    %340 = vector.load %arg12[%c1_225, %c0_226, %c0_227] : memref<2x1x32xf32, #tpu.memory_space<vmem>>, vector<1x1x32xf32>
    %341 = vector.shape_cast %340 : vector<1x1x32xf32> to vector<1x32xf32>
    %342 = vector.broadcast %341 : vector<1x32xf32> to vector<18x32xf32>
    %343 = arith.addf %339, %342 : vector<18x32xf32>
    %c1_228 = arith.constant 1 : index
    %c0_229 = arith.constant 0 : index
    %c0_230 = arith.constant 0 : index
    %344 = vector.load %arg13[%c1_228, %c0_229, %c0_230] : memref<2x1x32xf32, #tpu.memory_space<vmem>>, vector<1x1x32xf32>
    %345 = vector.shape_cast %344 : vector<1x1x32xf32> to vector<1x32xf32>
    %346 = vector.broadcast %345 : vector<1x32xf32> to vector<18x32xf32>
    %347 = arith.mulf %343, %346 : vector<18x32xf32>
    %348 = arith.addf %229, %347 : vector<18x32xf32>
    %c1_231 = arith.constant 1 : index
    %c0_232 = arith.constant 0 : index
    %c0_233 = arith.constant 0 : index
    %349 = vector.load %arg14[%c1_231, %c0_232, %c0_233] : memref<2x1x32xf32, #tpu.memory_space<vmem>>, vector<1x1x32xf32>
    %350 = vector.shape_cast %349 : vector<1x1x32xf32> to vector<1x32xf32>
    %c1_234 = arith.constant 1 : index
    %c0_235 = arith.constant 0 : index
    %c0_236 = arith.constant 0 : index
    %351 = vector.load %arg15[%c1_234, %c0_235, %c0_236] : memref<2x1x32xf32, #tpu.memory_space<vmem>>, vector<1x1x32xf32>
    %352 = vector.shape_cast %351 : vector<1x1x32xf32> to vector<1x32xf32>
    %cst_237 = arith.constant dense<0.000000e+00> : vector<18xf32>
    %353 = vector.multi_reduction <add>, %348, %cst_237 [1] : vector<18x32xf32> to vector<18xf32>
    %354 = vector.shape_cast %353 : vector<18xf32> to vector<18x1xf32>
    %cst_238 = arith.constant 3.200000e+01 : f32
    %355 = vector.broadcast %cst_238 : f32 to vector<18x1xf32>
    %356 = arith.divf %354, %355 : vector<18x1xf32>
    %357 = vector.broadcast %356 : vector<18x1xf32> to vector<18x32xf32>
    %358 = arith.subf %348, %357 : vector<18x32xf32>
    %359 = arith.mulf %358, %358 : vector<18x32xf32>
    %cst_239 = arith.constant dense<0.000000e+00> : vector<18xf32>
    %360 = vector.multi_reduction <add>, %359, %cst_239 [1] : vector<18x32xf32> to vector<18xf32>
    %361 = vector.shape_cast %360 : vector<18xf32> to vector<18x1xf32>
    %cst_240 = arith.constant 3.200000e+01 : f32
    %362 = vector.broadcast %cst_240 : f32 to vector<18x1xf32>
    %363 = arith.divf %361, %362 : vector<18x1xf32>
    %364 = vector.broadcast %356 : vector<18x1xf32> to vector<18x32xf32>
    %365 = arith.subf %348, %364 : vector<18x32xf32>
    %cst_241 = arith.constant 9.99999997E-7 : f32
    %366 = vector.broadcast %cst_241 : f32 to vector<18x1xf32>
    %367 = arith.addf %363, %366 : vector<18x1xf32>
    %368 = math.rsqrt %367 : vector<18x1xf32>
    %369 = vector.broadcast %368 : vector<18x1xf32> to vector<18x32xf32>
    %370 = arith.mulf %365, %369 : vector<18x32xf32>
    %371 = vector.broadcast %350 : vector<1x32xf32> to vector<18x32xf32>
    %372 = arith.mulf %370, %371 : vector<18x32xf32>
    %373 = vector.broadcast %352 : vector<1x32xf32> to vector<18x32xf32>
    %374 = arith.addf %372, %373 : vector<18x32xf32>
    %c1_242 = arith.constant 1 : index
    %c0_243 = arith.constant 0 : index
    %c0_244 = arith.constant 0 : index
    %375 = vector.load %arg16[%c1_242, %c0_243, %c0_244] : memref<2x32x128xf32, #tpu.memory_space<vmem>>, vector<1x32x128xf32>
    %376 = vector.shape_cast %375 : vector<1x32x128xf32> to vector<32x128xf32>
    %cst_245 = arith.constant dense<0.000000e+00> : vector<18x128xf32>
    %377 = tpu.matmul %374, %376, %cst_245 {dimension_numbers = #tpu.dot_dimension_numbers<[1], [0], [0], [1], [0, 0, 1, 1], [], []>} : vector<18x32xf32>, vector<32x128xf32>, vector<18x128xf32> -> vector<18x128xf32>
    %c1_246 = arith.constant 1 : index
    %c0_247 = arith.constant 0 : index
    %c0_248 = arith.constant 0 : index
    %378 = vector.load %arg17[%c1_246, %c0_247, %c0_248] : memref<2x1x128xf32, #tpu.memory_space<vmem>>, vector<1x1x128xf32>
    %379 = vector.shape_cast %378 : vector<1x1x128xf32> to vector<1x128xf32>
    %380 = vector.broadcast %379 : vector<1x128xf32> to vector<18x128xf32>
    %381 = arith.addf %377, %380 : vector<18x128xf32>
    %cst_249 = arith.constant 0.707106769 : f32
    %382 = vector.broadcast %cst_249 : f32 to vector<18x128xf32>
    %383 = arith.mulf %381, %382 : vector<18x128xf32>
    %cst_250 = arith.constant 0.000000e+00 : f32
    %384 = vector.broadcast %cst_250 : f32 to vector<18x128xf32>
    %385 = arith.cmpf oge, %383, %384 : vector<18x128xf32>
    %cst_251 = arith.constant 1.000000e+00 : f32
    %cst_252 = arith.constant -1.000000e+00 : f32
    %386 = vector.broadcast %cst_251 : f32 to vector<18x128xf32>
    %387 = vector.broadcast %cst_252 : f32 to vector<18x128xf32>
    %388 = arith.select %385, %386, %387 : vector<18x128xi1>, vector<18x128xf32>
    %389 = math.absf %383 : vector<18x128xf32>
    %cst_253 = arith.constant 0.327591091 : f32
    %390 = vector.broadcast %cst_253 : f32 to vector<18x128xf32>
    %391 = arith.mulf %390, %389 : vector<18x128xf32>
    %cst_254 = arith.constant 1.000000e+00 : f32
    %392 = vector.broadcast %cst_254 : f32 to vector<18x128xf32>
    %393 = arith.addf %392, %391 : vector<18x128xf32>
    %cst_255 = arith.constant 1.000000e+00 : f32
    %394 = vector.broadcast %cst_255 : f32 to vector<18x128xf32>
    %395 = arith.divf %394, %393 : vector<18x128xf32>
    %cst_256 = arith.constant 1.06140542 : f32
    %396 = vector.broadcast %cst_256 : f32 to vector<18x128xf32>
    %397 = arith.mulf %396, %395 : vector<18x128xf32>
    %cst_257 = arith.constant 1.45315206 : f32
    %398 = vector.broadcast %cst_257 : f32 to vector<18x128xf32>
    %399 = arith.subf %397, %398 : vector<18x128xf32>
    %400 = arith.mulf %399, %395 : vector<18x128xf32>
    %cst_258 = arith.constant 1.42141378 : f32
    %401 = vector.broadcast %cst_258 : f32 to vector<18x128xf32>
    %402 = arith.addf %400, %401 : vector<18x128xf32>
    %403 = arith.mulf %402, %395 : vector<18x128xf32>
    %cst_259 = arith.constant 0.284496725 : f32
    %404 = vector.broadcast %cst_259 : f32 to vector<18x128xf32>
    %405 = arith.subf %403, %404 : vector<18x128xf32>
    %406 = arith.mulf %405, %395 : vector<18x128xf32>
    %cst_260 = arith.constant 0.254829586 : f32
    %407 = vector.broadcast %cst_260 : f32 to vector<18x128xf32>
    %408 = arith.addf %406, %407 : vector<18x128xf32>
    %409 = arith.mulf %408, %395 : vector<18x128xf32>
    %cst_261 = arith.constant 0.000000e+00 : f32
    %410 = vector.broadcast %cst_261 : f32 to vector<18x128xf32>
    %411 = arith.subf %410, %389 : vector<18x128xf32>
    %412 = arith.mulf %411, %389 : vector<18x128xf32>
    %413 = math.exp %412 : vector<18x128xf32>
    %414 = arith.mulf %409, %413 : vector<18x128xf32>
    %cst_262 = arith.constant 1.000000e+00 : f32
    %415 = vector.broadcast %cst_262 : f32 to vector<18x128xf32>
    %416 = arith.subf %415, %414 : vector<18x128xf32>
    %417 = arith.mulf %388, %416 : vector<18x128xf32>
    %cst_263 = arith.constant 5.000000e-01 : f32
    %418 = vector.broadcast %cst_263 : f32 to vector<18x128xf32>
    %419 = arith.mulf %418, %381 : vector<18x128xf32>
    %cst_264 = arith.constant 1.000000e+00 : f32
    %420 = vector.broadcast %cst_264 : f32 to vector<18x128xf32>
    %421 = arith.addf %420, %417 : vector<18x128xf32>
    %422 = arith.mulf %419, %421 : vector<18x128xf32>
    %c1_265 = arith.constant 1 : index
    %c0_266 = arith.constant 0 : index
    %c0_267 = arith.constant 0 : index
    %423 = vector.load %arg18[%c1_265, %c0_266, %c0_267] : memref<2x128x32xf32, #tpu.memory_space<vmem>>, vector<1x128x32xf32>
    %424 = vector.shape_cast %423 : vector<1x128x32xf32> to vector<128x32xf32>
    %cst_268 = arith.constant dense<0.000000e+00> : vector<18x32xf32>
    %425 = tpu.matmul %422, %424, %cst_268 {dimension_numbers = #tpu.dot_dimension_numbers<[1], [0], [0], [1], [0, 0, 1, 1], [], []>} : vector<18x128xf32>, vector<128x32xf32>, vector<18x32xf32> -> vector<18x32xf32>
    %c1_269 = arith.constant 1 : index
    %c0_270 = arith.constant 0 : index
    %c0_271 = arith.constant 0 : index
    %426 = vector.load %arg19[%c1_269, %c0_270, %c0_271] : memref<2x1x32xf32, #tpu.memory_space<vmem>>, vector<1x1x32xf32>
    %427 = vector.shape_cast %426 : vector<1x1x32xf32> to vector<1x32xf32>
    %428 = vector.broadcast %427 : vector<1x32xf32> to vector<18x32xf32>
    %429 = arith.addf %425, %428 : vector<18x32xf32>
    %c1_272 = arith.constant 1 : index
    %c0_273 = arith.constant 0 : index
    %c0_274 = arith.constant 0 : index
    %430 = vector.load %arg20[%c1_272, %c0_273, %c0_274] : memref<2x1x32xf32, #tpu.memory_space<vmem>>, vector<1x1x32xf32>
    %431 = vector.shape_cast %430 : vector<1x1x32xf32> to vector<1x32xf32>
    %432 = vector.broadcast %431 : vector<1x32xf32> to vector<18x32xf32>
    %433 = arith.mulf %429, %432 : vector<18x32xf32>
    %434 = arith.addf %348, %433 : vector<18x32xf32>
    %c0_275 = arith.constant 0 : index
    %c0_276 = arith.constant 0 : index
    %435 = vector.load %arg28[%c0_275, %c0_276] : memref<18x32xf32, #tpu.memory_space<vmem>>, vector<18x32xf32>
    tpu.vector_store %arg28[%c0_275, %c0_276], %434 {strides = array<i32>} : memref<18x32xf32, #tpu.memory_space<vmem>>, vector<18x32xf32>,
    %c0_277 = arith.constant 0 : index
    %c0_278 = arith.constant 0 : index
    %436 = vector.load %arg28[%c0_277, %c0_278] : memref<18x32xf32, #tpu.memory_space<vmem>>, vector<1x32xf32>
    %c0_279 = arith.constant 0 : index
    %c0_280 = arith.constant 0 : index
    %437 = vector.load %arg31[%c0_279, %c0_280] : memref<2x32xf32, #tpu.memory_space<vmem>>, vector<1x32xf32>
    tpu.vector_store %arg31[%c0_279, %c0_280], %436 {strides = array<i32>} : memref<2x32xf32, #tpu.memory_space<vmem>>, vector<1x32xf32>,
    %c9_281 = arith.constant 9 : index
    %c0_282 = arith.constant 0 : index
    %438 = vector.load %arg28[%c9_281, %c0_282] : memref<18x32xf32, #tpu.memory_space<vmem>>, vector<1x32xf32>
    %c1_283 = arith.constant 1 : index
    %c0_284 = arith.constant 0 : index
    %439 = vector.load %arg31[%c1_283, %c0_284] : memref<2x32xf32, #tpu.memory_space<vmem>>, vector<1x32xf32>
    tpu.vector_store %arg31[%c1_283, %c0_284], %438 {strides = array<i32>} : memref<2x32xf32, #tpu.memory_space<vmem>>, vector<1x32xf32>,
    %c0_285 = arith.constant 0 : index
    %c0_286 = arith.constant 0 : index
    %440 = vector.load %arg21[%c0_285, %c0_286] : memref<1x32xf32, #tpu.memory_space<vmem>>, vector<1x32xf32>
    %c0_287 = arith.constant 0 : index
    %c0_288 = arith.constant 0 : index
    %441 = vector.load %arg22[%c0_287, %c0_288] : memref<1x32xf32, #tpu.memory_space<vmem>>, vector<1x32xf32>
    %c0_289 = arith.constant 0 : index
    %c0_290 = arith.constant 0 : index
    %442 = vector.load %arg31[%c0_289, %c0_290] : memref<2x32xf32, #tpu.memory_space<vmem>>, vector<2x32xf32>
    %cst_291 = arith.constant dense<0.000000e+00> : vector<2xf32>
    %443 = vector.multi_reduction <add>, %442, %cst_291 [1] : vector<2x32xf32> to vector<2xf32>
    %444 = vector.shape_cast %443 : vector<2xf32> to vector<2x1xf32>
    %cst_292 = arith.constant 3.200000e+01 : f32
    %445 = vector.broadcast %cst_292 : f32 to vector<2x1xf32>
    %446 = arith.divf %444, %445 : vector<2x1xf32>
    %447 = vector.broadcast %446 : vector<2x1xf32> to vector<2x32xf32>
    %448 = arith.subf %442, %447 : vector<2x32xf32>
    %449 = arith.mulf %448, %448 : vector<2x32xf32>
    %cst_293 = arith.constant dense<0.000000e+00> : vector<2xf32>
    %450 = vector.multi_reduction <add>, %449, %cst_293 [1] : vector<2x32xf32> to vector<2xf32>
    %451 = vector.shape_cast %450 : vector<2xf32> to vector<2x1xf32>
    %cst_294 = arith.constant 3.200000e+01 : f32
    %452 = vector.broadcast %cst_294 : f32 to vector<2x1xf32>
    %453 = arith.divf %451, %452 : vector<2x1xf32>
    %454 = vector.broadcast %446 : vector<2x1xf32> to vector<2x32xf32>
    %455 = arith.subf %442, %454 : vector<2x32xf32>
    %cst_295 = arith.constant 9.99999997E-7 : f32
    %456 = vector.broadcast %cst_295 : f32 to vector<2x1xf32>
    %457 = arith.addf %453, %456 : vector<2x1xf32>
    %458 = math.rsqrt %457 : vector<2x1xf32>
    %459 = vector.broadcast %458 : vector<2x1xf32> to vector<2x32xf32>
    %460 = arith.mulf %455, %459 : vector<2x32xf32>
    %461 = vector.broadcast %440 : vector<1x32xf32> to vector<2x32xf32>
    %462 = arith.mulf %460, %461 : vector<2x32xf32>
    %463 = vector.broadcast %441 : vector<1x32xf32> to vector<2x32xf32>
    %464 = arith.addf %462, %463 : vector<2x32xf32>
    %cst_296 = arith.constant dense<0.000000e+00> : vector<2xf32>
    %465 = vector.multi_reduction <add>, %464, %cst_296 [1] : vector<2x32xf32> to vector<2xf32>
    %466 = vector.shape_cast %465 : vector<2xf32> to vector<2x1xf32>
    %cst_297 = arith.constant 3.200000e+01 : f32
    %467 = vector.broadcast %cst_297 : f32 to vector<2x1xf32>
    %468 = arith.divf %466, %467 : vector<2x1xf32>
    %469 = vector.broadcast %468 : vector<2x1xf32> to vector<2x32xf32>
    %470 = arith.subf %464, %469 : vector<2x32xf32>
    %471 = arith.mulf %470, %470 : vector<2x32xf32>
    %cst_298 = arith.constant dense<0.000000e+00> : vector<2xf32>
    %472 = vector.multi_reduction <add>, %471, %cst_298 [1] : vector<2x32xf32> to vector<2xf32>
    %473 = vector.shape_cast %472 : vector<2xf32> to vector<2x1xf32>
    %cst_299 = arith.constant 3.200000e+01 : f32
    %474 = vector.broadcast %cst_299 : f32 to vector<2x1xf32>
    %475 = arith.divf %473, %474 : vector<2x1xf32>
    %476 = vector.broadcast %468 : vector<2x1xf32> to vector<2x32xf32>
    %477 = arith.subf %464, %476 : vector<2x32xf32>
    %cst_300 = arith.constant 9.99999997E-7 : f32
    %478 = vector.broadcast %cst_300 : f32 to vector<2x1xf32>
    %479 = arith.addf %475, %478 : vector<2x1xf32>
    %480 = math.rsqrt %479 : vector<2x1xf32>
    %481 = vector.broadcast %480 : vector<2x1xf32> to vector<2x32xf32>
    %482 = arith.mulf %477, %481 : vector<2x32xf32>
    %483 = vector.broadcast %440 : vector<1x32xf32> to vector<2x32xf32>
    %484 = arith.mulf %482, %483 : vector<2x32xf32>
    %485 = vector.broadcast %441 : vector<1x32xf32> to vector<2x32xf32>
    %486 = arith.addf %484, %485 : vector<2x32xf32>
    %c0_301 = arith.constant 0 : index
    %c0_302 = arith.constant 0 : index
    %487 = vector.load %arg23[%c0_301, %c0_302] : memref<32x256xf32, #tpu.memory_space<vmem>>, vector<32x256xf32>
    %cst_303 = arith.constant dense<0.000000e+00> : vector<2x256xf32>
    %488 = tpu.matmul %486, %487, %cst_303 {dimension_numbers = #tpu.dot_dimension_numbers<[1], [0], [0], [1], [0, 0, 1, 1], [], []>} : vector<2x32xf32>, vector<32x256xf32>, vector<2x256xf32> -> vector<2x256xf32>
    %c0_304 = arith.constant 0 : index
    %c0_305 = arith.constant 0 : index
    %489 = vector.load %arg24[%c0_304, %c0_305] : memref<1x256xf32, #tpu.memory_space<vmem>>, vector<1x256xf32>
    %490 = vector.broadcast %489 : vector<1x256xf32> to vector<2x256xf32>
    %491 = arith.addf %488, %490 : vector<2x256xf32>
    %cst_306 = arith.constant 0.000000e+00 : f32
    %492 = vector.broadcast %cst_306 : f32 to vector<2x256xf32>
    %493 = arith.maximumf %491, %492 : vector<2x256xf32>
    %c0_307 = arith.constant 0 : index
    %c0_308 = arith.constant 0 : index
    %494 = vector.load %arg25[%c0_307, %c0_308] : memref<256x128xf32, #tpu.memory_space<vmem>>, vector<256x128xf32>
    %cst_309 = arith.constant dense<0.000000e+00> : vector<2x128xf32>
    %495 = tpu.matmul %493, %494, %cst_309 {dimension_numbers = #tpu.dot_dimension_numbers<[1], [0], [0], [1], [0, 0, 1, 1], [], []>} : vector<2x256xf32>, vector<256x128xf32>, vector<2x128xf32> -> vector<2x128xf32>
    %c0_310 = arith.constant 0 : index
    %c0_311 = arith.constant 0 : index
    %496 = vector.load %arg26[%c0_310, %c0_311] : memref<1x128xf32, #tpu.memory_space<vmem>>, vector<1x128xf32>
    %497 = vector.broadcast %496 : vector<1x128xf32> to vector<2x128xf32>
    %498 = arith.addf %495, %497 : vector<2x128xf32>
    %c0_312 = arith.constant 0 : index
    %c0_313 = arith.constant 0 : index
    %499 = vector.load %arg27[%c0_312, %c0_313] : memref<2x128xf32, #tpu.memory_space<vmem>>, vector<2x128xf32>
    tpu.vector_store %arg27[%c0_312, %c0_313], %498 {strides = array<i32>} : memref<2x128xf32, #tpu.memory_space<vmem>>, vector<2x128xf32>,
    return
  }
  func.func @transform_0(%arg0: i32) -> (i32, i32) {
    %c0_i32 = arith.constant 0 : i32
    %c0_i32_0 = arith.constant 0 : i32
    %c0_i32_1 = arith.constant 0 : i32
    return %c0_i32, %c0_i32_0 : i32, i32
  }
  func.func @transform_1(%arg0: i32) -> (i32, i32) {
    %c0_i32 = arith.constant 0 : i32
    %c0_i32_0 = arith.constant 0 : i32
    %c0_i32_1 = arith.constant 0 : i32
    return %c0_i32, %c0_i32_0 : i32, i32
  }
  func.func @transform_2(%arg0: i32) -> (i32, i32) {
    %c0_i32 = arith.constant 0 : i32
    %c0_i32_0 = arith.constant 0 : i32
    %c0_i32_1 = arith.constant 0 : i32
    return %c0_i32, %c0_i32_0 : i32, i32
  }
  func.func @transform_3(%arg0: i32) -> (i32, i32) {
    %c0_i32 = arith.constant 0 : i32
    %c0_i32_0 = arith.constant 0 : i32
    %c0_i32_1 = arith.constant 0 : i32
    return %c0_i32, %c0_i32_0 : i32, i32
  }
  func.func @transform_4(%arg0: i32) -> (i32, i32) {
    %c0_i32 = arith.constant 0 : i32
    %c0_i32_0 = arith.constant 0 : i32
    %c0_i32_1 = arith.constant 0 : i32
    return %c0_i32, %c0_i32_0 : i32, i32
  }
  func.func @transform_5(%arg0: i32) -> (i32, i32) {
    %c0_i32 = arith.constant 0 : i32
    %c0_i32_0 = arith.constant 0 : i32
    %c0_i32_1 = arith.constant 0 : i32
    return %c0_i32, %c0_i32_0 : i32, i32
  }
  func.func @transform_6(%arg0: i32) -> (i32, i32, i32) {
    %c0_i32 = arith.constant 0 : i32
    %c0_i32_0 = arith.constant 0 : i32
    %c0_i32_1 = arith.constant 0 : i32
    %c0_i32_2 = arith.constant 0 : i32
    return %c0_i32, %c0_i32_0, %c0_i32_1 : i32, i32, i32
  }
  func.func @transform_7(%arg0: i32) -> (i32, i32, i32) {
    %c0_i32 = arith.constant 0 : i32
    %c0_i32_0 = arith.constant 0 : i32
    %c0_i32_1 = arith.constant 0 : i32
    %c0_i32_2 = arith.constant 0 : i32
    return %c0_i32, %c0_i32_0, %c0_i32_1 : i32, i32, i32
  }
  func.func @transform_8(%arg0: i32) -> (i32, i32, i32) {
    %c0_i32 = arith.constant 0 : i32
    %c0_i32_0 = arith.constant 0 : i32
    %c0_i32_1 = arith.constant 0 : i32
    %c0_i32_2 = arith.constant 0 : i32
    return %c0_i32, %c0_i32_0, %c0_i32_1 : i32, i32, i32
  }
  func.func @transform_9(%arg0: i32) -> (i32, i32, i32) {
    %c0_i32 = arith.constant 0 : i32
    %c0_i32_0 = arith.constant 0 : i32
    %c0_i32_1 = arith.constant 0 : i32
    %c0_i32_2 = arith.constant 0 : i32
    return %c0_i32, %c0_i32_0, %c0_i32_1 : i32, i32, i32
  }
  func.func @transform_10(%arg0: i32) -> (i32, i32, i32) {
    %c0_i32 = arith.constant 0 : i32
    %c0_i32_0 = arith.constant 0 : i32
    %c0_i32_1 = arith.constant 0 : i32
    %c0_i32_2 = arith.constant 0 : i32
    return %c0_i32, %c0_i32_0, %c0_i32_1 : i32, i32, i32
  }
  func.func @transform_11(%arg0: i32) -> (i32, i32, i32) {
    %c0_i32 = arith.constant 0 : i32
    %c0_i32_0 = arith.constant 0 : i32
    %c0_i32_1 = arith.constant 0 : i32
    %c0_i32_2 = arith.constant 0 : i32
    return %c0_i32, %c0_i32_0, %c0_i32_1 : i32, i32, i32
  }
  func.func @transform_12(%arg0: i32) -> (i32, i32, i32) {
    %c0_i32 = arith.constant 0 : i32
    %c0_i32_0 = arith.constant 0 : i32
    %c0_i32_1 = arith.constant 0 : i32
    %c0_i32_2 = arith.constant 0 : i32
    return %c0_i32, %c0_i32_0, %c0_i32_1 : i32, i32, i32
  }
  func.func @transform_13(%arg0: i32) -> (i32, i32, i32) {
    %c0_i32 = arith.constant 0 : i32
    %c0_i32_0 = arith.constant 0 : i32
    %c0_i32_1 = arith.constant 0 : i32
    %c0_i32_2 = arith.constant 0 : i32
    return %c0_i32, %c0_i32_0, %c0_i32_1 : i32, i32, i32
  }
  func.func @transform_14(%arg0: i32) -> (i32, i32, i32) {
    %c0_i32 = arith.constant 0 : i32
    %c0_i32_0 = arith.constant 0 : i32
    %c0_i32_1 = arith.constant 0 : i32
    %c0_i32_2 = arith.constant 0 : i32
    return %c0_i32, %c0_i32_0, %c0_i32_1 : i32, i32, i32
  }
  func.func @transform_15(%arg0: i32) -> (i32, i32, i32) {
    %c0_i32 = arith.constant 0 : i32
    %c0_i32_0 = arith.constant 0 : i32
    %c0_i32_1 = arith.constant 0 : i32
    %c0_i32_2 = arith.constant 0 : i32
    return %c0_i32, %c0_i32_0, %c0_i32_1 : i32, i32, i32
  }
  func.func @transform_16(%arg0: i32) -> (i32, i32, i32) {
    %c0_i32 = arith.constant 0 : i32
    %c0_i32_0 = arith.constant 0 : i32
    %c0_i32_1 = arith.constant 0 : i32
    %c0_i32_2 = arith.constant 0 : i32
    return %c0_i32, %c0_i32_0, %c0_i32_1 : i32, i32, i32
  }
  func.func @transform_17(%arg0: i32) -> (i32, i32, i32) {
    %c0_i32 = arith.constant 0 : i32
    %c0_i32_0 = arith.constant 0 : i32
    %c0_i32_1 = arith.constant 0 : i32
    %c0_i32_2 = arith.constant 0 : i32
    return %c0_i32, %c0_i32_0, %c0_i32_1 : i32, i32, i32
  }
  func.func @transform_18(%arg0: i32) -> (i32, i32, i32) {
    %c0_i32 = arith.constant 0 : i32
    %c0_i32_0 = arith.constant 0 : i32
    %c0_i32_1 = arith.constant 0 : i32
    %c0_i32_2 = arith.constant 0 : i32
    return %c0_i32, %c0_i32_0, %c0_i32_1 : i32, i32, i32
  }
  func.func @transform_19(%arg0: i32) -> (i32, i32, i32) {
    %c0_i32 = arith.constant 0 : i32
    %c0_i32_0 = arith.constant 0 : i32
    %c0_i32_1 = arith.constant 0 : i32
    %c0_i32_2 = arith.constant 0 : i32
    return %c0_i32, %c0_i32_0, %c0_i32_1 : i32, i32, i32
  }
  func.func @transform_20(%arg0: i32) -> (i32, i32) {
    %c0_i32 = arith.constant 0 : i32
    %c0_i32_0 = arith.constant 0 : i32
    %c0_i32_1 = arith.constant 0 : i32
    return %c0_i32, %c0_i32_0 : i32, i32
  }
  func.func @transform_21(%arg0: i32) -> (i32, i32) {
    %c0_i32 = arith.constant 0 : i32
    %c0_i32_0 = arith.constant 0 : i32
    %c0_i32_1 = arith.constant 0 : i32
    return %c0_i32, %c0_i32_0 : i32, i32
  }
  func.func @transform_22(%arg0: i32) -> (i32, i32) {
    %c0_i32 = arith.constant 0 : i32
    %c0_i32_0 = arith.constant 0 : i32
    %c0_i32_1 = arith.constant 0 : i32
    return %c0_i32, %c0_i32_0 : i32, i32
  }
  func.func @transform_23(%arg0: i32) -> (i32, i32) {
    %c0_i32 = arith.constant 0 : i32
    %c0_i32_0 = arith.constant 0 : i32
    %c0_i32_1 = arith.constant 0 : i32
    return %c0_i32, %c0_i32_0 : i32, i32
  }
  func.func @transform_24(%arg0: i32) -> (i32, i32) {
    %c0_i32 = arith.constant 0 : i32
    %c0_i32_0 = arith.constant 0 : i32
    %c0_i32_1 = arith.constant 0 : i32
    return %c0_i32, %c0_i32_0 : i32, i32
  }
  func.func @transform_25(%arg0: i32) -> (i32, i32) {
    %c0_i32 = arith.constant 0 : i32
    %c0_i32_0 = arith.constant 0 : i32
    %c0_i32_1 = arith.constant 0 : i32
    return %c0_i32, %c0_i32_0 : i32, i32
  }
  func.func @transform_26(%arg0: i32) -> (i32, i32) {
    %c0_i32 = arith.constant 0 : i32
    %c0_i32_0 = arith.constant 0 : i32
    %c0_i32_1 = arith.constant 0 : i32
    return %c0_i32, %c0_i32_0 : i32, i32
  }
}

</mosaic_0001>

<llo_original>
// kernel: forward.1
$region0: #{forward.1}
  #allocation0 [shape = 'u32[]', space=smem, size = 0x4, offset = 0x4, fixed_abs, tag = 'smem constant byte address 0x4 - core index']
  #allocation1 [shape = 'u32[144,128]{1,0:T(1,128)}', space=vmem, size = 0x12000, scoped, tag = 'internal scratch']
  #allocation2 [shape = 'f32[18,32]{1,0:T(8,128)}', space=vmem, size = 0x3000, scoped, tag = 'scratch operand']
  #allocation3 [shape = 'f32[18,96]{1,0:T(8,128)}', space=vmem, size = 0x3000, scoped, tag = 'scratch operand']
  #allocation4 [shape = 'f32[18,32]{1,0:T(8,128)}', space=vmem, size = 0x3000, scoped, tag = 'scratch operand']
  #allocation5 [shape = 'f32[2,32]{1,0:T(2,128)}', space=vmem, size = 0x400, scoped, tag = 'scratch operand']
  %s0 = inlined_call_operand.vmem [shape: f32[8,588], index: 0, kind: input, shape index: {}]
  %s1 = inlined_call_operand.vmem [shape: f32[588,32], index: 1, kind: input, shape index: {}]
  %s2 = inlined_call_operand.vmem [shape: f32[1,32], index: 2, kind: input, shape index: {}]
  %s3 = inlined_call_operand.vmem [shape: f32[1,32], index: 3, kind: input, shape index: {}]
  %s4 = inlined_call_operand.vmem [shape: f32[4,32], index: 4, kind: input, shape index: {}]
  %s5 = inlined_call_operand.vmem [shape: f32[5,32], index: 5, kind: input, shape index: {}]
  %s6 = inlined_call_operand.vmem [shape: f32[2,1,32], index: 6, kind: input, shape index: {}]
  %s7 = inlined_call_operand.vmem [shape: f32[2,1,32], index: 7, kind: input, shape index: {}]
  %s8 = inlined_call_operand.vmem [shape: f32[2,32,96], index: 8, kind: input, shape index: {}]
  %s9 = inlined_call_operand.vmem [shape: f32[2,1,96], index: 9, kind: input, shape index: {}]
  %s10 = inlined_call_operand.vmem [shape: f32[2,32,32], index: 10, kind: input, shape index: {}]
  %s11 = inlined_call_operand.vmem [shape: f32[2,1,32], index: 11, kind: input, shape index: {}]
  %s12 = inlined_call_operand.vmem [shape: f32[2,1,32], index: 12, kind: input, shape index: {}]
  %s13 = inlined_call_operand.vmem [shape: f32[2,1,32], index: 13, kind: input, shape index: {}]
  %s14 = inlined_call_operand.vmem [shape: f32[2,1,32], index: 14, kind: input, shape index: {}]
  %s15 = inlined_call_operand.vmem [shape: f32[2,32,128], index: 15, kind: input, shape index: {}]
  %s16 = inlined_call_operand.vmem [shape: f32[2,1,128], index: 16, kind: input, shape index: {}]
  %s17 = inlined_call_operand.vmem [shape: f32[2,128,32], index: 17, kind: input, shape index: {}]
  %s18 = inlined_call_operand.vmem [shape: f32[2,1,32], index: 18, kind: input, shape index: {}]
  %s19 = inlined_call_operand.vmem [shape: f32[2,1,32], index: 19, kind: input, shape index: {}]
  %s20 = inlined_call_operand.vmem [shape: f32[1,32], index: 20, kind: input, shape index: {}]
  %s21 = inlined_call_operand.vmem [shape: f32[1,32], index: 21, kind: input, shape index: {}]
  %s22 = inlined_call_operand.vmem [shape: f32[32,256], index: 22, kind: input, shape index: {}]
  %s23 = inlined_call_operand.vmem [shape: f32[1,256], index: 23, kind: input, shape index: {}]
  %s24 = inlined_call_operand.vmem [shape: f32[256,128], index: 24, kind: input, shape index: {}]
  %s25 = inlined_call_operand.vmem [shape: f32[1,128], index: 25, kind: input, shape index: {}]
  %s26 = inlined_call_operand.hbm [shape: f32[2,128], index: 26, kind: output, shape index: {}]
  %s27 = sld [smem:[#allocation0]]
  $region114: #{forward.1} parent=0
    _
  %s29 = ssub.s32 1, %s27
  %s30 = scalar_select 0, %s29, %s27
  $region1: #{forward.1} parent=0
    #allocation6 [shape = 'u8[1024]{0}', space=vmem, size = 0x400, scoped, tag = 'output window, operand 0, single buffered']
    #allocation7 [shape = 's32[1]{0}', space=sflag, size = 0x4, scoped, tag = 'scoped memory for forward.1']
    %31 = vsyncpa [#allocation7], 0
    // Predicated region
    $region2: #{forward.1} parent=1 // pred_check
      _
    $region3: #{forward.1} parent=1 // pred_check_branch
      %33 = sbr.rel (0) target = $region5
    $region4: #{forward.1} parent=1 // pred_region
      _
    $region5: #{forward.1} parent=1 // pred_fallthru
      _
    // Predicated region
    $region6: #{forward.1} parent=1 // pred_check
      _
    $region7: #{forward.1} parent=1 // pred_check_branch
      %35 = sbr.rel (0) target = $region9
    $region8: #{forward.1} parent=1 // pred_region
      _
    $region9: #{forward.1} parent=1 // pred_fallthru
      _
    // Predicated region
    $region10: #{forward.1} parent=1 // pred_check
      _
    $region11: #{forward.1} parent=1 // pred_check_branch
      %37 = sbr.rel (0) target = $region13
    $region12: #{forward.1} parent=1 // pred_region
      _
    $region13: #{forward.1} parent=1 // pred_fallthru
      _
    // Predicated region
    $region14: #{forward.1} parent=1 // pred_check
      _
    $region15: #{forward.1} parent=1 // pred_check_branch
      %39 = sbr.rel (0) target = $region17
    $region16: #{forward.1} parent=1 // pred_region
      _
    $region17: #{forward.1} parent=1 // pred_fallthru
      _
    // Predicated region
    $region18: #{forward.1} parent=1 // pred_check
      _
    $region19: #{forward.1} parent=1 // pred_check_branch
      %41 = sbr.rel (0) target = $region21
    $region20: #{forward.1} parent=1 // pred_region
      _
    $region21: #{forward.1} parent=1 // pred_fallthru
      _
    // Predicated region
    $region22: #{forward.1} parent=1 // pred_check
      _
    $region23: #{forward.1} parent=1 // pred_check_branch
      %43 = sbr.rel (0) target = $region25
    $region24: #{forward.1} parent=1 // pred_region
      _
    $region25: #{forward.1} parent=1 // pred_fallthru
      _
    // Predicated region
    $region26: #{forward.1} parent=1 // pred_check
      _
    $region27: #{forward.1} parent=1 // pred_check_branch
      %45 = sbr.rel (0) target = $region29
    $region28: #{forward.1} parent=1 // pred_region
      _
    $region29: #{forward.1} parent=1 // pred_fallthru
      _
    // Predicated region
    $region30: #{forward.1} parent=1 // pred_check
      _
    $region31: #{forward.1} parent=1 // pred_check_branch
      %47 = sbr.rel (0) target = $region33
    $region32: #{forward.1} parent=1 // pred_region
      _
    $region33: #{forward.1} parent=1 // pred_fallthru
      _
    // Predicated region
    $region34: #{forward.1} parent=1 // pred_check
      _
    $region35: #{forward.1} parent=1 // pred_check_branch
      %49 = sbr.rel (0) target = $region37
    $region36: #{forward.1} parent=1 // pred_region
      _
    $region37: #{forward.1} parent=1 // pred_fallthru
      _
    // Predicated region
    $region38: #{forward.1} parent=1 // pred_check
      _
    $region39: #{forward.1} parent=1 // pred_check_branch
      %51 = sbr.rel (0) target = $region41
    $region40: #{forward.1} parent=1 // pred_region
      _
    $region41: #{forward.1} parent=1 // pred_fallthru
      _
    // Predicated region
    $region42: #{forward.1} parent=1 // pred_check
      _
    $region43: #{forward.1} parent=1 // pred_check_branch
      %53 = sbr.rel (0) target = $region45
    $region44: #{forward.1} parent=1 // pred_region
      _
    $region45: #{forward.1} parent=1 // pred_fallthru
      _
    // Predicated region
    $region46: #{forward.1} parent=1 // pred_check
      _
    $region47: #{forward.1} parent=1 // pred_check_branch
      %55 = sbr.rel (0) target = $region49
    $region48: #{forward.1} parent=1 // pred_region
      _
    $region49: #{forward.1} parent=1 // pred_fallthru
      _
    // Predicated region
    $region50: #{forward.1} parent=1 // pred_check
      _
    $region51: #{forward.1} parent=1 // pred_check_branch
      %57 = sbr.rel (0) target = $region53
    $region52: #{forward.1} parent=1 // pred_region
      _
    $region53: #{forward.1} parent=1 // pred_fallthru
      _
    // Predicated region
    $region54: #{forward.1} parent=1 // pred_check
      _
    $region55: #{forward.1} parent=1 // pred_check_branch
      %59 = sbr.rel (0) target = $region57
    $region56: #{forward.1} parent=1 // pred_region
      _
    $region57: #{forward.1} parent=1 // pred_fallthru
      _
    // Predicated region
    $region58: #{forward.1} parent=1 // pred_check
      _
    $region59: #{forward.1} parent=1 // pred_check_branch
      %61 = sbr.rel (0) target = $region61
    $region60: #{forward.1} parent=1 // pred_region
      _
    $region61: #{forward.1} parent=1 // pred_fallthru
      _
    // Predicated region
    $region62: #{forward.1} parent=1 // pred_check
      _
    $region63: #{forward.1} parent=1 // pred_check_branch
      %63 = sbr.rel (0) target = $region65
    $region64: #{forward.1} parent=1 // pred_region
      _
    $region65: #{forward.1} parent=1 // pred_fallthru
      _
    // Predicated region
    $region66: #{forward.1} parent=1 // pred_check
      _
    $region67: #{forward.1} parent=1 // pred_check_branch
      %65 = sbr.rel (0) target = $region69
    $region68: #{forward.1} parent=1 // pred_region
      _
    $region69: #{forward.1} parent=1 // pred_fallthru
      _
    // Predicated region
    $region70: #{forward.1} parent=1 // pred_check
      _
    $region71: #{forward.1} parent=1 // pred_check_branch
      %67 = sbr.rel (0) target = $region73
    $region72: #{forward.1} parent=1 // pred_region
      _
    $region73: #{forward.1} parent=1 // pred_fallthru
      _
    // Predicated region
    $region74: #{forward.1} parent=1 // pred_check
      _
    $region75: #{forward.1} parent=1 // pred_check_branch
      %69 = sbr.rel (0) target = $region77
    $region76: #{forward.1} parent=1 // pred_region
      _
    $region77: #{forward.1} parent=1 // pred_fallthru
      _
    // Predicated region
    $region78: #{forward.1} parent=1 // pred_check
      _
    $region79: #{forward.1} parent=1 // pred_check_branch
      %71 = sbr.rel (0) target = $region81
    $region80: #{forward.1} parent=1 // pred_region
      _
    $region81: #{forward.1} parent=1 // pred_fallthru
      _
    // Predicated region
    $region82: #{forward.1} parent=1 // pred_check
      _
    $region83: #{forward.1} parent=1 // pred_check_branch
      %73 = sbr.rel (0) target = $region85
    $region84: #{forward.1} parent=1 // pred_region
      _
    $region85: #{forward.1} parent=1 // pred_fallthru
      _
    // Predicated region
    $region86: #{forward.1} parent=1 // pred_check
      _
    $region87: #{forward.1} parent=1 // pred_check_branch
      %75 = sbr.rel (0) target = $region89
    $region88: #{forward.1} parent=1 // pred_region
      _
    $region89: #{forward.1} parent=1 // pred_fallthru
      _
    // Predicated region
    $region90: #{forward.1} parent=1 // pred_check
      _
    $region91: #{forward.1} parent=1 // pred_check_branch
      %77 = sbr.rel (0) target = $region93
    $region92: #{forward.1} parent=1 // pred_region
      _
    $region93: #{forward.1} parent=1 // pred_fallthru
      _
    // Predicated region
    $region94: #{forward.1} parent=1 // pred_check
      _
    $region95: #{forward.1} parent=1 // pred_check_branch
      %79 = sbr.rel (0) target = $region97
    $region96: #{forward.1} parent=1 // pred_region
      _
    $region97: #{forward.1} parent=1 // pred_fallthru
      _
    // Predicated region
    $region98: #{forward.1} parent=1 // pred_check
      _
    $region99: #{forward.1} parent=1 // pred_check_branch
      %81 = sbr.rel (0) target = $region101
    $region100: #{forward.1} parent=1 // pred_region
      _
    $region101: #{forward.1} parent=1 // pred_fallthru
      _
    // Predicated region
    $region102: #{forward.1} parent=1 // pred_check
      _
    $region103: #{forward.1} parent=1 // pred_check_branch
      %83 = sbr.rel (0) target = $region105
    $region104: #{forward.1} parent=1 // pred_region
      _
    $region105: #{forward.1} parent=1 // pred_fallthru
      _
    %v84 = vld [vmem:[%s1] sm:$0xff]
    %v85 = vld [vmem:[%s1 + $0x8] sm:$0xff]
    %v86 = vld [vmem:[%s1 + $0x10] sm:$0xff]
    %v87 = vld [vmem:[%s1 + $0x18] sm:$0xff]
    %v88 = vld [vmem:[%s1 + $0x20] sm:$0xff]
    %v89 = vld [vmem:[%s1 + $0x28] sm:$0xff]
    %v90 = vld [vmem:[%s1 + $0x30] sm:$0xff]
    %v91 = vld [vmem:[%s1 + $0x38] sm:$0xff]
    %v92 = vld [vmem:[%s1 + $0x40] sm:$0xff]
    %v93 = vld [vmem:[%s1 + $0x48] sm:$0xff]
    %v94 = vld [vmem:[%s1 + $0x50] sm:$0xff]
    %v95 = vld [vmem:[%s1 + $0x58] sm:$0xff]
    %v96 = vld [vmem:[%s1 + $0x60] sm:$0xff]
    %v97 = vld [vmem:[%s1 + $0x68] sm:$0xff]
    %v98 = vld [vmem:[%s1 + $0x70] sm:$0xff]
    %v99 = vld [vmem:[%s1 + $0x78] sm:$0xff]
    %v100 = vld [vmem:[%s1 + $0x80] sm:$0xff]
    %v101 = vld [vmem:[%s1 + $0x88] sm:$0xff]
    %v102 = vld [vmem:[%s1 + $0x90] sm:$0xff]
    %v103 = vld [vmem:[%s1 + $0x98] sm:$0xff]
    %v104 = vld [vmem:[%s1 + $0xa0] sm:$0xff]
    %v105 = vld [vmem:[%s1 + $0xa8] sm:$0xff]
    %v106 = vld [vmem:[%s1 + $0xb0] sm:$0xff]
    %v107 = vld [vmem:[%s1 + $0xb8] sm:$0xff]
    %v108 = vld [vmem:[%s1 + $0xc0] sm:$0xff]
    %v109 = vld [vmem:[%s1 + $0xc8] sm:$0xff]
    %v110 = vld [vmem:[%s1 + $0xd0] sm:$0xff]
    %v111 = vld [vmem:[%s1 + $0xd8] sm:$0xff]
    %v112 = vld [vmem:[%s1 + $0xe0] sm:$0xff]
    %v113 = vld [vmem:[%s1 + $0xe8] sm:$0xff]
    %v114 = vld [vmem:[%s1 + $0xf0] sm:$0xff]
    %v115 = vld [vmem:[%s1 + $0xf8] sm:$0xff]
    %v116 = vld [vmem:[%s1 + $0x100] sm:$0xff]
    %v117 = vld [vmem:[%s1 + $0x108] sm:$0xff]
    %v118 = vld [vmem:[%s1 + $0x110] sm:$0xff]
    %v119 = vld [vmem:[%s1 + $0x118] sm:$0xff]
    %v120 = vld [vmem:[%s1 + $0x120] sm:$0xff]
    %v121 = vld [vmem:[%s1 + $0x128] sm:$0xff]
    %v122 = vld [vmem:[%s1 + $0x130] sm:$0xff]
    %v123 = vld [vmem:[%s1 + $0x138] sm:$0xff]
    %v124 = vld [vmem:[%s1 + $0x140] sm:$0xff]
    %v125 = vld [vmem:[%s1 + $0x148] sm:$0xff]
    %v126 = vld [vmem:[%s1 + $0x150] sm:$0xff]
    %v127 = vld [vmem:[%s1 + $0x158] sm:$0xff]
    %v128 = vld [vmem:[%s1 + $0x160] sm:$0xff]
    %v129 = vld [vmem:[%s1 + $0x168] sm:$0xff]
    %v130 = vld [vmem:[%s1 + $0x170] sm:$0xff]
    %v131 = vld [vmem:[%s1 + $0x178] sm:$0xff]
    %v132 = vld [vmem:[%s1 + $0x180] sm:$0xff]
    %v133 = vld [vmem:[%s1 + $0x188] sm:$0xff]
    %v134 = vld [vmem:[%s1 + $0x190] sm:$0xff]
    %v135 = vld [vmem:[%s1 + $0x198] sm:$0xff]
    %v136 = vld [vmem:[%s1 + $0x1a0] sm:$0xff]
    %v137 = vld [vmem:[%s1 + $0x1a8] sm:$0xff]
    %v138 = vld [vmem:[%s1 + $0x1b0] sm:$0xff]
    %v139 = vld [vmem:[%s1 + $0x1b8] sm:$0xff]
    %v140 = vld [vmem:[%s1 + $0x1c0] sm:$0xff]
    %v141 = vld [vmem:[%s1 + $0x1c8] sm:$0xff]
    %v142 = vld [vmem:[%s1 + $0x1d0] sm:$0xff]
    %v143 = vld [vmem:[%s1 + $0x1d8] sm:$0xff]
    %v144 = vld [vmem:[%s1 + $0x1e0] sm:$0xff]
    %v145 = vld [vmem:[%s1 + $0x1e8] sm:$0xff]
    %v146 = vld [vmem:[%s1 + $0x1f0] sm:$0xff]
    %v147 = vld [vmem:[%s1 + $0x1f8] sm:$0xff]
    %v148 = vld [vmem:[%s1 + $0x200] sm:$0xff]
    %v149 = vld [vmem:[%s1 + $0x208] sm:$0xff]
    %v150 = vld [vmem:[%s1 + $0x210] sm:$0xff]
    %v151 = vld [vmem:[%s1 + $0x218] sm:$0xff]
    %v152 = vld [vmem:[%s1 + $0x220] sm:$0xff]
    %v153 = vld [vmem:[%s1 + $0x228] sm:$0xff]
    %v154 = vld [vmem:[%s1 + $0x230] sm:$0xff]
    %v155 = vld [vmem:[%s1 + $0x238] sm:$0xff]
    %v156 = vld [vmem:[%s1 + $0x240] sm:$0xff]
    %v157 = vld [vmem:[%s1 + $0x248] sm:$0xf]
    %v158 = vld [vmem:[%s2] sm:$0x1]
    %v159 = vld [vmem:[%s3] sm:$0x1]
    %v160 = vld [vmem:[%s4] sm:$0xf]
    %v161 = vld [vmem:[%s5] sm:$0x1]
    %v162 = vld [vmem:[%s5 + $0x1] sm:$0xf]
    %v163 = vadd.f32 %v159, %v161
    %vm164 = vcmask 253952
    %165 = vst.msk [vmem:[#allocation2] sm:$0x1] %vm164, %v163
    %vm166 = vcmask 257024
    %167 = vst.msk [vmem:[#allocation2 + $0x1] sm:$0xf] %vm166, %v160
    %v168 = vld [vmem:[%s0] sm:$0xf]
    %v169 = vld [vmem:[%s0 + $0x8] sm:$0xf]
    %v170 = vld [vmem:[%s0 + $0x10] sm:$0xf]
    %v171 = vld [vmem:[%s0 + $0x18] sm:$0xf]
    %v172 = vld [vmem:[%s0 + $0x20] sm:$0xf]
    %v174 = vlaneseq
    %v175 = vshrl.u32 %v174, 7
    %v176 = vsub.s32 0, %v175
    %v177 = vrot.slane %v158, %v176
    %vm179 = vcmask 621568
    %v181 = vsel %vm179, %v172, 0
    %vm183 = vcmask 1043456
    %v185 = vsel %vm183, %v157, 0
    %187 = vmatprep.subr.mxu0 0.0
    %188 = vmatpush1.msra.mxu0 %v84
    %189 = vmatprep.subr.mxu0 0.0
    %190 = vmatpush1.msra.mxu0 %v85
    %191 = vmatprep.subr.mxu0 0.0
    %192 = vmatpush1.msra.mxu0 %v86
    %193 = vmatprep.subr.mxu0 0.0
    %194 = vmatpush1.msra.mxu0 %v87
    %195 = vmatprep.subr.mxu0 0.0
    %196 = vmatpush1.msra.mxu0 %v88
    %197 = vmatprep.subr.mxu0 0.0
    %198 = vmatpush1.msra.mxu0 %v89
    %199 = vmatprep.subr.mxu0 0.0
    %200 = vmatpush1.msra.mxu0 %v90
    %201 = vmatprep.subr.mxu0 0.0
    %202 = vmatpush1.msra.mxu0 %v91
    %203 = vmatprep.subr.mxu0 0.0
    %204 = vmatpush1.msra.mxu0 %v92
    %205 = vmatprep.subr.mxu0 0.0
    %206 = vmatpush1.msra.mxu0 %v93
    %207 = vmatprep.subr.mxu0 0.0
    %208 = vmatpush1.msra.mxu0 %v94
    %209 = vmatprep.subr.mxu0 0.0
    %210 = vmatpush1.msra.mxu0 %v95
    %211 = vmatprep.subr.mxu0 0.0
    %212 = vmatpush1.msra.mxu0 %v96
    %213 = vmatprep.subr.mxu0 0.0
    %214 = vmatpush1.msra.mxu0 %v97
    %215 = vmatprep.subr.mxu0 0.0
    %216 = vmatpush1.msra.mxu0 %v98
    %217 = vmatprep.subr.mxu0 0.0
    %218 = vmatpush1.msra.mxu0 %v99
    %219 = vmatprep.subr.mxu0 0.0
    %220 = vmatpush1.msra.mxu0 %v100
    %221 = vmatprep.subr.mxu0 0.0
    %222 = vmatpush1.msra.mxu0 %v101
    %223 = vmatprep.subr.mxu0 0.0
    %224 = vmatpush1.msra.mxu0 %v102
    %225 = vmatprep.subr.mxu0 0.0
    %226 = vmatpush1.msra.mxu0 %v103
    %227 = vmatprep.subr.mxu0 0.0
    %228 = vmatpush1.msra.mxu0 %v104
    %229 = vmatprep.subr.mxu0 0.0
    %230 = vmatpush1.msra.mxu0 %v105
    %231 = vmatprep.subr.mxu0 0.0
    %232 = vmatpush1.msra.mxu0 %v106
    %233 = vmatprep.subr.mxu0 0.0
    %234 = vmatpush1.msra.mxu0 %v107
    %235 = vmatprep.subr.mxu0 0.0
    %236 = vmatpush1.msra.mxu0 %v108
    %237 = vmatprep.subr.mxu0 0.0
    %238 = vmatpush1.msra.mxu0 %v109
    %239 = vmatprep.subr.mxu0 0.0
    %240 = vmatpush1.msra.mxu0 %v110
    %241 = vmatprep.subr.mxu0 0.0
    %242 = vmatpush1.msra.mxu0 %v111
    %243 = vmatprep.subr.mxu0 0.0
    %244 = vmatpush1.msra.mxu0 %v112
    %245 = vmatprep.subr.mxu0 0.0
    %246 = vmatpush1.msra.mxu0 %v113
    %247 = vmatprep.subr.mxu0 0.0
    %248 = vmatpush1.msra.mxu0 %v114
    %249 = vmatprep.subr.mxu0 0.0
    %250 = vmatpush1.msra.mxu0 %v115
    %251 = vmatprep.mubr.f32.mxu0 %v169
    %252 = vmatmul.mubr.f32.gmra.mrb[0].mxu0 %v168
    %v253 = vpop.f32.mrb[0].mxu0
    %v254 = vadd.f32 %v177, %v253
    %v255 = vpop.f32.mrb[0].mxu0
    %256 = vdwg.mxu0
    %257 = vmatprep.subr.mxu0 0.0
    %258 = vmatpush1.msra.mxu0 %v116
    %259 = vmatprep.subr.mxu0 0.0
    %260 = vmatpush1.msra.mxu0 %v117
    %261 = vmatprep.subr.mxu0 0.0
    %262 = vmatpush1.msra.mxu0 %v118
    %263 = vmatprep.subr.mxu0 0.0
    %264 = vmatpush1.msra.mxu0 %v119
    %265 = vmatprep.subr.mxu0 0.0
    %266 = vmatpush1.msra.mxu0 %v120
    %267 = vmatprep.subr.mxu0 0.0
    %268 = vmatpush1.msra.mxu0 %v121
    %269 = vmatprep.subr.mxu0 0.0
    %270 = vmatpush1.msra.mxu0 %v122
    %271 = vmatprep.subr.mxu0 0.0
    %272 = vmatpush1.msra.mxu0 %v123
    %273 = vmatprep.subr.mxu0 0.0
    %274 = vmatpush1.msra.mxu0 %v124
    %275 = vmatprep.subr.mxu0 0.0
    %276 = vmatpush1.msra.mxu0 %v125
    %277 = vmatprep.subr.mxu0 0.0
    %278 = vmatpush1.msra.mxu0 %v126
    %279 = vmatprep.subr.mxu0 0.0
    %280 = vmatpush1.msra.mxu0 %v127
    %281 = vmatprep.subr.mxu0 0.0
    %282 = vmatpush1.msra.mxu0 %v128
    %283 = vmatprep.subr.mxu0 0.0
    %284 = vmatpush1.msra.mxu0 %v129
    %285 = vmatprep.subr.mxu0 0.0
    %286 = vmatpush1.msra.mxu0 %v130
    %287 = vmatprep.subr.mxu0 0.0
    %288 = vmatpush1.msra.mxu0 %v131
    %289 = vmatprep.subr.mxu0 0.0
    %290 = vmatpush1.msra.mxu0 %v132
    %291 = vmatprep.subr.mxu0 0.0
    %292 = vmatpush1.msra.mxu0 %v133
    %293 = vmatprep.subr.mxu0 0.0
    %294 = vmatpush1.msra.mxu0 %v134
    %295 = vmatprep.subr.mxu0 0.0
    %296 = vmatpush1.msra.mxu0 %v135
    %297 = vmatprep.subr.mxu0 0.0
    %298 = vmatpush1.msra.mxu0 %v136
    %299 = vmatprep.subr.mxu0 0.0
    %300 = vmatpush1.msra.mxu0 %v137
    %301 = vmatprep.subr.mxu0 0.0
    %302 = vmatpush1.msra.mxu0 %v138
    %303 = vmatprep.subr.mxu0 0.0
    %304 = vmatpush1.msra.mxu0 %v139
    %305 = vmatprep.subr.mxu0 0.0
    %306 = vmatpush1.msra.mxu0 %v140
    %307 = vmatprep.subr.mxu0 0.0
    %308 = vmatpush1.msra.mxu0 %v141
    %309 = vmatprep.subr.mxu0 0.0
    %310 = vmatpush1.msra.mxu0 %v142
    %311 = vmatprep.subr.mxu0 0.0
    %312 = vmatpush1.msra.mxu0 %v143
    %313 = vmatprep.subr.mxu0 0.0
    %314 = vmatpush1.msra.mxu0 %v144
    %315 = vmatprep.subr.mxu0 0.0
    %316 = vmatpush1.msra.mxu0 %v145
    %317 = vmatprep.subr.mxu0 0.0
    %318 = vmatpush1.msra.mxu0 %v146
    %319 = vmatprep.subr.mxu0 0.0
    %320 = vmatpush1.msra.mxu0 %v147
    %321 = vmatprep.mubr.f32.mxu0 %v171
    %322 = vmatmul.mubr.f32.gmra.mrb[0].mxu0 %v170
    %v323 = vpop.f32.mrb[0].mxu0
    %v324 = vadd.f32 %v254, %v323
    %v325 = vpop.f32.mrb[0].mxu0
    %326 = vdwg.mxu0
    %327 = vmatprep.subr.mxu0 0.0
    %328 = vmatpush1.msra.mxu0 %v148
    %329 = vmatprep.subr.mxu0 0.0
    %330 = vmatpush1.msra.mxu0 %v149
    %331 = vmatprep.subr.mxu0 0.0
    %332 = vmatpush1.msra.mxu0 %v150
    %333 = vmatprep.subr.mxu0 0.0
    %334 = vmatpush1.msra.mxu0 %v151
    %335 = vmatprep.subr.mxu0 0.0
    %336 = vmatpush1.msra.mxu0 %v152
    %337 = vmatprep.subr.mxu0 0.0
    %338 = vmatpush1.msra.mxu0 %v153
    %339 = vmatprep.subr.mxu0 0.0
    %340 = vmatpush1.msra.mxu0 %v154
    %341 = vmatprep.subr.mxu0 0.0
    %342 = vmatpush1.msra.mxu0 %v155
    %343 = vmatprep.subr.mxu0 0.0
    %344 = vmatpush1.msra.mxu0 %v156
    %345 = vmatprep.subr.mxu0 0.0
    %346 = vmatpush1.msra.mxu0 %v185
    %347 = vmatprep.subr.mxu0 0.0
    %348 = vmatpush1.msra.mxu0 0.0
    %349 = vmatprep.subr.mxu0 0.0
    %350 = vmatpush1.msra.mxu0 0.0
    %351 = vmatprep.subr.mxu0 0.0
    %352 = vmatpush1.msra.mxu0 0.0
    %353 = vmatprep.subr.mxu0 0.0
    %354 = vmatpush1.msra.mxu0 0.0
    %355 = vmatprep.subr.mxu0 0.0
    %356 = vmatpush1.msra.mxu0 0.0
    %357 = vmatprep.subr.mxu0 0.0
    %358 = vmatpush1.msra.mxu0 0.0
    %359 = vmatprep.subr.mxu0 0.0
    %360 = vmatpush1.msra.mxu0 0.0
    %361 = vmatprep.subr.mxu0 0.0
    %362 = vmatpush1.msra.mxu0 0.0
    %363 = vmatprep.subr.mxu0 0.0
    %364 = vmatpush1.msra.mxu0 0.0
    %365 = vmatprep.subr.mxu0 0.0
    %366 = vmatpush1.msra.mxu0 0.0
    %367 = vmatprep.subr.mxu0 0.0
    %368 = vmatpush1.msra.mxu0 0.0
    %369 = vmatprep.subr.mxu0 0.0
    %370 = vmatpush1.msra.mxu0 0.0
    %371 = vmatprep.subr.mxu0 0.0
    %372 = vmatpush1.msra.mxu0 0.0
    %373 = vmatprep.subr.mxu0 0.0
    %374 = vmatpush1.msra.mxu0 0.0
    %375 = vmatprep.subr.mxu0 0.0
    %376 = vmatpush1.msra.mxu0 0.0
    %377 = vmatprep.subr.mxu0 0.0
    %378 = vmatpush1.msra.mxu0 0.0
    %379 = vmatprep.subr.mxu0 0.0
    %380 = vmatpush1.msra.mxu0 0.0
    %381 = vmatprep.subr.mxu0 0.0
    %382 = vmatpush1.msra.mxu0 0.0
    %383 = vmatprep.subr.mxu0 0.0
    %384 = vmatpush1.msra.mxu0 0.0
    %385 = vmatprep.subr.mxu0 0.0
    %386 = vmatpush1.msra.mxu0 0.0
    %387 = vmatprep.subr.mxu0 0.0
    %388 = vmatpush1.msra.mxu0 0.0
    %389 = vmatprep.subr.mxu0 0.0
    %390 = vmatpush1.msra.mxu0 0.0
    %391 = vmatprep.mubr.f32.mxu0 0.0
    %392 = vmatmul.mubr.f32.gmra.mrb[0].mxu0 %v181
    %v393 = vpop.f32.mrb[0].mxu0
    %v394 = vadd.f32 %v324, %v393
    %v395 = vpop.f32.mrb[0].mxu0
    %396 = vdwg.mxu0
    %v397 = vadd.f32 %v394, %v162
    %398 = vst.msk [vmem:[#allocation2 + $0x5] sm:$0xf] %vm166, %v397
    %399 = vst.msk [vmem:[#allocation2 + $0x9] sm:$0x1] %vm164, %v163
    %400 = vst.msk [vmem:[#allocation2 + $0xa] sm:$0xf] %vm166, %v160
    %v401 = vld [vmem:[%s0] sm:$0xf0]
    %v402 = vld [vmem:[%s0 + $0x8] sm:$0xf0]
    %v403 = vld [vmem:[%s0 + $0x10] sm:$0xf0]
    %v404 = vld [vmem:[%s0 + $0x18] sm:$0xf0]
    %v405 = vld [vmem:[%s0 + $0x20] sm:$0xf0]
    %v411 = vrot.slane %v401, 4
    %v412 = vrot.slane %v402, 4
    %v413 = vrot.slane %v403, 4
    %v414 = vrot.slane %v404, 4
    %v415 = vrot.slane %v405, 4
    %v420 = vsel %vm179, %v415, 0
    %422 = vmatprep.subr.mxu0 0.0
    %423 = vmatpush1.msra.mxu0 %v84
    %424 = vmatprep.subr.mxu0 0.0
    %425 = vmatpush1.msra.mxu0 %v85
    %426 = vmatprep.subr.mxu0 0.0
    %427 = vmatpush1.msra.mxu0 %v86
    %428 = vmatprep.subr.mxu0 0.0
    %429 = vmatpush1.msra.mxu0 %v87
    %430 = vmatprep.subr.mxu0 0.0
    %431 = vmatpush1.msra.mxu0 %v88
    %432 = vmatprep.subr.mxu0 0.0
    %433 = vmatpush1.msra.mxu0 %v89
    %434 = vmatprep.subr.mxu0 0.0
    %435 = vmatpush1.msra.mxu0 %v90
    %436 = vmatprep.subr.mxu0 0.0
    %437 = vmatpush1.msra.mxu0 %v91
    %438 = vmatprep.subr.mxu0 0.0
    %439 = vmatpush1.msra.mxu0 %v92
    %440 = vmatprep.subr.mxu0 0.0
    %441 = vmatpush1.msra.mxu0 %v93
    %442 = vmatprep.subr.mxu0 0.0
    %443 = vmatpush1.msra.mxu0 %v94
    %444 = vmatprep.subr.mxu0 0.0
    %445 = vmatpush1.msra.mxu0 %v95
    %446 = vmatprep.subr.mxu0 0.0
    %447 = vmatpush1.msra.mxu0 %v96
    %448 = vmatprep.subr.mxu0 0.0
    %449 = vmatpush1.msra.mxu0 %v97
    %450 = vmatprep.subr.mxu0 0.0
    %451 = vmatpush1.msra.mxu0 %v98
    %452 = vmatprep.subr.mxu0 0.0
    %453 = vmatpush1.msra.mxu0 %v99
    %454 = vmatprep.subr.mxu0 0.0
    %455 = vmatpush1.msra.mxu0 %v100
    %456 = vmatprep.subr.mxu0 0.0
    %457 = vmatpush1.msra.mxu0 %v101
    %458 = vmatprep.subr.mxu0 0.0
    %459 = vmatpush1.msra.mxu0 %v102
    %460 = vmatprep.subr.mxu0 0.0
    %461 = vmatpush1.msra.mxu0 %v103
    %462 = vmatprep.subr.mxu0 0.0
    %463 = vmatpush1.msra.mxu0 %v104
    %464 = vmatprep.subr.mxu0 0.0
    %465 = vmatpush1.msra.mxu0 %v105
    %466 = vmatprep.subr.mxu0 0.0
    %467 = vmatpush1.msra.mxu0 %v106
    %468 = vmatprep.subr.mxu0 0.0
    %469 = vmatpush1.msra.mxu0 %v107
    %470 = vmatprep.subr.mxu0 0.0
    %471 = vmatpush1.msra.mxu0 %v108
    %472 = vmatprep.subr.mxu0 0.0
    %473 = vmatpush1.msra.mxu0 %v109
    %474 = vmatprep.subr.mxu0 0.0
    %475 = vmatpush1.msra.mxu0 %v110
    %476 = vmatprep.subr.mxu0 0.0
    %477 = vmatpush1.msra.mxu0 %v111
    %478 = vmatprep.subr.mxu0 0.0
    %479 = vmatpush1.msra.mxu0 %v112
    %480 = vmatprep.subr.mxu0 0.0
    %481 = vmatpush1.msra.mxu0 %v113
    %482 = vmatprep.subr.mxu0 0.0
    %483 = vmatpush1.msra.mxu0 %v114
    %484 = vmatprep.subr.mxu0 0.0
    %485 = vmatpush1.msra.mxu0 %v115
    %486 = vmatprep.mubr.f32.mxu0 %v412
    %487 = vmatmul.mubr.f32.gmra.mrb[0].mxu0 %v411
    %v488 = vpop.f32.mrb[0].mxu0
    %v489 = vadd.f32 %v177, %v488
    %v490 = vpop.f32.mrb[0].mxu0
    %491 = vdwg.mxu0
    %492 = vmatprep.subr.mxu0 0.0
    %493 = vmatpush1.msra.mxu0 %v116
    %494 = vmatprep.subr.mxu0 0.0
    %495 = vmatpush1.msra.mxu0 %v117
    %496 = vmatprep.subr.mxu0 0.0
    %497 = vmatpush1.msra.mxu0 %v118
    %498 = vmatprep.subr.mxu0 0.0
    %499 = vmatpush1.msra.mxu0 %v119
    %500 = vmatprep.subr.mxu0 0.0
    %501 = vmatpush1.msra.mxu0 %v120
    %502 = vmatprep.subr.mxu0 0.0
    %503 = vmatpush1.msra.mxu0 %v121
    %504 = vmatprep.subr.mxu0 0.0
    %505 = vmatpush1.msra.mxu0 %v122
    %506 = vmatprep.subr.mxu0 0.0
    %507 = vmatpush1.msra.mxu0 %v123
    %508 = vmatprep.subr.mxu0 0.0
    %509 = vmatpush1.msra.mxu0 %v124
    %510 = vmatprep.subr.mxu0 0.0
    %511 = vmatpush1.msra.mxu0 %v125
    %512 = vmatprep.subr.mxu0 0.0
    %513 = vmatpush1.msra.mxu0 %v126
    %514 = vmatprep.subr.mxu0 0.0
    %515 = vmatpush1.msra.mxu0 %v127
    %516 = vmatprep.subr.mxu0 0.0
    %517 = vmatpush1.msra.mxu0 %v128
    %518 = vmatprep.subr.mxu0 0.0
    %519 = vmatpush1.msra.mxu0 %v129
    %520 = vmatprep.subr.mxu0 0.0
    %521 = vmatpush1.msra.mxu0 %v130
    %522 = vmatprep.subr.mxu0 0.0
    %523 = vmatpush1.msra.mxu0 %v131
    %524 = vmatprep.subr.mxu0 0.0
    %525 = vmatpush1.msra.mxu0 %v132
    %526 = vmatprep.subr.mxu0 0.0
    %527 = vmatpush1.msra.mxu0 %v133
    %528 = vmatprep.subr.mxu0 0.0
    %529 = vmatpush1.msra.mxu0 %v134
    %530 = vmatprep.subr.mxu0 0.0
    %531 = vmatpush1.msra.mxu0 %v135
    %532 = vmatprep.subr.mxu0 0.0
    %533 = vmatpush1.msra.mxu0 %v136
    %534 = vmatprep.subr.mxu0 0.0
    %535 = vmatpush1.msra.mxu0 %v137
    %536 = vmatprep.subr.mxu0 0.0
    %537 = vmatpush1.msra.mxu0 %v138
    %538 = vmatprep.subr.mxu0 0.0
    %539 = vmatpush1.msra.mxu0 %v139
    %540 = vmatprep.subr.mxu0 0.0
    %541 = vmatpush1.msra.mxu0 %v140
    %542 = vmatprep.subr.mxu0 0.0
    %543 = vmatpush1.msra.mxu0 %v141
    %544 = vmatprep.subr.mxu0 0.0
    %545 = vmatpush1.msra.mxu0 %v142
    %546 = vmatprep.subr.mxu0 0.0
    %547 = vmatpush1.msra.mxu0 %v143
    %548 = vmatprep.subr.mxu0 0.0
    %549 = vmatpush1.msra.mxu0 %v144
    %550 = vmatprep.subr.mxu0 0.0
    %551 = vmatpush1.msra.mxu0 %v145
    %552 = vmatprep.subr.mxu0 0.0
    %553 = vmatpush1.msra.mxu0 %v146
    %554 = vmatprep.subr.mxu0 0.0
    %555 = vmatpush1.msra.mxu0 %v147
    %556 = vmatprep.mubr.f32.mxu0 %v414
    %557 = vmatmul.mubr.f32.gmra.mrb[0].mxu0 %v413
    %v558 = vpop.f32.mrb[0].mxu0
    %v559 = vadd.f32 %v489, %v558
    %v560 = vpop.f32.mrb[0].mxu0
    %561 = vdwg.mxu0
    %562 = vmatprep.subr.mxu0 0.0
    %563 = vmatpush1.msra.mxu0 %v148
    %564 = vmatprep.subr.mxu0 0.0
    %565 = vmatpush1.msra.mxu0 %v149
    %566 = vmatprep.subr.mxu0 0.0
    %567 = vmatpush1.msra.mxu0 %v150
    %568 = vmatprep.subr.mxu0 0.0
    %569 = vmatpush1.msra.mxu0 %v151
    %570 = vmatprep.subr.mxu0 0.0
    %571 = vmatpush1.msra.mxu0 %v152
    %572 = vmatprep.subr.mxu0 0.0
    %573 = vmatpush1.msra.mxu0 %v153
    %574 = vmatprep.subr.mxu0 0.0
    %575 = vmatpush1.msra.mxu0 %v154
    %576 = vmatprep.subr.mxu0 0.0
    %577 = vmatpush1.msra.mxu0 %v155
    %578 = vmatprep.subr.mxu0 0.0
    %579 = vmatpush1.msra.mxu0 %v156
    %580 = vmatprep.subr.mxu0 0.0
    %581 = vmatpush1.msra.mxu0 %v185
    %582 = vmatprep.subr.mxu0 0.0
    %583 = vmatpush1.msra.mxu0 0.0
    %584 = vmatprep.subr.mxu0 0.0
    %585 = vmatpush1.msra.mxu0 0.0
    %586 = vmatprep.subr.mxu0 0.0
    %587 = vmatpush1.msra.mxu0 0.0
    %588 = vmatprep.subr.mxu0 0.0
    %589 = vmatpush1.msra.mxu0 0.0
    %590 = vmatprep.subr.mxu0 0.0
    %591 = vmatpush1.msra.mxu0 0.0
    %592 = vmatprep.subr.mxu0 0.0
    %593 = vmatpush1.msra.mxu0 0.0
    %594 = vmatprep.subr.mxu0 0.0
    %595 = vmatpush1.msra.mxu0 0.0
    %596 = vmatprep.subr.mxu0 0.0
    %597 = vmatpush1.msra.mxu0 0.0
    %598 = vmatprep.subr.mxu0 0.0
    %599 = vmatpush1.msra.mxu0 0.0
    %600 = vmatprep.subr.mxu0 0.0
    %601 = vmatpush1.msra.mxu0 0.0
    %602 = vmatprep.subr.mxu0 0.0
    %603 = vmatpush1.msra.mxu0 0.0
    %604 = vmatprep.subr.mxu0 0.0
    %605 = vmatpush1.msra.mxu0 0.0
    %606 = vmatprep.subr.mxu0 0.0
    %607 = vmatpush1.msra.mxu0 0.0
    %608 = vmatprep.subr.mxu0 0.0
    %609 = vmatpush1.msra.mxu0 0.0
    %610 = vmatprep.subr.mxu0 0.0
    %611 = vmatpush1.msra.mxu0 0.0
    %612 = vmatprep.subr.mxu0 0.0
    %613 = vmatpush1.msra.mxu0 0.0
    %614 = vmatprep.subr.mxu0 0.0
    %615 = vmatpush1.msra.mxu0 0.0
    %616 = vmatprep.subr.mxu0 0.0
    %617 = vmatpush1.msra.mxu0 0.0
    %618 = vmatprep.subr.mxu0 0.0
    %619 = vmatpush1.msra.mxu0 0.0
    %620 = vmatprep.subr.mxu0 0.0
    %621 = vmatpush1.msra.mxu0 0.0
    %622 = vmatprep.subr.mxu0 0.0
    %623 = vmatpush1.msra.mxu0 0.0
    %624 = vmatprep.subr.mxu0 0.0
    %625 = vmatpush1.msra.mxu0 0.0
    %626 = vmatprep.mubr.f32.mxu0 0.0
    %627 = vmatmul.mubr.f32.gmra.mrb[0].mxu0 %v420
    %v628 = vpop.f32.mrb[0].mxu0
    %v629 = vadd.f32 %v559, %v628
    %v630 = vpop.f32.mrb[0].mxu0
    %631 = vdwg.mxu0
    %v632 = vadd.f32 %v629, %v162
    %633 = vst.msk [vmem:[#allocation2 + $0xe] sm:$0xf] %vm166, %v632
    %v634 = vld [vmem:[#allocation2] sm:$0xff]
    %v635 = vld [vmem:[#allocation2 + $0x8] sm:$0xff]
    %v636 = vld [vmem:[#allocation2 + $0x10] sm:$0x3]
    %v637 = vld [vmem:[%s6] sm:$0x1]
    %v638 = vld [vmem:[%s7] sm:$0x1]
    %vm639 = vcmask 261120
    %v640 = vsel %vm639, %v634, 0.0
    %641 = vadd.xlane.f32.xlu0 %v640
    %v642 = vpop.xlane.xlu0 %641
    %v643 = vsel %vm639, %v635, 0.0
    %644 = vadd.xlane.f32.xlu0 %v643
    %v645 = vpop.xlane.xlu0 %644
    %vm646 = vcmask 254976
    %v647 = vsel %vm646, %v636, 0.0
    %648 = vadd.xlane.f32.xlu0 %v647
    %v649 = vpop.xlane.xlu0 %648
    %v650 = vrcp.pop 32.0
    %v651 = vmul.f32 %v642, %v650
    %v652 = vmul.f32 %v645, %v650
    %v653 = vmul.f32 %v649, %v650
    %v654 = vsub.f32 %v634, %v651
    %v655 = vsub.f32 %v635, %v652
    %v656 = vsub.f32 %v636, %v653
    %v657 = vmul.f32 %v654, %v654
    %v658 = vmul.f32 %v655, %v655
    %v659 = vmul.f32 %v656, %v656
    %v660 = vsel %vm639, %v657, 0.0
    %661 = vadd.xlane.f32.xlu0 %v660
    %v662 = vpop.xlane.xlu0 %661
    %v663 = vsel %vm639, %v658, 0.0
    %664 = vadd.xlane.f32.xlu0 %v663
    %v665 = vpop.xlane.xlu0 %664
    %v666 = vsel %vm646, %v659, 0.0
    %667 = vadd.xlane.f32.xlu0 %v666
    %v668 = vpop.xlane.xlu0 %667
    %v669 = vmul.f32 %v662, %v650
    %v670 = vmul.f32 %v665, %v650
    %v671 = vmul.f32 %v668, %v650
    %v672 = vadd.f32 %v669, 1e-06
    %v673 = vadd.f32 %v670, 1e-06
    %v674 = vadd.f32 %v671, 1e-06
    %v675 = vrsqrt.pop %v672
    %v676 = vrsqrt.pop %v673
    %v677 = vrsqrt.pop %v674
    %v678 = vmul.f32 %v654, %v675
    %v679 = vmul.f32 %v655, %v676
    %v680 = vmul.f32 %v656, %v677
    %v682 = vlaneseq
    %v683 = vshrl.u32 %v682, 7
    %v684 = vsub.s32 0, %v683
    %v685 = vrot.slane %v637, %v684
    %v687 = vmul.f32 %v678, %v685
    %v688 = vmul.f32 %v679, %v685
    %v689 = vmul.f32 %v680, %v685
    %v691 = vlaneseq
    %v692 = vshrl.u32 %v691, 7
    %v693 = vsub.s32 0, %v692
    %v694 = vrot.slane %v638, %v693
    %v696 = vadd.f32 %v687, %v694
    %v697 = vadd.f32 %v688, %v694
    %v698 = vadd.f32 %v689, %v694
    %v699 = vld [vmem:[%s8] sm:$0xff]
    %v700 = vld [vmem:[%s8 + $0x8] sm:$0xff]
    %v701 = vld [vmem:[%s8 + $0x10] sm:$0xff]
    %v702 = vld [vmem:[%s8 + $0x18] sm:$0xff]
    %v703 = vld [vmem:[%s9] sm:$0x1]
    %v705 = vlaneseq
    %v706 = vshrl.u32 %v705, 7
    %v707 = vsub.s32 0, %v706
    %v708 = vrot.slane %v703, %v707
    %v711 = vsel %vm639, %v696, 0
    %v714 = vsel %vm639, %v697, 0
    %v717 = vsel %vm639, %v698, 0
    %719 = vmatprep.subr.mxu0 0.0
    %720 = vmatpush1.msra.mxu0 %v699
    %721 = vmatprep.subr.mxu0 0.0
    %722 = vmatpush1.msra.mxu0 %v700
    %723 = vmatprep.subr.mxu0 0.0
    %724 = vmatpush1.msra.mxu0 %v701
    %725 = vmatprep.subr.mxu0 0.0
    %726 = vmatpush1.msra.mxu0 %v702
    %727 = vmatprep.subr.mxu0 0.0
    %728 = vmatpush1.msra.mxu0 0.0
    %729 = vmatprep.subr.mxu0 0.0
    %730 = vmatpush1.msra.mxu0 0.0
    %731 = vmatprep.subr.mxu0 0.0
    %732 = vmatpush1.msra.mxu0 0.0
    %733 = vmatprep.subr.mxu0 0.0
    %734 = vmatpush1.msra.mxu0 0.0
    %735 = vmatprep.subr.mxu0 0.0
    %736 = vmatpush1.msra.mxu0 0.0
    %737 = vmatprep.subr.mxu0 0.0
    %738 = vmatpush1.msra.mxu0 0.0
    %739 = vmatprep.subr.mxu0 0.0
    %740 = vmatpush1.msra.mxu0 0.0
    %741 = vmatprep.subr.mxu0 0.0
    %742 = vmatpush1.msra.mxu0 0.0
    %743 = vmatprep.subr.mxu0 0.0
    %744 = vmatpush1.msra.mxu0 0.0
    %745 = vmatprep.subr.mxu0 0.0
    %746 = vmatpush1.msra.mxu0 0.0
    %747 = vmatprep.subr.mxu0 0.0
    %748 = vmatpush1.msra.mxu0 0.0
    %749 = vmatprep.subr.mxu0 0.0
    %750 = vmatpush1.msra.mxu0 0.0
    %751 = vmatprep.subr.mxu0 0.0
    %752 = vmatpush1.msra.mxu0 0.0
    %753 = vmatprep.subr.mxu0 0.0
    %754 = vmatpush1.msra.mxu0 0.0
    %755 = vmatprep.subr.mxu0 0.0
    %756 = vmatpush1.msra.mxu0 0.0
    %757 = vmatprep.subr.mxu0 0.0
    %758 = vmatpush1.msra.mxu0 0.0
    %759 = vmatprep.subr.mxu0 0.0
    %760 = vmatpush1.msra.mxu0 0.0
    %761 = vmatprep.subr.mxu0 0.0
    %762 = vmatpush1.msra.mxu0 0.0
    %763 = vmatprep.subr.mxu0 0.0
    %764 = vmatpush1.msra.mxu0 0.0
    %765 = vmatprep.subr.mxu0 0.0
    %766 = vmatpush1.msra.mxu0 0.0
    %767 = vmatprep.subr.mxu0 0.0
    %768 = vmatpush1.msra.mxu0 0.0
    %769 = vmatprep.subr.mxu0 0.0
    %770 = vmatpush1.msra.mxu0 0.0
    %771 = vmatprep.subr.mxu0 0.0
    %772 = vmatpush1.msra.mxu0 0.0
    %773 = vmatprep.subr.mxu0 0.0
    %774 = vmatpush1.msra.mxu0 0.0
    %775 = vmatprep.subr.mxu0 0.0
    %776 = vmatpush1.msra.mxu0 0.0
    %777 = vmatprep.subr.mxu0 0.0
    %778 = vmatpush1.msra.mxu0 0.0
    %779 = vmatprep.subr.mxu0 0.0
    %780 = vmatpush1.msra.mxu0 0.0
    %781 = vmatprep.subr.mxu0 0.0
    %782 = vmatpush1.msra.mxu0 0.0
    %783 = vmatprep.mubr.f32.mxu0 0.0
    %784 = vmatmul.mubr.f32.gmra.mrb[0].mxu0 %v711
    %v785 = vpop.f32.mrb[0].mxu0
    %v786 = vadd.f32 %v708, %v785
    %v787 = vpop.f32.mrb[0].mxu0
    %788 = vmatprep.mubr.f32.mxu0 0.0
    %789 = vmatmul.mubr.f32.gmra.mrb[0].mxu0 %v714
    %v790 = vpop.f32.mrb[0].mxu0
    %v791 = vadd.f32 %v708, %v790
    %v792 = vpop.f32.mrb[0].mxu0
    %793 = vmatprep.mubr.f32.mxu0 0.0
    %794 = vmatmul.mubr.f32.gmra.mrb[0].mxu0 %v717
    %v795 = vpop.f32.mrb[0].mxu0
    %v796 = vadd.f32 %v708, %v795
    %v797 = vpop.f32.mrb[0].mxu0
    %798 = vdwg.mxu0
    %vm799 = vcmask 785408
    %800 = vst.msk [vmem:[#allocation3] sm:$0xff] %vm799, %v786
    %801 = vst.msk [vmem:[#allocation3 + $0x8] sm:$0xff] %vm799, %v791
    %vm802 = vcmask 779264
    %803 = vst.msk [vmem:[#allocation3 + $0x10] sm:$0x3] %vm802, %v796
    %v804 = vld [vmem:[#allocation3] sm:$0xff]
    %v805 = vld [vmem:[#allocation3 + $0x8] sm:$0x1]
    %v806 = vmul.f32 %v804, 0.25
    %v807 = vmul.f32 %v805, 0.25
    %810 = vrot.lane.b32.xlu0 %v804, 96
    %v811 = vpop.permute.xlu0 %810
    %812 = vrot.lane.b32.xlu0 %v805, 96
    %v813 = vpop.permute.xlu0 %812
    %vm814 = vcmask 130048
    %v816 = vsel %vm814, %v806, 0
    %v819 = vsel %vm814, %v807, 0
    %v821 = vsel %vm814, %v811, 0
    %v823 = vsel %vm814, %v813, 0
    %825 = vmatprep.subr.mxu0 0.0
    %826 = vmatpush1.xpose.msra.mxu0 %v821
    %827 = vmatprep.subr.mxu0 0.0
    %828 = vmatpush1.xpose.msra.mxu0 %v823
    %829 = vmatprep.subr.mxu0 0.0
    %830 = vmatpush1.xpose.msra.mxu0 0.0
    %831 = vmatprep.subr.mxu0 0.0
    %832 = vmatpush1.xpose.msra.mxu0 0.0
    %833 = vmatprep.subr.mxu0 0.0
    %834 = vmatpush1.xpose.msra.mxu0 0.0
    %835 = vmatprep.subr.mxu0 0.0
    %836 = vmatpush1.xpose.msra.mxu0 0.0
    %837 = vmatprep.subr.mxu0 0.0
    %838 = vmatpush1.xpose.msra.mxu0 0.0
    %839 = vmatprep.subr.mxu0 0.0
    %840 = vmatpush1.xpose.msra.mxu0 0.0
    %841 = vmatprep.subr.mxu0 0.0
    %842 = vmatpush1.xpose.msra.mxu0 0.0
    %843 = vmatprep.subr.mxu0 0.0
    %844 = vmatpush1.xpose.msra.mxu0 0.0
    %845 = vmatprep.subr.mxu0 0.0
    %846 = vmatpush1.xpose.msra.mxu0 0.0
    %847 = vmatprep.subr.mxu0 0.0
    %848 = vmatpush1.xpose.msra.mxu0 0.0
    %849 = vmatprep.subr.mxu0 0.0
    %850 = vmatpush1.xpose.msra.mxu0 0.0
    %851 = vmatprep.subr.mxu0 0.0
    %852 = vmatpush1.xpose.msra.mxu0 0.0
    %853 = vmatprep.subr.mxu0 0.0
    %854 = vmatpush1.xpose.msra.mxu0 0.0
    %855 = vmatprep.subr.mxu0 0.0
    %856 = vmatpush1.xpose.msra.mxu0 0.0
    %857 = vmatprep.subr.mxu0 0.0
    %858 = vmatpush1.xpose.msra.mxu0 0.0
    %859 = vmatprep.subr.mxu0 0.0
    %860 = vmatpush1.xpose.msra.mxu0 0.0
    %861 = vmatprep.subr.mxu0 0.0
    %862 = vmatpush1.xpose.msra.mxu0 0.0
    %863 = vmatprep.subr.mxu0 0.0
    %864 = vmatpush1.xpose.msra.mxu0 0.0
    %865 = vmatprep.subr.mxu0 0.0
    %866 = vmatpush1.xpose.msra.mxu0 0.0
    %867 = vmatprep.subr.mxu0 0.0
    %868 = vmatpush1.xpose.msra.mxu0 0.0
    %869 = vmatprep.subr.mxu0 0.0
    %870 = vmatpush1.xpose.msra.mxu0 0.0
    %871 = vmatprep.subr.mxu0 0.0
    %872 = vmatpush1.xpose.msra.mxu0 0.0
    %873 = vmatprep.subr.mxu0 0.0
    %874 = vmatpush1.xpose.msra.mxu0 0.0
    %875 = vmatprep.subr.mxu0 0.0
    %876 = vmatpush1.xpose.msra.mxu0 0.0
    %877 = vmatprep.subr.mxu0 0.0
    %878 = vmatpush1.xpose.msra.mxu0 0.0
    %879 = vmatprep.subr.mxu0 0.0
    %880 = vmatpush1.xpose.msra.mxu0 0.0
    %881 = vmatprep.subr.mxu0 0.0
    %882 = vmatpush1.xpose.msra.mxu0 0.0
    %883 = vmatprep.subr.mxu0 0.0
    %884 = vmatpush1.xpose.msra.mxu0 0.0
    %885 = vmatprep.subr.mxu0 0.0
    %886 = vmatpush1.xpose.msra.mxu0 0.0
    %887 = vmatprep.subr.mxu0 0.0
    %888 = vmatpush1.xpose.msra.mxu0 0.0
    %889 = vmatprep.mubr.f32.mxu0 0.0
    %890 = vmatmul.mubr.f32.gmra.mrb[0].mxu0 %v816
    %v891 = vpop.f32.mrb[0].mxu0
    %v892 = vadd.f32 0.0, %v891
    %v893 = vpop.f32.mrb[0].mxu0
    %894 = vmatprep.mubr.f32.mxu0 0.0
    %895 = vmatmul.mubr.f32.gmra.mrb[0].mxu0 %v819
    %v896 = vpop.f32.mrb[0].mxu0
    %v897 = vadd.f32 0.0, %v896
    %v898 = vpop.f32.mrb[0].mxu0
    %899 = vdwg.mxu0
    %vm900 = vcmask 72704
    %v901 = vsel %vm900, %v892, -inf
    %902 = vmax.xlane.f32.xlu0 %v901
    %v903 = vpop.xlane.xlu0 %902
    %vm904 = vcmask 65536
    %v905 = vsel %vm904, %v897, -inf
    %906 = vmax.xlane.f32.xlu0 %v905
    %v907 = vpop.xlane.xlu0 %906
    %v908 = vsub.f32 %v892, %v903
    %v909 = vsub.f32 %v897, %v907
    %v910 = vmul.f32 %v908, 1.442695
    %v911 = vpow.pop %v910
    %v912 = vmul.f32 %v909, 1.442695
    %v913 = vpow.pop %v912
    %v914 = vsel %vm900, %v911, 0.0
    %915 = vadd.xlane.f32.xlu0 %v914
    %v916 = vpop.xlane.xlu0 %915
    %v917 = vsel %vm904, %v913, 0.0
    %918 = vadd.xlane.f32.xlu0 %v917
    %v919 = vpop.xlane.xlu0 %918
    %v920 = vrcp.pop %v916
    %v921 = vrcp.pop %v919
    %v922 = vmul.f32 %v911, %v920
    %v923 = vmul.f32 %v913, %v921
    %924 = vrot.lane.b32.xlu0 %v804, 64
    %v925 = vpop.permute.xlu0 %924
    %926 = vrot.lane.b32.xlu0 %v805, 64
    %v927 = vpop.permute.xlu0 %926
    %v930 = vsel %vm900, %v922, 0
    %v933 = vsel %vm900, %v923, 0
    %vm935 = vcmask 1040384
    %v936 = vsel %vm935, %v927, 0
    %938 = vmatprep.subr.mxu0 0.0
    %939 = vmatpush1.msra.mxu0 %v925
    %940 = vmatprep.subr.mxu0 0.0
    %941 = vmatpush1.msra.mxu0 %v936
    %942 = vmatprep.subr.mxu0 0.0
    %943 = vmatpush1.msra.mxu0 0.0
    %944 = vmatprep.subr.mxu0 0.0
    %945 = vmatpush1.msra.mxu0 0.0
    %946 = vmatprep.subr.mxu0 0.0
    %947 = vmatpush1.msra.mxu0 0.0
    %948 = vmatprep.subr.mxu0 0.0
    %949 = vmatpush1.msra.mxu0 0.0
    %950 = vmatprep.subr.mxu0 0.0
    %951 = vmatpush1.msra.mxu0 0.0
    %952 = vmatprep.subr.mxu0 0.0
    %953 = vmatpush1.msra.mxu0 0.0
    %954 = vmatprep.subr.mxu0 0.0
    %955 = vmatpush1.msra.mxu0 0.0
    %956 = vmatprep.subr.mxu0 0.0
    %957 = vmatpush1.msra.mxu0 0.0
    %958 = vmatprep.subr.mxu0 0.0
    %959 = vmatpush1.msra.mxu0 0.0
    %960 = vmatprep.subr.mxu0 0.0
    %961 = vmatpush1.msra.mxu0 0.0
    %962 = vmatprep.subr.mxu0 0.0
    %963 = vmatpush1.msra.mxu0 0.0
    %964 = vmatprep.subr.mxu0 0.0
    %965 = vmatpush1.msra.mxu0 0.0
    %966 = vmatprep.subr.mxu0 0.0
    %967 = vmatpush1.msra.mxu0 0.0
    %968 = vmatprep.subr.mxu0 0.0
    %969 = vmatpush1.msra.mxu0 0.0
    %970 = vmatprep.subr.mxu0 0.0
    %971 = vmatpush1.msra.mxu0 0.0
    %972 = vmatprep.subr.mxu0 0.0
    %973 = vmatpush1.msra.mxu0 0.0
    %974 = vmatprep.subr.mxu0 0.0
    %975 = vmatpush1.msra.mxu0 0.0
    %976 = vmatprep.subr.mxu0 0.0
    %977 = vmatpush1.msra.mxu0 0.0
    %978 = vmatprep.subr.mxu0 0.0
    %979 = vmatpush1.msra.mxu0 0.0
    %980 = vmatprep.subr.mxu0 0.0
    %981 = vmatpush1.msra.mxu0 0.0
    %982 = vmatprep.subr.mxu0 0.0
    %983 = vmatpush1.msra.mxu0 0.0
    %984 = vmatprep.subr.mxu0 0.0
    %985 = vmatpush1.msra.mxu0 0.0
    %986 = vmatprep.subr.mxu0 0.0
    %987 = vmatpush1.msra.mxu0 0.0
    %988 = vmatprep.subr.mxu0 0.0
    %989 = vmatpush1.msra.mxu0 0.0
    %990 = vmatprep.subr.mxu0 0.0
    %991 = vmatpush1.msra.mxu0 0.0
    %992 = vmatprep.subr.mxu0 0.0
    %993 = vmatpush1.msra.mxu0 0.0
    %994 = vmatprep.subr.mxu0 0.0
    %995 = vmatpush1.msra.mxu0 0.0
    %996 = vmatprep.subr.mxu0 0.0
    %997 = vmatpush1.msra.mxu0 0.0
    %998 = vmatprep.subr.mxu0 0.0
    %999 = vmatpush1.msra.mxu0 0.0
    %1000 = vmatprep.subr.mxu0 0.0
    %1001 = vmatpush1.msra.mxu0 0.0
    %1002 = vmatprep.mubr.f32.mxu0 0.0
    %1003 = vmatmul.mubr.f32.gmra.mrb[0].mxu0 %v930
    %v1004 = vpop.f32.mrb[0].mxu0
    %v1005 = vadd.f32 0.0, %v1004
    %v1006 = vpop.f32.mrb[0].mxu0
    %1007 = vmatprep.mubr.f32.mxu0 0.0
    %1008 = vmatmul.mubr.f32.gmra.mrb[0].mxu0 %v933
    %v1009 = vpop.f32.mrb[0].mxu0
    %v1010 = vadd.f32 0.0, %v1009
    %v1011 = vpop.f32.mrb[0].mxu0
    %1012 = vdwg.mxu0
    %1013 = vst.msk [vmem:[#allocation4] sm:$0xff] %vm814, %v1005
    %vm1014 = vcmask 122880
    %1015 = vst.msk [vmem:[#allocation4 + $0x8] sm:$0x1] %vm1014, %v1010
    %v1016 = vld [vmem:[#allocation3] sm:$0xff]
    %v1017 = vld [vmem:[#allocation3 + $0x8] sm:$0x1]
    %v1018 = vmul.f32 %v1016, 0.25
    %v1019 = vmul.f32 %v1017, 0.25
    %1022 = vrot.lane.b32.xlu0 %v1018, 112
    %v1023 = vpop.permute.xlu0 %1022
    %1024 = vrot.lane.b32.xlu0 %v1019, 112
    %v1025 = vpop.permute.xlu0 %1024
    %1028 = vrot.lane.b32.xlu0 %v1016, 80
    %v1029 = vpop.permute.xlu0 %1028
    %1030 = vrot.lane.b32.xlu0 %v1017, 80
    %v1031 = vpop.permute.xlu0 %1030
    %v1032 = vsel %vm814, %v1023, 0
    %v1034 = vsel %vm814, %v1025, 0
    %v1036 = vsel %vm814, %v1029, 0
    %v1038 = vsel %vm814, %v1031, 0
    %1040 = vmatprep.subr.mxu0 0.0
    %1041 = vmatpush1.xpose.msra.mxu0 %v1036
    %1042 = vmatprep.subr.mxu0 0.0
    %1043 = vmatpush1.xpose.msra.mxu0 %v1038
    %1044 = vmatprep.subr.mxu0 0.0
    %1045 = vmatpush1.xpose.msra.mxu0 0.0
    %1046 = vmatprep.subr.mxu0 0.0
    %1047 = vmatpush1.xpose.msra.mxu0 0.0
    %1048 = vmatprep.subr.mxu0 0.0
    %1049 = vmatpush1.xpose.msra.mxu0 0.0
    %1050 = vmatprep.subr.mxu0 0.0
    %1051 = vmatpush1.xpose.msra.mxu0 0.0
    %1052 = vmatprep.subr.mxu0 0.0
    %1053 = vmatpush1.xpose.msra.mxu0 0.0
    %1054 = vmatprep.subr.mxu0 0.0
    %1055 = vmatpush1.xpose.msra.mxu0 0.0
    %1056 = vmatprep.subr.mxu0 0.0
    %1057 = vmatpush1.xpose.msra.mxu0 0.0
    %1058 = vmatprep.subr.mxu0 0.0
    %1059 = vmatpush1.xpose.msra.mxu0 0.0
    %1060 = vmatprep.subr.mxu0 0.0
    %1061 = vmatpush1.xpose.msra.mxu0 0.0
    %1062 = vmatprep.subr.mxu0 0.0
    %1063 = vmatpush1.xpose.msra.mxu0 0.0
    %1064 = vmatprep.subr.mxu0 0.0
    %1065 = vmatpush1.xpose.msra.mxu0 0.0
    %1066 = vmatprep.subr.mxu0 0.0
    %1067 = vmatpush1.xpose.msra.mxu0 0.0
    %1068 = vmatprep.subr.mxu0 0.0
    %1069 = vmatpush1.xpose.msra.mxu0 0.0
    %1070 = vmatprep.subr.mxu0 0.0
    %1071 = vmatpush1.xpose.msra.mxu0 0.0
    %1072 = vmatprep.subr.mxu0 0.0
    %1073 = vmatpush1.xpose.msra.mxu0 0.0
    %1074 = vmatprep.subr.mxu0 0.0
    %1075 = vmatpush1.xpose.msra.mxu0 0.0
    %1076 = vmatprep.subr.mxu0 0.0
    %1077 = vmatpush1.xpose.msra.mxu0 0.0
    %1078 = vmatprep.subr.mxu0 0.0
    %1079 = vmatpush1.xpose.msra.mxu0 0.0
    %1080 = vmatprep.subr.mxu0 0.0
    %1081 = vmatpush1.xpose.msra.mxu0 0.0
    %1082 = vmatprep.subr.mxu0 0.0
    %1083 = vmatpush1.xpose.msra.mxu0 0.0
    %1084 = vmatprep.subr.mxu0 0.0
    %1085 = vmatpush1.xpose.msra.mxu0 0.0
    %1086 = vmatprep.subr.mxu0 0.0
    %1087 = vmatpush1.xpose.msra.mxu0 0.0
    %1088 = vmatprep.subr.mxu0 0.0
    %1089 = vmatpush1.xpose.msra.mxu0 0.0
    %1090 = vmatprep.subr.mxu0 0.0
    %1091 = vmatpush1.xpose.msra.mxu0 0.0
    %1092 = vmatprep.subr.mxu0 0.0
    %1093 = vmatpush1.xpose.msra.mxu0 0.0
    %1094 = vmatprep.subr.mxu0 0.0
    %1095 = vmatpush1.xpose.msra.mxu0 0.0
    %1096 = vmatprep.subr.mxu0 0.0
    %1097 = vmatpush1.xpose.msra.mxu0 0.0
    %1098 = vmatprep.subr.mxu0 0.0
    %1099 = vmatpush1.xpose.msra.mxu0 0.0
    %1100 = vmatprep.subr.mxu0 0.0
    %1101 = vmatpush1.xpose.msra.mxu0 0.0
    %1102 = vmatprep.subr.mxu0 0.0
    %1103 = vmatpush1.xpose.msra.mxu0 0.0
    %1104 = vmatprep.mubr.f32.mxu0 0.0
    %1105 = vmatmul.mubr.f32.gmra.mrb[0].mxu0 %v1032
    %v1106 = vpop.f32.mrb[0].mxu0
    %v1107 = vadd.f32 0.0, %v1106
    %v1108 = vpop.f32.mrb[0].mxu0
    %1109 = vmatprep.mubr.f32.mxu0 0.0
    %1110 = vmatmul.mubr.f32.gmra.mrb[0].mxu0 %v1034
    %v1111 = vpop.f32.mrb[0].mxu0
    %v1112 = vadd.f32 0.0, %v1111
    %v1113 = vpop.f32.mrb[0].mxu0
    %1114 = vdwg.mxu0
    %v1115 = vsel %vm900, %v1107, -inf
    %1116 = vmax.xlane.f32.xlu0 %v1115
    %v1117 = vpop.xlane.xlu0 %1116
    %v1118 = vsel %vm904, %v1112, -inf
    %1119 = vmax.xlane.f32.xlu0 %v1118
    %v1120 = vpop.xlane.xlu0 %1119
    %v1121 = vsub.f32 %v1107, %v1117
    %v1122 = vsub.f32 %v1112, %v1120
    %v1123 = vmul.f32 %v1121, 1.442695
    %v1124 = vpow.pop %v1123
    %v1125 = vmul.f32 %v1122, 1.442695
    %v1126 = vpow.pop %v1125
    %v1127 = vsel %vm900, %v1124, 0.0
    %1128 = vadd.xlane.f32.xlu0 %v1127
    %v1129 = vpop.xlane.xlu0 %1128
    %v1130 = vsel %vm904, %v1126, 0.0
    %1131 = vadd.xlane.f32.xlu0 %v1130
    %v1132 = vpop.xlane.xlu0 %1131
    %v1133 = vrcp.pop %v1129
    %v1134 = vrcp.pop %v1132
    %v1135 = vmul.f32 %v1124, %v1133
    %v1136 = vmul.f32 %v1126, %v1134
    %1137 = vrot.lane.b32.xlu0 %v1016, 48
    %v1138 = vpop.permute.xlu0 %1137
    %1139 = vrot.lane.b32.xlu0 %v1017, 48
    %v1140 = vpop.permute.xlu0 %1139
    %v1143 = vsel %vm900, %v1135, 0
    %v1146 = vsel %vm900, %v1136, 0
    %v1148 = vsel %vm935, %v1140, 0
    %1150 = vmatprep.subr.mxu0 0.0
    %1151 = vmatpush1.msra.mxu0 %v1138
    %1152 = vmatprep.subr.mxu0 0.0
    %1153 = vmatpush1.msra.mxu0 %v1148
    %1154 = vmatprep.subr.mxu0 0.0
    %1155 = vmatpush1.msra.mxu0 0.0
    %1156 = vmatprep.subr.mxu0 0.0
    %1157 = vmatpush1.msra.mxu0 0.0
    %1158 = vmatprep.subr.mxu0 0.0
    %1159 = vmatpush1.msra.mxu0 0.0
    %1160 = vmatprep.subr.mxu0 0.0
    %1161 = vmatpush1.msra.mxu0 0.0
    %1162 = vmatprep.subr.mxu0 0.0
    %1163 = vmatpush1.msra.mxu0 0.0
    %1164 = vmatprep.subr.mxu0 0.0
    %1165 = vmatpush1.msra.mxu0 0.0
    %1166 = vmatprep.subr.mxu0 0.0
    %1167 = vmatpush1.msra.mxu0 0.0
    %1168 = vmatprep.subr.mxu0 0.0
    %1169 = vmatpush1.msra.mxu0 0.0
    %1170 = vmatprep.subr.mxu0 0.0
    %1171 = vmatpush1.msra.mxu0 0.0
    %1172 = vmatprep.subr.mxu0 0.0
    %1173 = vmatpush1.msra.mxu0 0.0
    %1174 = vmatprep.subr.mxu0 0.0
    %1175 = vmatpush1.msra.mxu0 0.0
    %1176 = vmatprep.subr.mxu0 0.0
    %1177 = vmatpush1.msra.mxu0 0.0
    %1178 = vmatprep.subr.mxu0 0.0
    %1179 = vmatpush1.msra.mxu0 0.0
    %1180 = vmatprep.subr.mxu0 0.0
    %1181 = vmatpush1.msra.mxu0 0.0
    %1182 = vmatprep.subr.mxu0 0.0
    %1183 = vmatpush1.msra.mxu0 0.0
    %1184 = vmatprep.subr.mxu0 0.0
    %1185 = vmatpush1.msra.mxu0 0.0
    %1186 = vmatprep.subr.mxu0 0.0
    %1187 = vmatpush1.msra.mxu0 0.0
    %1188 = vmatprep.subr.mxu0 0.0
    %1189 = vmatpush1.msra.mxu0 0.0
    %1190 = vmatprep.subr.mxu0 0.0
    %1191 = vmatpush1.msra.mxu0 0.0
    %1192 = vmatprep.subr.mxu0 0.0
    %1193 = vmatpush1.msra.mxu0 0.0
    %1194 = vmatprep.subr.mxu0 0.0
    %1195 = vmatpush1.msra.mxu0 0.0
    %1196 = vmatprep.subr.mxu0 0.0
    %1197 = vmatpush1.msra.mxu0 0.0
    %1198 = vmatprep.subr.mxu0 0.0
    %1199 = vmatpush1.msra.mxu0 0.0
    %1200 = vmatprep.subr.mxu0 0.0
    %1201 = vmatpush1.msra.mxu0 0.0
    %1202 = vmatprep.subr.mxu0 0.0
    %1203 = vmatpush1.msra.mxu0 0.0
    %1204 = vmatprep.subr.mxu0 0.0
    %1205 = vmatpush1.msra.mxu0 0.0
    %1206 = vmatprep.subr.mxu0 0.0
    %1207 = vmatpush1.msra.mxu0 0.0
    %1208 = vmatprep.subr.mxu0 0.0
    %1209 = vmatpush1.msra.mxu0 0.0
    %1210 = vmatprep.subr.mxu0 0.0
    %1211 = vmatpush1.msra.mxu0 0.0
    %1212 = vmatprep.subr.mxu0 0.0
    %1213 = vmatpush1.msra.mxu0 0.0
    %1214 = vmatprep.mubr.f32.mxu0 0.0
    %1215 = vmatmul.mubr.f32.gmra.mrb[0].mxu0 %v1143
    %v1216 = vpop.f32.mrb[0].mxu0
    %v1217 = vadd.f32 0.0, %v1216
    %v1218 = vpop.f32.mrb[0].mxu0
    %1219 = vmatprep.mubr.f32.mxu0 0.0
    %1220 = vmatmul.mubr.f32.gmra.mrb[0].mxu0 %v1146
    %v1221 = vpop.f32.mrb[0].mxu0
    %v1222 = vadd.f32 0.0, %v1221
    %v1223 = vpop.f32.mrb[0].mxu0
    %1224 = vdwg.mxu0
    %1227 = vrot.lane.b32.xlu0 %v1217, 16
    %v1228 = vpop.permute.xlu0 %1227
    %1229 = vrot.lane.b32.xlu0 %v1222, 16
    %v1230 = vpop.permute.xlu0 %1229
    %vm1233 = vcmask 261248
    %1234 = vst.msk [vmem:[#allocation4] sm:$0xff] %vm1233, %v1228
    %vm1235 = vcmask 254080
    %1236 = vst.msk [vmem:[#allocation4 + $0x8] sm:$0x1] %vm1235, %v1230
    %v1237 = vld [vmem:[#allocation3 + $0x9] sm:$0xff]
    %v1238 = vld [vmem:[#allocation3 + $0x11] sm:$0x1]
    %v1239 = vmul.f32 %v1237, 0.25
    %v1240 = vmul.f32 %v1238, 0.25
    %1243 = vrot.lane.b32.xlu0 %v1237, 96
    %v1244 = vpop.permute.xlu0 %1243
    %1245 = vrot.lane.b32.xlu0 %v1238, 96
    %v1246 = vpop.permute.xlu0 %1245
    %v1248 = vsel %vm814, %v1239, 0
    %v1251 = vsel %vm814, %v1240, 0
    %v1253 = vsel %vm814, %v1244, 0
    %v1255 = vsel %vm814, %v1246, 0
    %1257 = vmatprep.subr.mxu0 0.0
    %1258 = vmatpush1.xpose.msra.mxu0 %v1253
    %1259 = vmatprep.subr.mxu0 0.0
    %1260 = vmatpush1.xpose.msra.mxu0 %v1255
    %1261 = vmatprep.subr.mxu0 0.0
    %1262 = vmatpush1.xpose.msra.mxu0 0.0
    %1263 = vmatprep.subr.mxu0 0.0
    %1264 = vmatpush1.xpose.msra.mxu0 0.0
    %1265 = vmatprep.subr.mxu0 0.0
    %1266 = vmatpush1.xpose.msra.mxu0 0.0
    %1267 = vmatprep.subr.mxu0 0.0
    %1268 = vmatpush1.xpose.msra.mxu0 0.0
    %1269 = vmatprep.subr.mxu0 0.0
    %1270 = vmatpush1.xpose.msra.mxu0 0.0
    %1271 = vmatprep.subr.mxu0 0.0
    %1272 = vmatpush1.xpose.msra.mxu0 0.0
    %1273 = vmatprep.subr.mxu0 0.0
    %1274 = vmatpush1.xpose.msra.mxu0 0.0
    %1275 = vmatprep.subr.mxu0 0.0
    %1276 = vmatpush1.xpose.msra.mxu0 0.0
    %1277 = vmatprep.subr.mxu0 0.0
    %1278 = vmatpush1.xpose.msra.mxu0 0.0
    %1279 = vmatprep.subr.mxu0 0.0
    %1280 = vmatpush1.xpose.msra.mxu0 0.0
    %1281 = vmatprep.subr.mxu0 0.0
    %1282 = vmatpush1.xpose.msra.mxu0 0.0
    %1283 = vmatprep.subr.mxu0 0.0
    %1284 = vmatpush1.xpose.msra.mxu0 0.0
    %1285 = vmatprep.subr.mxu0 0.0
    %1286 = vmatpush1.xpose.msra.mxu0 0.0
    %1287 = vmatprep.subr.mxu0 0.0
    %1288 = vmatpush1.xpose.msra.mxu0 0.0
    %1289 = vmatprep.subr.mxu0 0.0
    %1290 = vmatpush1.xpose.msra.mxu0 0.0
    %1291 = vmatprep.subr.mxu0 0.0
    %1292 = vmatpush1.xpose.msra.mxu0 0.0
    %1293 = vmatprep.subr.mxu0 0.0
    %1294 = vmatpush1.xpose.msra.mxu0 0.0
    %1295 = vmatprep.subr.mxu0 0.0
    %1296 = vmatpush1.xpose.msra.mxu0 0.0
    %1297 = vmatprep.subr.mxu0 0.0
    %1298 = vmatpush1.xpose.msra.mxu0 0.0
    %1299 = vmatprep.subr.mxu0 0.0
    %1300 = vmatpush1.xpose.msra.mxu0 0.0
    %1301 = vmatprep.subr.mxu0 0.0
    %1302 = vmatpush1.xpose.msra.mxu0 0.0
    %1303 = vmatprep.subr.mxu0 0.0
    %1304 = vmatpush1.xpose.msra.mxu0 0.0
    %1305 = vmatprep.subr.mxu0 0.0
    %1306 = vmatpush1.xpose.msra.mxu0 0.0
    %1307 = vmatprep.subr.mxu0 0.0
    %1308 = vmatpush1.xpose.msra.mxu0 0.0
    %1309 = vmatprep.subr.mxu0 0.0
    %1310 = vmatpush1.xpose.msra.mxu0 0.0
    %1311 = vmatprep.subr.mxu0 0.0
    %1312 = vmatpush1.xpose.msra.mxu0 0.0
    %1313 = vmatprep.subr.mxu0 0.0
    %1314 = vmatpush1.xpose.msra.mxu0 0.0
    %1315 = vmatprep.subr.mxu0 0.0
    %1316 = vmatpush1.xpose.msra.mxu0 0.0
    %1317 = vmatprep.subr.mxu0 0.0
    %1318 = vmatpush1.xpose.msra.mxu0 0.0
    %1319 = vmatprep.subr.mxu0 0.0
    %1320 = vmatpush1.xpose.msra.mxu0 0.0
    %1321 = vmatprep.mubr.f32.mxu0 0.0
    %1322 = vmatmul.mubr.f32.gmra.mrb[0].mxu0 %v1248
    %v1323 = vpop.f32.mrb[0].mxu0
    %v1324 = vadd.f32 0.0, %v1323
    %v1325 = vpop.f32.mrb[0].mxu0
    %1326 = vmatprep.mubr.f32.mxu0 0.0
    %1327 = vmatmul.mubr.f32.gmra.mrb[0].mxu0 %v1251
    %v1328 = vpop.f32.mrb[0].mxu0
    %v1329 = vadd.f32 0.0, %v1328
    %v1330 = vpop.f32.mrb[0].mxu0
    %1331 = vdwg.mxu0
    %v1332 = vsel %vm900, %v1324, -inf
    %1333 = vmax.xlane.f32.xlu0 %v1332
    %v1334 = vpop.xlane.xlu0 %1333
    %v1335 = vsel %vm904, %v1329, -inf
    %1336 = vmax.xlane.f32.xlu0 %v1335
    %v1337 = vpop.xlane.xlu0 %1336
    %v1338 = vsub.f32 %v1324, %v1334
    %v1339 = vsub.f32 %v1329, %v1337
    %v1340 = vmul.f32 %v1338, 1.442695
    %v1341 = vpow.pop %v1340
    %v1342 = vmul.f32 %v1339, 1.442695
    %v1343 = vpow.pop %v1342
    %v1344 = vsel %vm900, %v1341, 0.0
    %1345 = vadd.xlane.f32.xlu0 %v1344
    %v1346 = vpop.xlane.xlu0 %1345
    %v1347 = vsel %vm904, %v1343, 0.0
    %1348 = vadd.xlane.f32.xlu0 %v1347
    %v1349 = vpop.xlane.xlu0 %1348
    %v1350 = vrcp.pop %v1346
    %v1351 = vrcp.pop %v1349
    %v1352 = vmul.f32 %v1341, %v1350
    %v1353 = vmul.f32 %v1343, %v1351
    %1354 = vrot.lane.b32.xlu0 %v1237, 64
    %v1355 = vpop.permute.xlu0 %1354
    %1356 = vrot.lane.b32.xlu0 %v1238, 64
    %v1357 = vpop.permute.xlu0 %1356
    %v1360 = vsel %vm900, %v1352, 0
    %v1363 = vsel %vm900, %v1353, 0
    %v1365 = vsel %vm935, %v1357, 0
    %1367 = vmatprep.subr.mxu0 0.0
    %1368 = vmatpush1.msra.mxu0 %v1355
    %1369 = vmatprep.subr.mxu0 0.0
    %1370 = vmatpush1.msra.mxu0 %v1365
    %1371 = vmatprep.subr.mxu0 0.0
    %1372 = vmatpush1.msra.mxu0 0.0
    %1373 = vmatprep.subr.mxu0 0.0
    %1374 = vmatpush1.msra.mxu0 0.0
    %1375 = vmatprep.subr.mxu0 0.0
    %1376 = vmatpush1.msra.mxu0 0.0
    %1377 = vmatprep.subr.mxu0 0.0
    %1378 = vmatpush1.msra.mxu0 0.0
    %1379 = vmatprep.subr.mxu0 0.0
    %1380 = vmatpush1.msra.mxu0 0.0
    %1381 = vmatprep.subr.mxu0 0.0
    %1382 = vmatpush1.msra.mxu0 0.0
    %1383 = vmatprep.subr.mxu0 0.0
    %1384 = vmatpush1.msra.mxu0 0.0
    %1385 = vmatprep.subr.mxu0 0.0
    %1386 = vmatpush1.msra.mxu0 0.0
    %1387 = vmatprep.subr.mxu0 0.0
    %1388 = vmatpush1.msra.mxu0 0.0
    %1389 = vmatprep.subr.mxu0 0.0
    %1390 = vmatpush1.msra.mxu0 0.0
    %1391 = vmatprep.subr.mxu0 0.0
    %1392 = vmatpush1.msra.mxu0 0.0
    %1393 = vmatprep.subr.mxu0 0.0
    %1394 = vmatpush1.msra.mxu0 0.0
    %1395 = vmatprep.subr.mxu0 0.0
    %1396 = vmatpush1.msra.mxu0 0.0
    %1397 = vmatprep.subr.mxu0 0.0
    %1398 = vmatpush1.msra.mxu0 0.0
    %1399 = vmatprep.subr.mxu0 0.0
    %1400 = vmatpush1.msra.mxu0 0.0
    %1401 = vmatprep.subr.mxu0 0.0
    %1402 = vmatpush1.msra.mxu0 0.0
    %1403 = vmatprep.subr.mxu0 0.0
    %1404 = vmatpush1.msra.mxu0 0.0
    %1405 = vmatprep.subr.mxu0 0.0
    %1406 = vmatpush1.msra.mxu0 0.0
    %1407 = vmatprep.subr.mxu0 0.0
    %1408 = vmatpush1.msra.mxu0 0.0
    %1409 = vmatprep.subr.mxu0 0.0
    %1410 = vmatpush1.msra.mxu0 0.0
    %1411 = vmatprep.subr.mxu0 0.0
    %1412 = vmatpush1.msra.mxu0 0.0
    %1413 = vmatprep.subr.mxu0 0.0
    %1414 = vmatpush1.msra.mxu0 0.0
    %1415 = vmatprep.subr.mxu0 0.0
    %1416 = vmatpush1.msra.mxu0 0.0
    %1417 = vmatprep.subr.mxu0 0.0
    %1418 = vmatpush1.msra.mxu0 0.0
    %1419 = vmatprep.subr.mxu0 0.0
    %1420 = vmatpush1.msra.mxu0 0.0
    %1421 = vmatprep.subr.mxu0 0.0
    %1422 = vmatpush1.msra.mxu0 0.0
    %1423 = vmatprep.subr.mxu0 0.0
    %1424 = vmatpush1.msra.mxu0 0.0
    %1425 = vmatprep.subr.mxu0 0.0
    %1426 = vmatpush1.msra.mxu0 0.0
    %1427 = vmatprep.subr.mxu0 0.0
    %1428 = vmatpush1.msra.mxu0 0.0
    %1429 = vmatprep.subr.mxu0 0.0
    %1430 = vmatpush1.msra.mxu0 0.0
    %1431 = vmatprep.mubr.f32.mxu0 0.0
    %1432 = vmatmul.mubr.f32.gmra.mrb[0].mxu0 %v1360
    %v1433 = vpop.f32.mrb[0].mxu0
    %v1434 = vadd.f32 0.0, %v1433
    %v1435 = vpop.f32.mrb[0].mxu0
    %1436 = vmatprep.mubr.f32.mxu0 0.0
    %1437 = vmatmul.mubr.f32.gmra.mrb[0].mxu0 %v1363
    %v1438 = vpop.f32.mrb[0].mxu0
    %v1439 = vadd.f32 0.0, %v1438
    %v1440 = vpop.f32.mrb[0].mxu0
    %1441 = vdwg.mxu0
    %1442 = vst.msk [vmem:[#allocation4 + $0x9] sm:$0xff] %vm814, %v1434
    %1443 = vst.msk [vmem:[#allocation4 + $0x11] sm:$0x1] %vm1014, %v1439
    %v1444 = vld [vmem:[#allocation3 + $0x9] sm:$0xff]
    %v1445 = vld [vmem:[#allocation3 + $0x11] sm:$0x1]
    %v1446 = vmul.f32 %v1444, 0.25
    %v1447 = vmul.f32 %v1445, 0.25
    %1450 = vrot.lane.b32.xlu0 %v1446, 112
    %v1451 = vpop.permute.xlu0 %1450
    %1452 = vrot.lane.b32.xlu0 %v1447, 112
    %v1453 = vpop.permute.xlu0 %1452
    %1456 = vrot.lane.b32.xlu0 %v1444, 80
    %v1457 = vpop.permute.xlu0 %1456
    %1458 = vrot.lane.b32.xlu0 %v1445, 80
    %v1459 = vpop.permute.xlu0 %1458
    %v1460 = vsel %vm814, %v1451, 0
    %v1462 = vsel %vm814, %v1453, 0
    %v1464 = vsel %vm814, %v1457, 0
    %v1466 = vsel %vm814, %v1459, 0
    %1468 = vmatprep.subr.mxu0 0.0
    %1469 = vmatpush1.xpose.msra.mxu0 %v1464
    %1470 = vmatprep.subr.mxu0 0.0
    %1471 = vmatpush1.xpose.msra.mxu0 %v1466
    %1472 = vmatprep.subr.mxu0 0.0
    %1473 = vmatpush1.xpose.msra.mxu0 0.0
    %1474 = vmatprep.subr.mxu0 0.0
    %1475 = vmatpush1.xpose.msra.mxu0 0.0
    %1476 = vmatprep.subr.mxu0 0.0
    %1477 = vmatpush1.xpose.msra.mxu0 0.0
    %1478 = vmatprep.subr.mxu0 0.0
    %1479 = vmatpush1.xpose.msra.mxu0 0.0
    %1480 = vmatprep.subr.mxu0 0.0
    %1481 = vmatpush1.xpose.msra.mxu0 0.0
    %1482 = vmatprep.subr.mxu0 0.0
    %1483 = vmatpush1.xpose.msra.mxu0 0.0
    %1484 = vmatprep.subr.mxu0 0.0
    %1485 = vmatpush1.xpose.msra.mxu0 0.0
    %1486 = vmatprep.subr.mxu0 0.0
    %1487 = vmatpush1.xpose.msra.mxu0 0.0
    %1488 = vmatprep.subr.mxu0 0.0
    %1489 = vmatpush1.xpose.msra.mxu0 0.0
    %1490 = vmatprep.subr.mxu0 0.0
    %1491 = vmatpush1.xpose.msra.mxu0 0.0
    %1492 = vmatprep.subr.mxu0 0.0
    %1493 = vmatpush1.xpose.msra.mxu0 0.0
    %1494 = vmatprep.subr.mxu0 0.0
    %1495 = vmatpush1.xpose.msra.mxu0 0.0
    %1496 = vmatprep.subr.mxu0 0.0
    %1497 = vmatpush1.xpose.msra.mxu0 0.0
    %1498 = vmatprep.subr.mxu0 0.0
    %1499 = vmatpush1.xpose.msra.mxu0 0.0
    %1500 = vmatprep.subr.mxu0 0.0
    %1501 = vmatpush1.xpose.msra.mxu0 0.0
    %1502 = vmatprep.subr.mxu0 0.0
    %1503 = vmatpush1.xpose.msra.mxu0 0.0
    %1504 = vmatprep.subr.mxu0 0.0
    %1505 = vmatpush1.xpose.msra.mxu0 0.0
    %1506 = vmatprep.subr.mxu0 0.0
    %1507 = vmatpush1.xpose.msra.mxu0 0.0
    %1508 = vmatprep.subr.mxu0 0.0
    %1509 = vmatpush1.xpose.msra.mxu0 0.0
    %1510 = vmatprep.subr.mxu0 0.0
    %1511 = vmatpush1.xpose.msra.mxu0 0.0
    %1512 = vmatprep.subr.mxu0 0.0
    %1513 = vmatpush1.xpose.msra.mxu0 0.0
    %1514 = vmatprep.subr.mxu0 0.0
    %1515 = vmatpush1.xpose.msra.mxu0 0.0
    %1516 = vmatprep.subr.mxu0 0.0
    %1517 = vmatpush1.xpose.msra.mxu0 0.0
    %1518 = vmatprep.subr.mxu0 0.0
    %1519 = vmatpush1.xpose.msra.mxu0 0.0
    %1520 = vmatprep.subr.mxu0 0.0
    %1521 = vmatpush1.xpose.msra.mxu0 0.0
    %1522 = vmatprep.subr.mxu0 0.0
    %1523 = vmatpush1.xpose.msra.mxu0 0.0
    %1524 = vmatprep.subr.mxu0 0.0
    %1525 = vmatpush1.xpose.msra.mxu0 0.0
    %1526 = vmatprep.subr.mxu0 0.0
    %1527 = vmatpush1.xpose.msra.mxu0 0.0
    %1528 = vmatprep.subr.mxu0 0.0
    %1529 = vmatpush1.xpose.msra.mxu0 0.0
    %1530 = vmatprep.subr.mxu0 0.0
    %1531 = vmatpush1.xpose.msra.mxu0 0.0
    %1532 = vmatprep.mubr.f32.mxu0 0.0
    %1533 = vmatmul.mubr.f32.gmra.mrb[0].mxu0 %v1460
    %v1534 = vpop.f32.mrb[0].mxu0
    %v1535 = vadd.f32 0.0, %v1534
    %v1536 = vpop.f32.mrb[0].mxu0
    %1537 = vmatprep.mubr.f32.mxu0 0.0
    %1538 = vmatmul.mubr.f32.gmra.mrb[0].mxu0 %v1462
    %v1539 = vpop.f32.mrb[0].mxu0
    %v1540 = vadd.f32 0.0, %v1539
    %v1541 = vpop.f32.mrb[0].mxu0
    %1542 = vdwg.mxu0
    %v1543 = vsel %vm900, %v1535, -inf
    %1544 = vmax.xlane.f32.xlu0 %v1543
    %v1545 = vpop.xlane.xlu0 %1544
    %v1546 = vsel %vm904, %v1540, -inf
    %1547 = vmax.xlane.f32.xlu0 %v1546
    %v1548 = vpop.xlane.xlu0 %1547
    %v1549 = vsub.f32 %v1535, %v1545
    %v1550 = vsub.f32 %v1540, %v1548
    %v1551 = vmul.f32 %v1549, 1.442695
    %v1552 = vpow.pop %v1551
    %v1553 = vmul.f32 %v1550, 1.442695
    %v1554 = vpow.pop %v1553
    %v1555 = vsel %vm900, %v1552, 0.0
    %1556 = vadd.xlane.f32.xlu0 %v1555
    %v1557 = vpop.xlane.xlu0 %1556
    %v1558 = vsel %vm904, %v1554, 0.0
    %1559 = vadd.xlane.f32.xlu0 %v1558
    %v1560 = vpop.xlane.xlu0 %1559
    %v1561 = vrcp.pop %v1557
    %v1562 = vrcp.pop %v1560
    %v1563 = vmul.f32 %v1552, %v1561
    %v1564 = vmul.f32 %v1554, %v1562
    %1565 = vrot.lane.b32.xlu0 %v1444, 48
    %v1566 = vpop.permute.xlu0 %1565
    %1567 = vrot.lane.b32.xlu0 %v1445, 48
    %v1568 = vpop.permute.xlu0 %1567
    %v1571 = vsel %vm900, %v1563, 0
    %v1574 = vsel %vm900, %v1564, 0
    %v1576 = vsel %vm935, %v1568, 0
    %1578 = vmatprep.subr.mxu0 0.0
    %1579 = vmatpush1.msra.mxu0 %v1566
    %1580 = vmatprep.subr.mxu0 0.0
    %1581 = vmatpush1.msra.mxu0 %v1576
    %1582 = vmatprep.subr.mxu0 0.0
    %1583 = vmatpush1.msra.mxu0 0.0
    %1584 = vmatprep.subr.mxu0 0.0
    %1585 = vmatpush1.msra.mxu0 0.0
    %1586 = vmatprep.subr.mxu0 0.0
    %1587 = vmatpush1.msra.mxu0 0.0
    %1588 = vmatprep.subr.mxu0 0.0
    %1589 = vmatpush1.msra.mxu0 0.0
    %1590 = vmatprep.subr.mxu0 0.0
    %1591 = vmatpush1.msra.mxu0 0.0
    %1592 = vmatprep.subr.mxu0 0.0
    %1593 = vmatpush1.msra.mxu0 0.0
    %1594 = vmatprep.subr.mxu0 0.0
    %1595 = vmatpush1.msra.mxu0 0.0
    %1596 = vmatprep.subr.mxu0 0.0
    %1597 = vmatpush1.msra.mxu0 0.0
    %1598 = vmatprep.subr.mxu0 0.0
    %1599 = vmatpush1.msra.mxu0 0.0
    %1600 = vmatprep.subr.mxu0 0.0
    %1601 = vmatpush1.msra.mxu0 0.0
    %1602 = vmatprep.subr.mxu0 0.0
    %1603 = vmatpush1.msra.mxu0 0.0
    %1604 = vmatprep.subr.mxu0 0.0
    %1605 = vmatpush1.msra.mxu0 0.0
    %1606 = vmatprep.subr.mxu0 0.0
    %1607 = vmatpush1.msra.mxu0 0.0
    %1608 = vmatprep.subr.mxu0 0.0
    %1609 = vmatpush1.msra.mxu0 0.0
    %1610 = vmatprep.subr.mxu0 0.0
    %1611 = vmatpush1.msra.mxu0 0.0
    %1612 = vmatprep.subr.mxu0 0.0
    %1613 = vmatpush1.msra.mxu0 0.0
    %1614 = vmatprep.subr.mxu0 0.0
    %1615 = vmatpush1.msra.mxu0 0.0
    %1616 = vmatprep.subr.mxu0 0.0
    %1617 = vmatpush1.msra.mxu0 0.0
    %1618 = vmatprep.subr.mxu0 0.0
    %1619 = vmatpush1.msra.mxu0 0.0
    %1620 = vmatprep.subr.mxu0 0.0
    %1621 = vmatpush1.msra.mxu0 0.0
    %1622 = vmatprep.subr.mxu0 0.0
    %1623 = vmatpush1.msra.mxu0 0.0
    %1624 = vmatprep.subr.mxu0 0.0
    %1625 = vmatpush1.msra.mxu0 0.0
    %1626 = vmatprep.subr.mxu0 0.0
    %1627 = vmatpush1.msra.mxu0 0.0
    %1628 = vmatprep.subr.mxu0 0.0
    %1629 = vmatpush1.msra.mxu0 0.0
    %1630 = vmatprep.subr.mxu0 0.0
    %1631 = vmatpush1.msra.mxu0 0.0
    %1632 = vmatprep.subr.mxu0 0.0
    %1633 = vmatpush1.msra.mxu0 0.0
    %1634 = vmatprep.subr.mxu0 0.0
    %1635 = vmatpush1.msra.mxu0 0.0
    %1636 = vmatprep.subr.mxu0 0.0
    %1637 = vmatpush1.msra.mxu0 0.0
    %1638 = vmatprep.subr.mxu0 0.0
    %1639 = vmatpush1.msra.mxu0 0.0
    %1640 = vmatprep.subr.mxu0 0.0
    %1641 = vmatpush1.msra.mxu0 0.0
    %1642 = vmatprep.mubr.f32.mxu0 0.0
    %1643 = vmatmul.mubr.f32.gmra.mrb[0].mxu0 %v1571
    %v1644 = vpop.f32.mrb[0].mxu0
    %v1645 = vadd.f32 0.0, %v1644
    %v1646 = vpop.f32.mrb[0].mxu0
    %1647 = vmatprep.mubr.f32.mxu0 0.0
    %1648 = vmatmul.mubr.f32.gmra.mrb[0].mxu0 %v1574
    %v1649 = vpop.f32.mrb[0].mxu0
    %v1650 = vadd.f32 0.0, %v1649
    %v1651 = vpop.f32.mrb[0].mxu0
    %1652 = vdwg.mxu0
    %1655 = vrot.lane.b32.xlu0 %v1645, 16
    %v1656 = vpop.permute.xlu0 %1655
    %1657 = vrot.lane.b32.xlu0 %v1650, 16
    %v1658 = vpop.permute.xlu0 %1657
    %1661 = vst.msk [vmem:[#allocation4 + $0x9] sm:$0xff] %vm1233, %v1656
    %1662 = vst.msk [vmem:[#allocation4 + $0x11] sm:$0x1] %vm1235, %v1658
    %v1663 = vld [vmem:[#allocation4] sm:$0xff]
    %v1664 = vld [vmem:[#allocation4 + $0x8] sm:$0xff]
    %v1665 = vld [vmem:[#allocation4 + $0x10] sm:$0x3]
    %v1666 = vld [vmem:[%s10] sm:$0xff]
    %v1667 = vld [vmem:[%s10 + $0x8] sm:$0xff]
    %v1668 = vld [vmem:[%s10 + $0x10] sm:$0xff]
    %v1669 = vld [vmem:[%s10 + $0x18] sm:$0xff]
    %v1670 = vld [vmem:[%s11] sm:$0x1]
    %v1672 = vlaneseq
    %v1673 = vshrl.u32 %v1672, 7
    %v1674 = vsub.s32 0, %v1673
    %v1675 = vrot.slane %v1670, %v1674
    %v1678 = vsel %vm639, %v1663, 0
    %v1681 = vsel %vm639, %v1664, 0
    %v1684 = vsel %vm639, %v1665, 0
    %1686 = vmatprep.subr.mxu0 0.0
    %1687 = vmatpush1.msra.mxu0 %v1666
    %1688 = vmatprep.subr.mxu0 0.0
    %1689 = vmatpush1.msra.mxu0 %v1667
    %1690 = vmatprep.subr.mxu0 0.0
    %1691 = vmatpush1.msra.mxu0 %v1668
    %1692 = vmatprep.subr.mxu0 0.0
    %1693 = vmatpush1.msra.mxu0 %v1669
    %1694 = vmatprep.subr.mxu0 0.0
    %1695 = vmatpush1.msra.mxu0 0.0
    %1696 = vmatprep.subr.mxu0 0.0
    %1697 = vmatpush1.msra.mxu0 0.0
    %1698 = vmatprep.subr.mxu0 0.0
    %1699 = vmatpush1.msra.mxu0 0.0
    %1700 = vmatprep.subr.mxu0 0.0
    %1701 = vmatpush1.msra.mxu0 0.0
    %1702 = vmatprep.subr.mxu0 0.0
    %1703 = vmatpush1.msra.mxu0 0.0
    %1704 = vmatprep.subr.mxu0 0.0
    %1705 = vmatpush1.msra.mxu0 0.0
    %1706 = vmatprep.subr.mxu0 0.0
    %1707 = vmatpush1.msra.mxu0 0.0
    %1708 = vmatprep.subr.mxu0 0.0
    %1709 = vmatpush1.msra.mxu0 0.0
    %1710 = vmatprep.subr.mxu0 0.0
    %1711 = vmatpush1.msra.mxu0 0.0
    %1712 = vmatprep.subr.mxu0 0.0
    %1713 = vmatpush1.msra.mxu0 0.0
    %1714 = vmatprep.subr.mxu0 0.0
    %1715 = vmatpush1.msra.mxu0 0.0
    %1716 = vmatprep.subr.mxu0 0.0
    %1717 = vmatpush1.msra.mxu0 0.0
    %1718 = vmatprep.subr.mxu0 0.0
    %1719 = vmatpush1.msra.mxu0 0.0
    %1720 = vmatprep.subr.mxu0 0.0
    %1721 = vmatpush1.msra.mxu0 0.0
    %1722 = vmatprep.subr.mxu0 0.0
    %1723 = vmatpush1.msra.mxu0 0.0
    %1724 = vmatprep.subr.mxu0 0.0
    %1725 = vmatpush1.msra.mxu0 0.0
    %1726 = vmatprep.subr.mxu0 0.0
    %1727 = vmatpush1.msra.mxu0 0.0
    %1728 = vmatprep.subr.mxu0 0.0
    %1729 = vmatpush1.msra.mxu0 0.0
    %1730 = vmatprep.subr.mxu0 0.0
    %1731 = vmatpush1.msra.mxu0 0.0
    %1732 = vmatprep.subr.mxu0 0.0
    %1733 = vmatpush1.msra.mxu0 0.0
    %1734 = vmatprep.subr.mxu0 0.0
    %1735 = vmatpush1.msra.mxu0 0.0
    %1736 = vmatprep.subr.mxu0 0.0
    %1737 = vmatpush1.msra.mxu0 0.0
    %1738 = vmatprep.subr.mxu0 0.0
    %1739 = vmatpush1.msra.mxu0 0.0
    %1740 = vmatprep.subr.mxu0 0.0
    %1741 = vmatpush1.msra.mxu0 0.0
    %1742 = vmatprep.subr.mxu0 0.0
    %1743 = vmatpush1.msra.mxu0 0.0
    %1744 = vmatprep.subr.mxu0 0.0
    %1745 = vmatpush1.msra.mxu0 0.0
    %1746 = vmatprep.subr.mxu0 0.0
    %1747 = vmatpush1.msra.mxu0 0.0
    %1748 = vmatprep.subr.mxu0 0.0
    %1749 = vmatpush1.msra.mxu0 0.0
    %1750 = vmatprep.mubr.f32.mxu0 0.0
    %1751 = vmatmul.mubr.f32.gmra.mrb[0].mxu0 %v1678
    %v1752 = vpop.f32.mrb[0].mxu0
    %v1753 = vadd.f32 %v1675, %v1752
    %v1754 = vpop.f32.mrb[0].mxu0
    %1755 = vmatprep.mubr.f32.mxu0 0.0
    %1756 = vmatmul.mubr.f32.gmra.mrb[0].mxu0 %v1681
    %v1757 = vpop.f32.mrb[0].mxu0
    %v1758 = vadd.f32 %v1675, %v1757
    %v1759 = vpop.f32.mrb[0].mxu0
    %1760 = vmatprep.mubr.f32.mxu0 0.0
    %1761 = vmatmul.mubr.f32.gmra.mrb[0].mxu0 %v1684
    %v1762 = vpop.f32.mrb[0].mxu0
    %v1763 = vadd.f32 %v1675, %v1762
    %v1764 = vpop.f32.mrb[0].mxu0
    %1765 = vdwg.mxu0
    %v1766 = vld [vmem:[%s12] sm:$0x1]
    %v1768 = vlaneseq
    %v1769 = vshrl.u32 %v1768, 7
    %v1770 = vsub.s32 0, %v1769
    %v1771 = vrot.slane %v1766, %v1770
    %v1773 = vmul.f32 %v1753, %v1771
    %v1774 = vmul.f32 %v1758, %v1771
    %v1775 = vmul.f32 %v1763, %v1771
    %v1776 = vadd.f32 %v634, %v1773
    %v1777 = vadd.f32 %v635, %v1774
    %v1778 = vadd.f32 %v636, %v1775
    %v1779 = vld [vmem:[%s13] sm:$0x1]
    %v1780 = vld [vmem:[%s14] sm:$0x1]
    %v1781 = vsel %vm639, %v1776, 0.0
    %1782 = vadd.xlane.f32.xlu0 %v1781
    %v1783 = vpop.xlane.xlu0 %1782
    %v1784 = vsel %vm639, %v1777, 0.0
    %1785 = vadd.xlane.f32.xlu0 %v1784
    %v1786 = vpop.xlane.xlu0 %1785
    %v1787 = vsel %vm646, %v1778, 0.0
    %1788 = vadd.xlane.f32.xlu0 %v1787
    %v1789 = vpop.xlane.xlu0 %1788
    %v1790 = vmul.f32 %v1783, %v650
    %v1791 = vmul.f32 %v1786, %v650
    %v1792 = vmul.f32 %v1789, %v650
    %v1793 = vsub.f32 %v1776, %v1790
    %v1794 = vsub.f32 %v1777, %v1791
    %v1795 = vsub.f32 %v1778, %v1792
    %v1796 = vmul.f32 %v1793, %v1793
    %v1797 = vmul.f32 %v1794, %v1794
    %v1798 = vmul.f32 %v1795, %v1795
    %v1799 = vsel %vm639, %v1796, 0.0
    %1800 = vadd.xlane.f32.xlu0 %v1799
    %v1801 = vpop.xlane.xlu0 %1800
    %v1802 = vsel %vm639, %v1797, 0.0
    %1803 = vadd.xlane.f32.xlu0 %v1802
    %v1804 = vpop.xlane.xlu0 %1803
    %v1805 = vsel %vm646, %v1798, 0.0
    %1806 = vadd.xlane.f32.xlu0 %v1805
    %v1807 = vpop.xlane.xlu0 %1806
    %v1808 = vmul.f32 %v1801, %v650
    %v1809 = vmul.f32 %v1804, %v650
    %v1810 = vmul.f32 %v1807, %v650
    %v1811 = vadd.f32 %v1808, 1e-06
    %v1812 = vadd.f32 %v1809, 1e-06
    %v1813 = vadd.f32 %v1810, 1e-06
    %v1814 = vrsqrt.pop %v1811
    %v1815 = vrsqrt.pop %v1812
    %v1816 = vrsqrt.pop %v1813
    %v1817 = vmul.f32 %v1793, %v1814
    %v1818 = vmul.f32 %v1794, %v1815
    %v1819 = vmul.f32 %v1795, %v1816
    %v1821 = vlaneseq
    %v1822 = vshrl.u32 %v1821, 7
    %v1823 = vsub.s32 0, %v1822
    %v1824 = vrot.slane %v1779, %v1823
    %v1826 = vmul.f32 %v1817, %v1824
    %v1827 = vmul.f32 %v1818, %v1824
    %v1828 = vmul.f32 %v1819, %v1824
    %v1830 = vlaneseq
    %v1831 = vshrl.u32 %v1830, 7
    %v1832 = vsub.s32 0, %v1831
    %v1833 = vrot.slane %v1780, %v1832
    %v1835 = vadd.f32 %v1826, %v1833
    %v1836 = vadd.f32 %v1827, %v1833
    %v1837 = vadd.f32 %v1828, %v1833
    %v1838 = vld [vmem:[%s15] sm:$0xff]
    %v1839 = vld [vmem:[%s15 + $0x8] sm:$0xff]
    %v1840 = vld [vmem:[%s15 + $0x10] sm:$0xff]
    %v1841 = vld [vmem:[%s15 + $0x18] sm:$0xff]
    %v1842 = vld [vmem:[%s16] sm:$0x1]
    %v1844 = vlaneseq
    %v1845 = vshrl.u32 %v1844, 7
    %v1846 = vsub.s32 0, %v1845
    %v1847 = vrot.slane %v1842, %v1846
    %v1850 = vsel %vm639, %v1835, 0
    %v1853 = vsel %vm639, %v1836, 0
    %v1856 = vsel %vm639, %v1837, 0
    %1858 = vmatprep.subr.mxu0 0.0
    %1859 = vmatpush1.msra.mxu0 %v1838
    %1860 = vmatprep.subr.mxu0 0.0
    %1861 = vmatpush1.msra.mxu0 %v1839
    %1862 = vmatprep.subr.mxu0 0.0
    %1863 = vmatpush1.msra.mxu0 %v1840
    %1864 = vmatprep.subr.mxu0 0.0
    %1865 = vmatpush1.msra.mxu0 %v1841
    %1866 = vmatprep.subr.mxu0 0.0
    %1867 = vmatpush1.msra.mxu0 0.0
    %1868 = vmatprep.subr.mxu0 0.0
    %1869 = vmatpush1.msra.mxu0 0.0
    %1870 = vmatprep.subr.mxu0 0.0
    %1871 = vmatpush1.msra.mxu0 0.0
    %1872 = vmatprep.subr.mxu0 0.0
    %1873 = vmatpush1.msra.mxu0 0.0
    %1874 = vmatprep.subr.mxu0 0.0
    %1875 = vmatpush1.msra.mxu0 0.0
    %1876 = vmatprep.subr.mxu0 0.0
    %1877 = vmatpush1.msra.mxu0 0.0
    %1878 = vmatprep.subr.mxu0 0.0
    %1879 = vmatpush1.msra.mxu0 0.0
    %1880 = vmatprep.subr.mxu0 0.0
    %1881 = vmatpush1.msra.mxu0 0.0
    %1882 = vmatprep.subr.mxu0 0.0
    %1883 = vmatpush1.msra.mxu0 0.0
    %1884 = vmatprep.subr.mxu0 0.0
    %1885 = vmatpush1.msra.mxu0 0.0
    %1886 = vmatprep.subr.mxu0 0.0
    %1887 = vmatpush1.msra.mxu0 0.0
    %1888 = vmatprep.subr.mxu0 0.0
    %1889 = vmatpush1.msra.mxu0 0.0
    %1890 = vmatprep.subr.mxu0 0.0
    %1891 = vmatpush1.msra.mxu0 0.0
    %1892 = vmatprep.subr.mxu0 0.0
    %1893 = vmatpush1.msra.mxu0 0.0
    %1894 = vmatprep.subr.mxu0 0.0
    %1895 = vmatpush1.msra.mxu0 0.0
    %1896 = vmatprep.subr.mxu0 0.0
    %1897 = vmatpush1.msra.mxu0 0.0
    %1898 = vmatprep.subr.mxu0 0.0
    %1899 = vmatpush1.msra.mxu0 0.0
    %1900 = vmatprep.subr.mxu0 0.0
    %1901 = vmatpush1.msra.mxu0 0.0
    %1902 = vmatprep.subr.mxu0 0.0
    %1903 = vmatpush1.msra.mxu0 0.0
    %1904 = vmatprep.subr.mxu0 0.0
    %1905 = vmatpush1.msra.mxu0 0.0
    %1906 = vmatprep.subr.mxu0 0.0
    %1907 = vmatpush1.msra.mxu0 0.0
    %1908 = vmatprep.subr.mxu0 0.0
    %1909 = vmatpush1.msra.mxu0 0.0
    %1910 = vmatprep.subr.mxu0 0.0
    %1911 = vmatpush1.msra.mxu0 0.0
    %1912 = vmatprep.subr.mxu0 0.0
    %1913 = vmatpush1.msra.mxu0 0.0
    %1914 = vmatprep.subr.mxu0 0.0
    %1915 = vmatpush1.msra.mxu0 0.0
    %1916 = vmatprep.subr.mxu0 0.0
    %1917 = vmatpush1.msra.mxu0 0.0
    %1918 = vmatprep.subr.mxu0 0.0
    %1919 = vmatpush1.msra.mxu0 0.0
    %1920 = vmatprep.subr.mxu0 0.0
    %1921 = vmatpush1.msra.mxu0 0.0
    %1922 = vmatprep.mubr.f32.mxu0 0.0
    %1923 = vmatmul.mubr.f32.gmra.mrb[0].mxu0 %v1850
    %v1924 = vpop.f32.mrb[0].mxu0
    %v1925 = vadd.f32 %v1847, %v1924
    %v1926 = vpop.f32.mrb[0].mxu0
    %1927 = vmatprep.mubr.f32.mxu0 0.0
    %1928 = vmatmul.mubr.f32.gmra.mrb[0].mxu0 %v1853
    %v1929 = vpop.f32.mrb[0].mxu0
    %v1930 = vadd.f32 %v1847, %v1929
    %v1931 = vpop.f32.mrb[0].mxu0
    %1932 = vmatprep.mubr.f32.mxu0 0.0
    %1933 = vmatmul.mubr.f32.gmra.mrb[0].mxu0 %v1856
    %v1934 = vpop.f32.mrb[0].mxu0
    %v1935 = vadd.f32 %v1847, %v1934
    %v1936 = vpop.f32.mrb[0].mxu0
    %1937 = vdwg.mxu0
    %v1938 = vmul.f32 %v1925, 0.70710677
    %v1939 = vmul.f32 %v1930, 0.70710677
    %v1940 = vmul.f32 %v1935, 0.70710677
    %vm1941 = vcmp.ge.f32.partialorder %v1938, 0.0
    %vm1942 = vcmp.ge.f32.partialorder %v1939, 0.0
    %vm1943 = vcmp.ge.f32.partialorder %v1940, 0.0
    %v1944 = vsel %vm1941, 1.0, -1.0
    %v1945 = vsel %vm1942, 1.0, -1.0
    %v1946 = vsel %vm1943, 1.0, -1.0
    %v1947 = vand.u32 2147483647, %v1938
    %v1948 = vand.u32 2147483647, %v1939
    %v1949 = vand.u32 2147483647, %v1940
    %v1950 = vmul.f32 %v1947, 0.3275911
    %v1951 = vmul.f32 %v1948, 0.3275911
    %v1952 = vmul.f32 %v1949, 0.3275911
    %v1953 = vadd.f32 %v1950, 1.0
    %v1954 = vadd.f32 %v1951, 1.0
    %v1955 = vadd.f32 %v1952, 1.0
    %v1956 = vrcp.pop %v1953
    %v1957 = vmul.f32 1.0, %v1956
    %v1958 = vrcp.pop %v1954
    %v1959 = vmul.f32 1.0, %v1958
    %v1960 = vrcp.pop %v1955
    %v1961 = vmul.f32 1.0, %v1960
    %v1962 = vmul.f32 %v1957, 1.0614054
    %v1963 = vmul.f32 %v1959, 1.0614054
    %v1964 = vmul.f32 %v1961, 1.0614054
    %v1965 = vsub.f32 %v1962, 1.4531521
    %v1966 = vsub.f32 %v1963, 1.4531521
    %v1967 = vsub.f32 %v1964, 1.4531521
    %v1968 = vmul.f32 %v1965, %v1957
    %v1969 = vmul.f32 %v1966, %v1959
    %v1970 = vmul.f32 %v1967, %v1961
    %v1971 = vadd.f32 %v1968, 1.4214138
    %v1972 = vadd.f32 %v1969, 1.4214138
    %v1973 = vadd.f32 %v1970, 1.4214138
    %v1974 = vmul.f32 %v1971, %v1957
    %v1975 = vmul.f32 %v1972, %v1959
    %v1976 = vmul.f32 %v1973, %v1961
    %v1977 = vsub.f32 %v1974, 0.28449672
    %v1978 = vsub.f32 %v1975, 0.28449672
    %v1979 = vsub.f32 %v1976, 0.28449672
    %v1980 = vmul.f32 %v1977, %v1957
    %v1981 = vmul.f32 %v1978, %v1959
    %v1982 = vmul.f32 %v1979, %v1961
    %v1983 = vadd.f32 %v1980, 0.2548296
    %v1984 = vadd.f32 %v1981, 0.2548296
    %v1985 = vadd.f32 %v1982, 0.2548296
    %v1986 = vmul.f32 %v1983, %v1957
    %v1987 = vmul.f32 %v1984, %v1959
    %v1988 = vmul.f32 %v1985, %v1961
    %v1989 = vsub.f32 0.0, %v1947
    %v1990 = vsub.f32 0.0, %v1948
    %v1991 = vsub.f32 0.0, %v1949
    %v1992 = vmul.f32 %v1989, %v1947
    %v1993 = vmul.f32 %v1990, %v1948
    %v1994 = vmul.f32 %v1991, %v1949
    %v1995 = vmul.f32 %v1992, 1.442695
    %v1996 = vpow.pop %v1995
    %v1997 = vmul.f32 %v1993, 1.442695
    %v1998 = vpow.pop %v1997
    %v1999 = vmul.f32 %v1994, 1.442695
    %v2000 = vpow.pop %v1999
    %v2001 = vmul.f32 %v1986, %v1996
    %v2002 = vmul.f32 %v1987, %v1998
    %v2003 = vmul.f32 %v1988, %v2000
    %v2004 = vsub.f32 1.0, %v2001
    %v2005 = vsub.f32 1.0, %v2002
    %v2006 = vsub.f32 1.0, %v2003
    %v2007 = vmul.f32 %v1944, %v2004
    %v2008 = vmul.f32 %v1945, %v2005
    %v2009 = vmul.f32 %v1946, %v2006
    %v2010 = vmul.f32 %v1925, 0.5
    %v2011 = vmul.f32 %v1930, 0.5
    %v2012 = vmul.f32 %v1935, 0.5
    %v2013 = vadd.f32 %v2007, 1.0
    %v2014 = vadd.f32 %v2008, 1.0
    %v2015 = vadd.f32 %v2009, 1.0
    %v2016 = vmul.f32 %v2010, %v2013
    %v2017 = vmul.f32 %v2011, %v2014
    %v2018 = vmul.f32 %v2012, %v2015
    %v2019 = vld [vmem:[%s17] sm:$0xff]
    %v2020 = vld [vmem:[%s17 + $0x8] sm:$0xff]
    %v2021 = vld [vmem:[%s17 + $0x10] sm:$0xff]
    %v2022 = vld [vmem:[%s17 + $0x18] sm:$0xff]
    %v2023 = vld [vmem:[%s17 + $0x20] sm:$0xff]
    %v2024 = vld [vmem:[%s17 + $0x28] sm:$0xff]
    %v2025 = vld [vmem:[%s17 + $0x30] sm:$0xff]
    %v2026 = vld [vmem:[%s17 + $0x38] sm:$0xff]
    %v2027 = vld [vmem:[%s17 + $0x40] sm:$0xff]
    %v2028 = vld [vmem:[%s17 + $0x48] sm:$0xff]
    %v2029 = vld [vmem:[%s17 + $0x50] sm:$0xff]
    %v2030 = vld [vmem:[%s17 + $0x58] sm:$0xff]
    %v2031 = vld [vmem:[%s17 + $0x60] sm:$0xff]
    %v2032 = vld [vmem:[%s17 + $0x68] sm:$0xff]
    %v2033 = vld [vmem:[%s17 + $0x70] sm:$0xff]
    %v2034 = vld [vmem:[%s17 + $0x78] sm:$0xff]
    %v2035 = vld [vmem:[%s18] sm:$0x1]
    %v2037 = vlaneseq
    %v2038 = vshrl.u32 %v2037, 7
    %v2039 = vsub.s32 0, %v2038
    %v2040 = vrot.slane %v2035, %v2039
    %2042 = vmatprep.subr.mxu0 0.0
    %2043 = vmatpush1.msra.mxu0 %v2019
    %2044 = vmatprep.subr.mxu0 0.0
    %2045 = vmatpush1.msra.mxu0 %v2020
    %2046 = vmatprep.subr.mxu0 0.0
    %2047 = vmatpush1.msra.mxu0 %v2021
    %2048 = vmatprep.subr.mxu0 0.0
    %2049 = vmatpush1.msra.mxu0 %v2022
    %2050 = vmatprep.subr.mxu0 0.0
    %2051 = vmatpush1.msra.mxu0 %v2023
    %2052 = vmatprep.subr.mxu0 0.0
    %2053 = vmatpush1.msra.mxu0 %v2024
    %2054 = vmatprep.subr.mxu0 0.0
    %2055 = vmatpush1.msra.mxu0 %v2025
    %2056 = vmatprep.subr.mxu0 0.0
    %2057 = vmatpush1.msra.mxu0 %v2026
    %2058 = vmatprep.subr.mxu0 0.0
    %2059 = vmatpush1.msra.mxu0 %v2027
    %2060 = vmatprep.subr.mxu0 0.0
    %2061 = vmatpush1.msra.mxu0 %v2028
    %2062 = vmatprep.subr.mxu0 0.0
    %2063 = vmatpush1.msra.mxu0 %v2029
    %2064 = vmatprep.subr.mxu0 0.0
    %2065 = vmatpush1.msra.mxu0 %v2030
    %2066 = vmatprep.subr.mxu0 0.0
    %2067 = vmatpush1.msra.mxu0 %v2031
    %2068 = vmatprep.subr.mxu0 0.0
    %2069 = vmatpush1.msra.mxu0 %v2032
    %2070 = vmatprep.subr.mxu0 0.0
    %2071 = vmatpush1.msra.mxu0 %v2033
    %2072 = vmatprep.subr.mxu0 0.0
    %2073 = vmatpush1.msra.mxu0 %v2034
    %2074 = vmatprep.subr.mxu0 0.0
    %2075 = vmatpush1.msra.mxu0 0.0
    %2076 = vmatprep.subr.mxu0 0.0
    %2077 = vmatpush1.msra.mxu0 0.0
    %2078 = vmatprep.subr.mxu0 0.0
    %2079 = vmatpush1.msra.mxu0 0.0
    %2080 = vmatprep.subr.mxu0 0.0
    %2081 = vmatpush1.msra.mxu0 0.0
    %2082 = vmatprep.subr.mxu0 0.0
    %2083 = vmatpush1.msra.mxu0 0.0
    %2084 = vmatprep.subr.mxu0 0.0
    %2085 = vmatpush1.msra.mxu0 0.0
    %2086 = vmatprep.subr.mxu0 0.0
    %2087 = vmatpush1.msra.mxu0 0.0
    %2088 = vmatprep.subr.mxu0 0.0
    %2089 = vmatpush1.msra.mxu0 0.0
    %2090 = vmatprep.subr.mxu0 0.0
    %2091 = vmatpush1.msra.mxu0 0.0
    %2092 = vmatprep.subr.mxu0 0.0
    %2093 = vmatpush1.msra.mxu0 0.0
    %2094 = vmatprep.subr.mxu0 0.0
    %2095 = vmatpush1.msra.mxu0 0.0
    %2096 = vmatprep.subr.mxu0 0.0
    %2097 = vmatpush1.msra.mxu0 0.0
    %2098 = vmatprep.subr.mxu0 0.0
    %2099 = vmatpush1.msra.mxu0 0.0
    %2100 = vmatprep.subr.mxu0 0.0
    %2101 = vmatpush1.msra.mxu0 0.0
    %2102 = vmatprep.subr.mxu0 0.0
    %2103 = vmatpush1.msra.mxu0 0.0
    %2104 = vmatprep.subr.mxu0 0.0
    %2105 = vmatpush1.msra.mxu0 0.0
    %2106 = vmatprep.mubr.f32.mxu0 0.0
    %2107 = vmatmul.mubr.f32.gmra.mrb[0].mxu0 %v2016
    %v2108 = vpop.f32.mrb[0].mxu0
    %v2109 = vadd.f32 %v2040, %v2108
    %v2110 = vpop.f32.mrb[0].mxu0
    %2111 = vmatprep.mubr.f32.mxu0 0.0
    %2112 = vmatmul.mubr.f32.gmra.mrb[0].mxu0 %v2017
    %v2113 = vpop.f32.mrb[0].mxu0
    %v2114 = vadd.f32 %v2040, %v2113
    %v2115 = vpop.f32.mrb[0].mxu0
    %2116 = vmatprep.mubr.f32.mxu0 0.0
    %2117 = vmatmul.mubr.f32.gmra.mrb[0].mxu0 %v2018
    %v2118 = vpop.f32.mrb[0].mxu0
    %v2119 = vadd.f32 %v2040, %v2118
    %v2120 = vpop.f32.mrb[0].mxu0
    %2121 = vdwg.mxu0
    %v2122 = vld [vmem:[%s19] sm:$0x1]
    %v2124 = vlaneseq
    %v2125 = vshrl.u32 %v2124, 7
    %v2126 = vsub.s32 0, %v2125
    %v2127 = vrot.slane %v2122, %v2126
    %v2129 = vmul.f32 %v2109, %v2127
    %v2130 = vmul.f32 %v2114, %v2127
    %v2131 = vmul.f32 %v2119, %v2127
    %v2132 = vadd.f32 %v1776, %v2129
    %v2133 = vadd.f32 %v1777, %v2130
    %v2134 = vadd.f32 %v1778, %v2131
    %s2135 = scalar_lea.vmem %s6, 1
    %v2136 = vld [vmem:[%s2135] sm:$0x1]
    %s2137 = scalar_lea.vmem %s7, 1
    %v2138 = vld [vmem:[%s2137] sm:$0x1]
    %v2139 = vsel %vm639, %v2132, 0.0
    %2140 = vadd.xlane.f32.xlu0 %v2139
    %v2141 = vpop.xlane.xlu0 %2140
    %v2142 = vsel %vm639, %v2133, 0.0
    %2143 = vadd.xlane.f32.xlu0 %v2142
    %v2144 = vpop.xlane.xlu0 %2143
    %v2145 = vsel %vm646, %v2134, 0.0
    %2146 = vadd.xlane.f32.xlu0 %v2145
    %v2147 = vpop.xlane.xlu0 %2146
    %v2148 = vmul.f32 %v2141, %v650
    %v2149 = vmul.f32 %v2144, %v650
    %v2150 = vmul.f32 %v2147, %v650
    %v2151 = vsub.f32 %v2132, %v2148
    %v2152 = vsub.f32 %v2133, %v2149
    %v2153 = vsub.f32 %v2134, %v2150
    %v2154 = vmul.f32 %v2151, %v2151
    %v2155 = vmul.f32 %v2152, %v2152
    %v2156 = vmul.f32 %v2153, %v2153
    %v2157 = vsel %vm639, %v2154, 0.0
    %2158 = vadd.xlane.f32.xlu0 %v2157
    %v2159 = vpop.xlane.xlu0 %2158
    %v2160 = vsel %vm639, %v2155, 0.0
    %2161 = vadd.xlane.f32.xlu0 %v2160
    %v2162 = vpop.xlane.xlu0 %2161
    %v2163 = vsel %vm646, %v2156, 0.0
    %2164 = vadd.xlane.f32.xlu0 %v2163
    %v2165 = vpop.xlane.xlu0 %2164
    %v2166 = vmul.f32 %v2159, %v650
    %v2167 = vmul.f32 %v2162, %v650
    %v2168 = vmul.f32 %v2165, %v650
    %v2169 = vadd.f32 %v2166, 1e-06
    %v2170 = vadd.f32 %v2167, 1e-06
    %v2171 = vadd.f32 %v2168, 1e-06
    %v2172 = vrsqrt.pop %v2169
    %v2173 = vrsqrt.pop %v2170
    %v2174 = vrsqrt.pop %v2171
    %v2175 = vmul.f32 %v2151, %v2172
    %v2176 = vmul.f32 %v2152, %v2173
    %v2177 = vmul.f32 %v2153, %v2174
    %v2179 = vlaneseq
    %v2180 = vshrl.u32 %v2179, 7
    %v2181 = vsub.s32 0, %v2180
    %v2182 = vrot.slane %v2136, %v2181
    %v2184 = vmul.f32 %v2175, %v2182
    %v2185 = vmul.f32 %v2176, %v2182
    %v2186 = vmul.f32 %v2177, %v2182
    %v2188 = vlaneseq
    %v2189 = vshrl.u32 %v2188, 7
    %v2190 = vsub.s32 0, %v2189
    %v2191 = vrot.slane %v2138, %v2190
    %v2193 = vadd.f32 %v2184, %v2191
    %v2194 = vadd.f32 %v2185, %v2191
    %v2195 = vadd.f32 %v2186, %v2191
    %s2196 = scalar_lea.vmem %s8, 32
    %v2197 = vld [vmem:[%s2196] sm:$0xff]
    %v2198 = vld [vmem:[%s2196 + $0x8] sm:$0xff]
    %v2199 = vld [vmem:[%s2196 + $0x10] sm:$0xff]
    %v2200 = vld [vmem:[%s2196 + $0x18] sm:$0xff]
    %s2201 = scalar_lea.vmem %s9, 1
    %v2202 = vld [vmem:[%s2201] sm:$0x1]
    %v2204 = vlaneseq
    %v2205 = vshrl.u32 %v2204, 7
    %v2206 = vsub.s32 0, %v2205
    %v2207 = vrot.slane %v2202, %v2206
    %v2210 = vsel %vm639, %v2193, 0
    %v2213 = vsel %vm639, %v2194, 0
    %v2216 = vsel %vm639, %v2195, 0
    %2218 = vmatprep.subr.mxu0 0.0
    %2219 = vmatpush1.msra.mxu0 %v2197
    %2220 = vmatprep.subr.mxu0 0.0
    %2221 = vmatpush1.msra.mxu0 %v2198
    %2222 = vmatprep.subr.mxu0 0.0
    %2223 = vmatpush1.msra.mxu0 %v2199
    %2224 = vmatprep.subr.mxu0 0.0
    %2225 = vmatpush1.msra.mxu0 %v2200
    %2226 = vmatprep.subr.mxu0 0.0
    %2227 = vmatpush1.msra.mxu0 0.0
    %2228 = vmatprep.subr.mxu0 0.0
    %2229 = vmatpush1.msra.mxu0 0.0
    %2230 = vmatprep.subr.mxu0 0.0
    %2231 = vmatpush1.msra.mxu0 0.0
    %2232 = vmatprep.subr.mxu0 0.0
    %2233 = vmatpush1.msra.mxu0 0.0
    %2234 = vmatprep.subr.mxu0 0.0
    %2235 = vmatpush1.msra.mxu0 0.0
    %2236 = vmatprep.subr.mxu0 0.0
    %2237 = vmatpush1.msra.mxu0 0.0
    %2238 = vmatprep.subr.mxu0 0.0
    %2239 = vmatpush1.msra.mxu0 0.0
    %2240 = vmatprep.subr.mxu0 0.0
    %2241 = vmatpush1.msra.mxu0 0.0
    %2242 = vmatprep.subr.mxu0 0.0
    %2243 = vmatpush1.msra.mxu0 0.0
    %2244 = vmatprep.subr.mxu0 0.0
    %2245 = vmatpush1.msra.mxu0 0.0
    %2246 = vmatprep.subr.mxu0 0.0
    %2247 = vmatpush1.msra.mxu0 0.0
    %2248 = vmatprep.subr.mxu0 0.0
    %2249 = vmatpush1.msra.mxu0 0.0
    %2250 = vmatprep.subr.mxu0 0.0
    %2251 = vmatpush1.msra.mxu0 0.0
    %2252 = vmatprep.subr.mxu0 0.0
    %2253 = vmatpush1.msra.mxu0 0.0
    %2254 = vmatprep.subr.mxu0 0.0
    %2255 = vmatpush1.msra.mxu0 0.0
    %2256 = vmatprep.subr.mxu0 0.0
    %2257 = vmatpush1.msra.mxu0 0.0
    %2258 = vmatprep.subr.mxu0 0.0
    %2259 = vmatpush1.msra.mxu0 0.0
    %2260 = vmatprep.subr.mxu0 0.0
    %2261 = vmatpush1.msra.mxu0 0.0
    %2262 = vmatprep.subr.mxu0 0.0
    %2263 = vmatpush1.msra.mxu0 0.0
    %2264 = vmatprep.subr.mxu0 0.0
    %2265 = vmatpush1.msra.mxu0 0.0
    %2266 = vmatprep.subr.mxu0 0.0
    %2267 = vmatpush1.msra.mxu0 0.0
    %2268 = vmatprep.subr.mxu0 0.0
    %2269 = vmatpush1.msra.mxu0 0.0
    %2270 = vmatprep.subr.mxu0 0.0
    %2271 = vmatpush1.msra.mxu0 0.0
    %2272 = vmatprep.subr.mxu0 0.0
    %2273 = vmatpush1.msra.mxu0 0.0
    %2274 = vmatprep.subr.mxu0 0.0
    %2275 = vmatpush1.msra.mxu0 0.0
    %2276 = vmatprep.subr.mxu0 0.0
    %2277 = vmatpush1.msra.mxu0 0.0
    %2278 = vmatprep.subr.mxu0 0.0
    %2279 = vmatpush1.msra.mxu0 0.0
    %2280 = vmatprep.subr.mxu0 0.0
    %2281 = vmatpush1.msra.mxu0 0.0
    %2282 = vmatprep.mubr.f32.mxu0 0.0
    %2283 = vmatmul.mubr.f32.gmra.mrb[0].mxu0 %v2210
    %v2284 = vpop.f32.mrb[0].mxu0
    %v2285 = vadd.f32 %v2207, %v2284
    %v2286 = vpop.f32.mrb[0].mxu0
    %2287 = vmatprep.mubr.f32.mxu0 0.0
    %2288 = vmatmul.mubr.f32.gmra.mrb[0].mxu0 %v2213
    %v2289 = vpop.f32.mrb[0].mxu0
    %v2290 = vadd.f32 %v2207, %v2289
    %v2291 = vpop.f32.mrb[0].mxu0
    %2292 = vmatprep.mubr.f32.mxu0 0.0
    %2293 = vmatmul.mubr.f32.gmra.mrb[0].mxu0 %v2216
    %v2294 = vpop.f32.mrb[0].mxu0
    %v2295 = vadd.f32 %v2207, %v2294
    %v2296 = vpop.f32.mrb[0].mxu0
    %2297 = vdwg.mxu0
    %2298 = vst.msk [vmem:[#allocation3] sm:$0xff] %vm799, %v2285
    %2299 = vst.msk [vmem:[#allocation3 + $0x8] sm:$0xff] %vm799, %v2290
    %2300 = vst.msk [vmem:[#allocation3 + $0x10] sm:$0x3] %vm802, %v2295
    %v2301 = vld [vmem:[#allocation3] sm:$0xff]
    %v2302 = vld [vmem:[#allocation3 + $0x8] sm:$0x1]
    %v2303 = vmul.f32 %v2301, 0.25
    %v2304 = vmul.f32 %v2302, 0.25
    %2307 = vrot.lane.b32.xlu0 %v2301, 96
    %v2308 = vpop.permute.xlu0 %2307
    %2309 = vrot.lane.b32.xlu0 %v2302, 96
    %v2310 = vpop.permute.xlu0 %2309
    %v2312 = vsel %vm814, %v2303, 0
    %v2315 = vsel %vm814, %v2304, 0
    %v2317 = vsel %vm814, %v2308, 0
    %v2319 = vsel %vm814, %v2310, 0
    %2321 = vmatprep.subr.mxu0 0.0
    %2322 = vmatpush1.xpose.msra.mxu0 %v2317
    %2323 = vmatprep.subr.mxu0 0.0
    %2324 = vmatpush1.xpose.msra.mxu0 %v2319
    %2325 = vmatprep.subr.mxu0 0.0
    %2326 = vmatpush1.xpose.msra.mxu0 0.0
    %2327 = vmatprep.subr.mxu0 0.0
    %2328 = vmatpush1.xpose.msra.mxu0 0.0
    %2329 = vmatprep.subr.mxu0 0.0
    %2330 = vmatpush1.xpose.msra.mxu0 0.0
    %2331 = vmatprep.subr.mxu0 0.0
    %2332 = vmatpush1.xpose.msra.mxu0 0.0
    %2333 = vmatprep.subr.mxu0 0.0
    %2334 = vmatpush1.xpose.msra.mxu0 0.0
    %2335 = vmatprep.subr.mxu0 0.0
    %2336 = vmatpush1.xpose.msra.mxu0 0.0
    %2337 = vmatprep.subr.mxu0 0.0
    %2338 = vmatpush1.xpose.msra.mxu0 0.0
    %2339 = vmatprep.subr.mxu0 0.0
    %2340 = vmatpush1.xpose.msra.mxu0 0.0
    %2341 = vmatprep.subr.mxu0 0.0
    %2342 = vmatpush1.xpose.msra.mxu0 0.0
    %2343 = vmatprep.subr.mxu0 0.0
    %2344 = vmatpush1.xpose.msra.mxu0 0.0
    %2345 = vmatprep.subr.mxu0 0.0
    %2346 = vmatpush1.xpose.msra.mxu0 0.0
    %2347 = vmatprep.subr.mxu0 0.0
    %2348 = vmatpush1.xpose.msra.mxu0 0.0
    %2349 = vmatprep.subr.mxu0 0.0
    %2350 = vmatpush1.xpose.msra.mxu0 0.0
    %2351 = vmatprep.subr.mxu0 0.0
    %2352 = vmatpush1.xpose.msra.mxu0 0.0
    %2353 = vmatprep.subr.mxu0 0.0
    %2354 = vmatpush1.xpose.msra.mxu0 0.0
    %2355 = vmatprep.subr.mxu0 0.0
    %2356 = vmatpush1.xpose.msra.mxu0 0.0
    %2357 = vmatprep.subr.mxu0 0.0
    %2358 = vmatpush1.xpose.msra.mxu0 0.0
    %2359 = vmatprep.subr.mxu0 0.0
    %2360 = vmatpush1.xpose.msra.mxu0 0.0
    %2361 = vmatprep.subr.mxu0 0.0
    %2362 = vmatpush1.xpose.msra.mxu0 0.0
    %2363 = vmatprep.subr.mxu0 0.0
    %2364 = vmatpush1.xpose.msra.mxu0 0.0
    %2365 = vmatprep.subr.mxu0 0.0
    %2366 = vmatpush1.xpose.msra.mxu0 0.0
    %2367 = vmatprep.subr.mxu0 0.0
    %2368 = vmatpush1.xpose.msra.mxu0 0.0
    %2369 = vmatprep.subr.mxu0 0.0
    %2370 = vmatpush1.xpose.msra.mxu0 0.0
    %2371 = vmatprep.subr.mxu0 0.0
    %2372 = vmatpush1.xpose.msra.mxu0 0.0
    %2373 = vmatprep.subr.mxu0 0.0
    %2374 = vmatpush1.xpose.msra.mxu0 0.0
    %2375 = vmatprep.subr.mxu0 0.0
    %2376 = vmatpush1.xpose.msra.mxu0 0.0
    %2377 = vmatprep.subr.mxu0 0.0
    %2378 = vmatpush1.xpose.msra.mxu0 0.0
    %2379 = vmatprep.subr.mxu0 0.0
    %2380 = vmatpush1.xpose.msra.mxu0 0.0
    %2381 = vmatprep.subr.mxu0 0.0
    %2382 = vmatpush1.xpose.msra.mxu0 0.0
    %2383 = vmatprep.subr.mxu0 0.0
    %2384 = vmatpush1.xpose.msra.mxu0 0.0
    %2385 = vmatprep.mubr.f32.mxu0 0.0
    %2386 = vmatmul.mubr.f32.gmra.mrb[0].mxu0 %v2312
    %v2387 = vpop.f32.mrb[0].mxu0
    %v2388 = vadd.f32 0.0, %v2387
    %v2389 = vpop.f32.mrb[0].mxu0
    %2390 = vmatprep.mubr.f32.mxu0 0.0
    %2391 = vmatmul.mubr.f32.gmra.mrb[0].mxu0 %v2315
    %v2392 = vpop.f32.mrb[0].mxu0
    %v2393 = vadd.f32 0.0, %v2392
    %v2394 = vpop.f32.mrb[0].mxu0
    %2395 = vdwg.mxu0
    %v2396 = vsel %vm900, %v2388, -inf
    %2397 = vmax.xlane.f32.xlu0 %v2396
    %v2398 = vpop.xlane.xlu0 %2397
    %v2399 = vsel %vm904, %v2393, -inf
    %2400 = vmax.xlane.f32.xlu0 %v2399
    %v2401 = vpop.xlane.xlu0 %2400
    %v2402 = vsub.f32 %v2388, %v2398
    %v2403 = vsub.f32 %v2393, %v2401
    %v2404 = vmul.f32 %v2402, 1.442695
    %v2405 = vpow.pop %v2404
    %v2406 = vmul.f32 %v2403, 1.442695
    %v2407 = vpow.pop %v2406
    %v2408 = vsel %vm900, %v2405, 0.0
    %2409 = vadd.xlane.f32.xlu0 %v2408
    %v2410 = vpop.xlane.xlu0 %2409
    %v2411 = vsel %vm904, %v2407, 0.0
    %2412 = vadd.xlane.f32.xlu0 %v2411
    %v2413 = vpop.xlane.xlu0 %2412
    %v2414 = vrcp.pop %v2410
    %v2415 = vrcp.pop %v2413
    %v2416 = vmul.f32 %v2405, %v2414
    %v2417 = vmul.f32 %v2407, %v2415
    %2418 = vrot.lane.b32.xlu0 %v2301, 64
    %v2419 = vpop.permute.xlu0 %2418
    %2420 = vrot.lane.b32.xlu0 %v2302, 64
    %v2421 = vpop.permute.xlu0 %2420
    %v2424 = vsel %vm900, %v2416, 0
    %v2427 = vsel %vm900, %v2417, 0
    %v2429 = vsel %vm935, %v2421, 0
    %2431 = vmatprep.subr.mxu0 0.0
    %2432 = vmatpush1.msra.mxu0 %v2419
    %2433 = vmatprep.subr.mxu0 0.0
    %2434 = vmatpush1.msra.mxu0 %v2429
    %2435 = vmatprep.subr.mxu0 0.0
    %2436 = vmatpush1.msra.mxu0 0.0
    %2437 = vmatprep.subr.mxu0 0.0
    %2438 = vmatpush1.msra.mxu0 0.0
    %2439 = vmatprep.subr.mxu0 0.0
    %2440 = vmatpush1.msra.mxu0 0.0
    %2441 = vmatprep.subr.mxu0 0.0
    %2442 = vmatpush1.msra.mxu0 0.0
    %2443 = vmatprep.subr.mxu0 0.0
    %2444 = vmatpush1.msra.mxu0 0.0
    %2445 = vmatprep.subr.mxu0 0.0
    %2446 = vmatpush1.msra.mxu0 0.0
    %2447 = vmatprep.subr.mxu0 0.0
    %2448 = vmatpush1.msra.mxu0 0.0
    %2449 = vmatprep.subr.mxu0 0.0
    %2450 = vmatpush1.msra.mxu0 0.0
    %2451 = vmatprep.subr.mxu0 0.0
    %2452 = vmatpush1.msra.mxu0 0.0
    %2453 = vmatprep.subr.mxu0 0.0
    %2454 = vmatpush1.msra.mxu0 0.0
    %2455 = vmatprep.subr.mxu0 0.0
    %2456 = vmatpush1.msra.mxu0 0.0
    %2457 = vmatprep.subr.mxu0 0.0
    %2458 = vmatpush1.msra.mxu0 0.0
    %2459 = vmatprep.subr.mxu0 0.0
    %2460 = vmatpush1.msra.mxu0 0.0
    %2461 = vmatprep.subr.mxu0 0.0
    %2462 = vmatpush1.msra.mxu0 0.0
    %2463 = vmatprep.subr.mxu0 0.0
    %2464 = vmatpush1.msra.mxu0 0.0
    %2465 = vmatprep.subr.mxu0 0.0
    %2466 = vmatpush1.msra.mxu0 0.0
    %2467 = vmatprep.subr.mxu0 0.0
    %2468 = vmatpush1.msra.mxu0 0.0
    %2469 = vmatprep.subr.mxu0 0.0
    %2470 = vmatpush1.msra.mxu0 0.0
    %2471 = vmatprep.subr.mxu0 0.0
    %2472 = vmatpush1.msra.mxu0 0.0
    %2473 = vmatprep.subr.mxu0 0.0
    %2474 = vmatpush1.msra.mxu0 0.0
    %2475 = vmatprep.subr.mxu0 0.0
    %2476 = vmatpush1.msra.mxu0 0.0
    %2477 = vmatprep.subr.mxu0 0.0
    %2478 = vmatpush1.msra.mxu0 0.0
    %2479 = vmatprep.subr.mxu0 0.0
    %2480 = vmatpush1.msra.mxu0 0.0
    %2481 = vmatprep.subr.mxu0 0.0
    %2482 = vmatpush1.msra.mxu0 0.0
    %2483 = vmatprep.subr.mxu0 0.0
    %2484 = vmatpush1.msra.mxu0 0.0
    %2485 = vmatprep.subr.mxu0 0.0
    %2486 = vmatpush1.msra.mxu0 0.0
    %2487 = vmatprep.subr.mxu0 0.0
    %2488 = vmatpush1.msra.mxu0 0.0
    %2489 = vmatprep.subr.mxu0 0.0
    %2490 = vmatpush1.msra.mxu0 0.0
    %2491 = vmatprep.subr.mxu0 0.0
    %2492 = vmatpush1.msra.mxu0 0.0
    %2493 = vmatprep.subr.mxu0 0.0
    %2494 = vmatpush1.msra.mxu0 0.0
    %2495 = vmatprep.mubr.f32.mxu0 0.0
    %2496 = vmatmul.mubr.f32.gmra.mrb[0].mxu0 %v2424
    %v2497 = vpop.f32.mrb[0].mxu0
    %v2498 = vadd.f32 0.0, %v2497
    %v2499 = vpop.f32.mrb[0].mxu0
    %2500 = vmatprep.mubr.f32.mxu0 0.0
    %2501 = vmatmul.mubr.f32.gmra.mrb[0].mxu0 %v2427
    %v2502 = vpop.f32.mrb[0].mxu0
    %v2503 = vadd.f32 0.0, %v2502
    %v2504 = vpop.f32.mrb[0].mxu0
    %2505 = vdwg.mxu0
    %2506 = vst.msk [vmem:[#allocation4] sm:$0xff] %vm814, %v2498
    %2507 = vst.msk [vmem:[#allocation4 + $0x8] sm:$0x1] %vm1014, %v2503
    %v2508 = vld [vmem:[#allocation3] sm:$0xff]
    %v2509 = vld [vmem:[#allocation3 + $0x8] sm:$0x1]
    %v2510 = vmul.f32 %v2508, 0.25
    %v2511 = vmul.f32 %v2509, 0.25
    %2514 = vrot.lane.b32.xlu0 %v2510, 112
    %v2515 = vpop.permute.xlu0 %2514
    %2516 = vrot.lane.b32.xlu0 %v2511, 112
    %v2517 = vpop.permute.xlu0 %2516
    %2520 = vrot.lane.b32.xlu0 %v2508, 80
    %v2521 = vpop.permute.xlu0 %2520
    %2522 = vrot.lane.b32.xlu0 %v2509, 80
    %v2523 = vpop.permute.xlu0 %2522
    %v2524 = vsel %vm814, %v2515, 0
    %v2526 = vsel %vm814, %v2517, 0
    %v2528 = vsel %vm814, %v2521, 0
    %v2530 = vsel %vm814, %v2523, 0
    %2532 = vmatprep.subr.mxu0 0.0
    %2533 = vmatpush1.xpose.msra.mxu0 %v2528
    %2534 = vmatprep.subr.mxu0 0.0
    %2535 = vmatpush1.xpose.msra.mxu0 %v2530
    %2536 = vmatprep.subr.mxu0 0.0
    %2537 = vmatpush1.xpose.msra.mxu0 0.0
    %2538 = vmatprep.subr.mxu0 0.0
    %2539 = vmatpush1.xpose.msra.mxu0 0.0
    %2540 = vmatprep.subr.mxu0 0.0
    %2541 = vmatpush1.xpose.msra.mxu0 0.0
    %2542 = vmatprep.subr.mxu0 0.0
    %2543 = vmatpush1.xpose.msra.mxu0 0.0
    %2544 = vmatprep.subr.mxu0 0.0
    %2545 = vmatpush1.xpose.msra.mxu0 0.0
    %2546 = vmatprep.subr.mxu0 0.0
    %2547 = vmatpush1.xpose.msra.mxu0 0.0
    %2548 = vmatprep.subr.mxu0 0.0
    %2549 = vmatpush1.xpose.msra.mxu0 0.0
    %2550 = vmatprep.subr.mxu0 0.0
    %2551 = vmatpush1.xpose.msra.mxu0 0.0
    %2552 = vmatprep.subr.mxu0 0.0
    %2553 = vmatpush1.xpose.msra.mxu0 0.0
    %2554 = vmatprep.subr.mxu0 0.0
    %2555 = vmatpush1.xpose.msra.mxu0 0.0
    %2556 = vmatprep.subr.mxu0 0.0
    %2557 = vmatpush1.xpose.msra.mxu0 0.0
    %2558 = vmatprep.subr.mxu0 0.0
    %2559 = vmatpush1.xpose.msra.mxu0 0.0
    %2560 = vmatprep.subr.mxu0 0.0
    %2561 = vmatpush1.xpose.msra.mxu0 0.0
    %2562 = vmatprep.subr.mxu0 0.0
    %2563 = vmatpush1.xpose.msra.mxu0 0.0
    %2564 = vmatprep.subr.mxu0 0.0
    %2565 = vmatpush1.xpose.msra.mxu0 0.0
    %2566 = vmatprep.subr.mxu0 0.0
    %2567 = vmatpush1.xpose.msra.mxu0 0.0
    %2568 = vmatprep.subr.mxu0 0.0
    %2569 = vmatpush1.xpose.msra.mxu0 0.0
    %2570 = vmatprep.subr.mxu0 0.0
    %2571 = vmatpush1.xpose.msra.mxu0 0.0
    %2572 = vmatprep.subr.mxu0 0.0
    %2573 = vmatpush1.xpose.msra.mxu0 0.0
    %2574 = vmatprep.subr.mxu0 0.0
    %2575 = vmatpush1.xpose.msra.mxu0 0.0
    %2576 = vmatprep.subr.mxu0 0.0
    %2577 = vmatpush1.xpose.msra.mxu0 0.0
    %2578 = vmatprep.subr.mxu0 0.0
    %2579 = vmatpush1.xpose.msra.mxu0 0.0
    %2580 = vmatprep.subr.mxu0 0.0
    %2581 = vmatpush1.xpose.msra.mxu0 0.0
    %2582 = vmatprep.subr.mxu0 0.0
    %2583 = vmatpush1.xpose.msra.mxu0 0.0
    %2584 = vmatprep.subr.mxu0 0.0
    %2585 = vmatpush1.xpose.msra.mxu0 0.0
    %2586 = vmatprep.subr.mxu0 0.0
    %2587 = vmatpush1.xpose.msra.mxu0 0.0
    %2588 = vmatprep.subr.mxu0 0.0
    %2589 = vmatpush1.xpose.msra.mxu0 0.0
    %2590 = vmatprep.subr.mxu0 0.0
    %2591 = vmatpush1.xpose.msra.mxu0 0.0
    %2592 = vmatprep.subr.mxu0 0.0
    %2593 = vmatpush1.xpose.msra.mxu0 0.0
    %2594 = vmatprep.subr.mxu0 0.0
    %2595 = vmatpush1.xpose.msra.mxu0 0.0
    %2596 = vmatprep.mubr.f32.mxu0 0.0
    %2597 = vmatmul.mubr.f32.gmra.mrb[0].mxu0 %v2524
    %v2598 = vpop.f32.mrb[0].mxu0
    %v2599 = vadd.f32 0.0, %v2598
    %v2600 = vpop.f32.mrb[0].mxu0
    %2601 = vmatprep.mubr.f32.mxu0 0.0
    %2602 = vmatmul.mubr.f32.gmra.mrb[0].mxu0 %v2526
    %v2603 = vpop.f32.mrb[0].mxu0
    %v2604 = vadd.f32 0.0, %v2603
    %v2605 = vpop.f32.mrb[0].mxu0
    %2606 = vdwg.mxu0
    %v2607 = vsel %vm900, %v2599, -inf
    %2608 = vmax.xlane.f32.xlu0 %v2607
    %v2609 = vpop.xlane.xlu0 %2608
    %v2610 = vsel %vm904, %v2604, -inf
    %2611 = vmax.xlane.f32.xlu0 %v2610
    %v2612 = vpop.xlane.xlu0 %2611
    %v2613 = vsub.f32 %v2599, %v2609
    %v2614 = vsub.f32 %v2604, %v2612
    %v2615 = vmul.f32 %v2613, 1.442695
    %v2616 = vpow.pop %v2615
    %v2617 = vmul.f32 %v2614, 1.442695
    %v2618 = vpow.pop %v2617
    %v2619 = vsel %vm900, %v2616, 0.0
    %2620 = vadd.xlane.f32.xlu0 %v2619
    %v2621 = vpop.xlane.xlu0 %2620
    %v2622 = vsel %vm904, %v2618, 0.0
    %2623 = vadd.xlane.f32.xlu0 %v2622
    %v2624 = vpop.xlane.xlu0 %2623
    %v2625 = vrcp.pop %v2621
    %v2626 = vrcp.pop %v2624
    %v2627 = vmul.f32 %v2616, %v2625
    %v2628 = vmul.f32 %v2618, %v2626
    %2629 = vrot.lane.b32.xlu0 %v2508, 48
    %v2630 = vpop.permute.xlu0 %2629
    %2631 = vrot.lane.b32.xlu0 %v2509, 48
    %v2632 = vpop.permute.xlu0 %2631
    %v2635 = vsel %vm900, %v2627, 0
    %v2638 = vsel %vm900, %v2628, 0
    %v2640 = vsel %vm935, %v2632, 0
    %2642 = vmatprep.subr.mxu0 0.0
    %2643 = vmatpush1.msra.mxu0 %v2630
    %2644 = vmatprep.subr.mxu0 0.0
    %2645 = vmatpush1.msra.mxu0 %v2640
    %2646 = vmatprep.subr.mxu0 0.0
    %2647 = vmatpush1.msra.mxu0 0.0
    %2648 = vmatprep.subr.mxu0 0.0
    %2649 = vmatpush1.msra.mxu0 0.0
    %2650 = vmatprep.subr.mxu0 0.0
    %2651 = vmatpush1.msra.mxu0 0.0
    %2652 = vmatprep.subr.mxu0 0.0
    %2653 = vmatpush1.msra.mxu0 0.0
    %2654 = vmatprep.subr.mxu0 0.0
    %2655 = vmatpush1.msra.mxu0 0.0
    %2656 = vmatprep.subr.mxu0 0.0
    %2657 = vmatpush1.msra.mxu0 0.0
    %2658 = vmatprep.subr.mxu0 0.0
    %2659 = vmatpush1.msra.mxu0 0.0
    %2660 = vmatprep.subr.mxu0 0.0
    %2661 = vmatpush1.msra.mxu0 0.0
    %2662 = vmatprep.subr.mxu0 0.0
    %2663 = vmatpush1.msra.mxu0 0.0
    %2664 = vmatprep.subr.mxu0 0.0
    %2665 = vmatpush1.msra.mxu0 0.0
    %2666 = vmatprep.subr.mxu0 0.0
    %2667 = vmatpush1.msra.mxu0 0.0
    %2668 = vmatprep.subr.mxu0 0.0
    %2669 = vmatpush1.msra.mxu0 0.0
    %2670 = vmatprep.subr.mxu0 0.0
    %2671 = vmatpush1.msra.mxu0 0.0
    %2672 = vmatprep.subr.mxu0 0.0
    %2673 = vmatpush1.msra.mxu0 0.0
    %2674 = vmatprep.subr.mxu0 0.0
    %2675 = vmatpush1.msra.mxu0 0.0
    %2676 = vmatprep.subr.mxu0 0.0
    %2677 = vmatpush1.msra.mxu0 0.0
    %2678 = vmatprep.subr.mxu0 0.0
    %2679 = vmatpush1.msra.mxu0 0.0
    %2680 = vmatprep.subr.mxu0 0.0
    %2681 = vmatpush1.msra.mxu0 0.0
    %2682 = vmatprep.subr.mxu0 0.0
    %2683 = vmatpush1.msra.mxu0 0.0
    %2684 = vmatprep.subr.mxu0 0.0
    %2685 = vmatpush1.msra.mxu0 0.0
    %2686 = vmatprep.subr.mxu0 0.0
    %2687 = vmatpush1.msra.mxu0 0.0
    %2688 = vmatprep.subr.mxu0 0.0
    %2689 = vmatpush1.msra.mxu0 0.0
    %2690 = vmatprep.subr.mxu0 0.0
    %2691 = vmatpush1.msra.mxu0 0.0
    %2692 = vmatprep.subr.mxu0 0.0
    %2693 = vmatpush1.msra.mxu0 0.0
    %2694 = vmatprep.subr.mxu0 0.0
    %2695 = vmatpush1.msra.mxu0 0.0
    %2696 = vmatprep.subr.mxu0 0.0
    %2697 = vmatpush1.msra.mxu0 0.0
    %2698 = vmatprep.subr.mxu0 0.0
    %2699 = vmatpush1.msra.mxu0 0.0
    %2700 = vmatprep.subr.mxu0 0.0
    %2701 = vmatpush1.msra.mxu0 0.0
    %2702 = vmatprep.subr.mxu0 0.0
    %2703 = vmatpush1.msra.mxu0 0.0
    %2704 = vmatprep.subr.mxu0 0.0
    %2705 = vmatpush1.msra.mxu0 0.0
    %2706 = vmatprep.mubr.f32.mxu0 0.0
    %2707 = vmatmul.mubr.f32.gmra.mrb[0].mxu0 %v2635
    %v2708 = vpop.f32.mrb[0].mxu0
    %v2709 = vadd.f32 0.0, %v2708
    %v2710 = vpop.f32.mrb[0].mxu0
    %2711 = vmatprep.mubr.f32.mxu0 0.0
    %2712 = vmatmul.mubr.f32.gmra.mrb[0].mxu0 %v2638
    %v2713 = vpop.f32.mrb[0].mxu0
    %v2714 = vadd.f32 0.0, %v2713
    %v2715 = vpop.f32.mrb[0].mxu0
    %2716 = vdwg.mxu0
    %2719 = vrot.lane.b32.xlu0 %v2709, 16
    %v2720 = vpop.permute.xlu0 %2719
    %2721 = vrot.lane.b32.xlu0 %v2714, 16
    %v2722 = vpop.permute.xlu0 %2721
    %2725 = vst.msk [vmem:[#allocation4] sm:$0xff] %vm1233, %v2720
    %2726 = vst.msk [vmem:[#allocation4 + $0x8] sm:$0x1] %vm1235, %v2722
    %v2727 = vld [vmem:[#allocation3 + $0x9] sm:$0xff]
    %v2728 = vld [vmem:[#allocation3 + $0x11] sm:$0x1]
    %v2729 = vmul.f32 %v2727, 0.25
    %v2730 = vmul.f32 %v2728, 0.25
    %2733 = vrot.lane.b32.xlu0 %v2727, 96
    %v2734 = vpop.permute.xlu0 %2733
    %2735 = vrot.lane.b32.xlu0 %v2728, 96
    %v2736 = vpop.permute.xlu0 %2735
    %v2738 = vsel %vm814, %v2729, 0
    %v2741 = vsel %vm814, %v2730, 0
    %v2743 = vsel %vm814, %v2734, 0
    %v2745 = vsel %vm814, %v2736, 0
    %2747 = vmatprep.subr.mxu0 0.0
    %2748 = vmatpush1.xpose.msra.mxu0 %v2743
    %2749 = vmatprep.subr.mxu0 0.0
    %2750 = vmatpush1.xpose.msra.mxu0 %v2745
    %2751 = vmatprep.subr.mxu0 0.0
    %2752 = vmatpush1.xpose.msra.mxu0 0.0
    %2753 = vmatprep.subr.mxu0 0.0
    %2754 = vmatpush1.xpose.msra.mxu0 0.0
    %2755 = vmatprep.subr.mxu0 0.0
    %2756 = vmatpush1.xpose.msra.mxu0 0.0
    %2757 = vmatprep.subr.mxu0 0.0
    %2758 = vmatpush1.xpose.msra.mxu0 0.0
    %2759 = vmatprep.subr.mxu0 0.0
    %2760 = vmatpush1.xpose.msra.mxu0 0.0
    %2761 = vmatprep.subr.mxu0 0.0
    %2762 = vmatpush1.xpose.msra.mxu0 0.0
    %2763 = vmatprep.subr.mxu0 0.0
    %2764 = vmatpush1.xpose.msra.mxu0 0.0
    %2765 = vmatprep.subr.mxu0 0.0
    %2766 = vmatpush1.xpose.msra.mxu0 0.0
    %2767 = vmatprep.subr.mxu0 0.0
    %2768 = vmatpush1.xpose.msra.mxu0 0.0
    %2769 = vmatprep.subr.mxu0 0.0
    %2770 = vmatpush1.xpose.msra.mxu0 0.0
    %2771 = vmatprep.subr.mxu0 0.0
    %2772 = vmatpush1.xpose.msra.mxu0 0.0
    %2773 = vmatprep.subr.mxu0 0.0
    %2774 = vmatpush1.xpose.msra.mxu0 0.0
    %2775 = vmatprep.subr.mxu0 0.0
    %2776 = vmatpush1.xpose.msra.mxu0 0.0
    %2777 = vmatprep.subr.mxu0 0.0
    %2778 = vmatpush1.xpose.msra.mxu0 0.0
    %2779 = vmatprep.subr.mxu0 0.0
    %2780 = vmatpush1.xpose.msra.mxu0 0.0
    %2781 = vmatprep.subr.mxu0 0.0
    %2782 = vmatpush1.xpose.msra.mxu0 0.0
    %2783 = vmatprep.subr.mxu0 0.0
    %2784 = vmatpush1.xpose.msra.mxu0 0.0
    %2785 = vmatprep.subr.mxu0 0.0
    %2786 = vmatpush1.xpose.msra.mxu0 0.0
    %2787 = vmatprep.subr.mxu0 0.0
    %2788 = vmatpush1.xpose.msra.mxu0 0.0
    %2789 = vmatprep.subr.mxu0 0.0
    %2790 = vmatpush1.xpose.msra.mxu0 0.0
    %2791 = vmatprep.subr.mxu0 0.0
    %2792 = vmatpush1.xpose.msra.mxu0 0.0
    %2793 = vmatprep.subr.mxu0 0.0
    %2794 = vmatpush1.xpose.msra.mxu0 0.0
    %2795 = vmatprep.subr.mxu0 0.0
    %2796 = vmatpush1.xpose.msra.mxu0 0.0
    %2797 = vmatprep.subr.mxu0 0.0
    %2798 = vmatpush1.xpose.msra.mxu0 0.0
    %2799 = vmatprep.subr.mxu0 0.0
    %2800 = vmatpush1.xpose.msra.mxu0 0.0
    %2801 = vmatprep.subr.mxu0 0.0
    %2802 = vmatpush1.xpose.msra.mxu0 0.0
    %2803 = vmatprep.subr.mxu0 0.0
    %2804 = vmatpush1.xpose.msra.mxu0 0.0
    %2805 = vmatprep.subr.mxu0 0.0
    %2806 = vmatpush1.xpose.msra.mxu0 0.0
    %2807 = vmatprep.subr.mxu0 0.0
    %2808 = vmatpush1.xpose.msra.mxu0 0.0
    %2809 = vmatprep.subr.mxu0 0.0
    %2810 = vmatpush1.xpose.msra.mxu0 0.0
    %2811 = vmatprep.mubr.f32.mxu0 0.0
    %2812 = vmatmul.mubr.f32.gmra.mrb[0].mxu0 %v2738
    %v2813 = vpop.f32.mrb[0].mxu0
    %v2814 = vadd.f32 0.0, %v2813
    %v2815 = vpop.f32.mrb[0].mxu0
    %2816 = vmatprep.mubr.f32.mxu0 0.0
    %2817 = vmatmul.mubr.f32.gmra.mrb[0].mxu0 %v2741
    %v2818 = vpop.f32.mrb[0].mxu0
    %v2819 = vadd.f32 0.0, %v2818
    %v2820 = vpop.f32.mrb[0].mxu0
    %2821 = vdwg.mxu0
    %v2822 = vsel %vm900, %v2814, -inf
    %2823 = vmax.xlane.f32.xlu0 %v2822
    %v2824 = vpop.xlane.xlu0 %2823
    %v2825 = vsel %vm904, %v2819, -inf
    %2826 = vmax.xlane.f32.xlu0 %v2825
    %v2827 = vpop.xlane.xlu0 %2826
    %v2828 = vsub.f32 %v2814, %v2824
    %v2829 = vsub.f32 %v2819, %v2827
    %v2830 = vmul.f32 %v2828, 1.442695
    %v2831 = vpow.pop %v2830
    %v2832 = vmul.f32 %v2829, 1.442695
    %v2833 = vpow.pop %v2832
    %v2834 = vsel %vm900, %v2831, 0.0
    %2835 = vadd.xlane.f32.xlu0 %v2834
    %v2836 = vpop.xlane.xlu0 %2835
    %v2837 = vsel %vm904, %v2833, 0.0
    %2838 = vadd.xlane.f32.xlu0 %v2837
    %v2839 = vpop.xlane.xlu0 %2838
    %v2840 = vrcp.pop %v2836
    %v2841 = vrcp.pop %v2839
    %v2842 = vmul.f32 %v2831, %v2840
    %v2843 = vmul.f32 %v2833, %v2841
    %2844 = vrot.lane.b32.xlu0 %v2727, 64
    %v2845 = vpop.permute.xlu0 %2844
    %2846 = vrot.lane.b32.xlu0 %v2728, 64
    %v2847 = vpop.permute.xlu0 %2846
    %v2850 = vsel %vm900, %v2842, 0
    %v2853 = vsel %vm900, %v2843, 0
    %v2855 = vsel %vm935, %v2847, 0
    %2857 = vmatprep.subr.mxu0 0.0
    %2858 = vmatpush1.msra.mxu0 %v2845
    %2859 = vmatprep.subr.mxu0 0.0
    %2860 = vmatpush1.msra.mxu0 %v2855
    %2861 = vmatprep.subr.mxu0 0.0
    %2862 = vmatpush1.msra.mxu0 0.0
    %2863 = vmatprep.subr.mxu0 0.0
    %2864 = vmatpush1.msra.mxu0 0.0
    %2865 = vmatprep.subr.mxu0 0.0
    %2866 = vmatpush1.msra.mxu0 0.0
    %2867 = vmatprep.subr.mxu0 0.0
    %2868 = vmatpush1.msra.mxu0 0.0
    %2869 = vmatprep.subr.mxu0 0.0
    %2870 = vmatpush1.msra.mxu0 0.0
    %2871 = vmatprep.subr.mxu0 0.0
    %2872 = vmatpush1.msra.mxu0 0.0
    %2873 = vmatprep.subr.mxu0 0.0
    %2874 = vmatpush1.msra.mxu0 0.0
    %2875 = vmatprep.subr.mxu0 0.0
    %2876 = vmatpush1.msra.mxu0 0.0
    %2877 = vmatprep.subr.mxu0 0.0
    %2878 = vmatpush1.msra.mxu0 0.0
    %2879 = vmatprep.subr.mxu0 0.0
    %2880 = vmatpush1.msra.mxu0 0.0
    %2881 = vmatprep.subr.mxu0 0.0
    %2882 = vmatpush1.msra.mxu0 0.0
    %2883 = vmatprep.subr.mxu0 0.0
    %2884 = vmatpush1.msra.mxu0 0.0
    %2885 = vmatprep.subr.mxu0 0.0
    %2886 = vmatpush1.msra.mxu0 0.0
    %2887 = vmatprep.subr.mxu0 0.0
    %2888 = vmatpush1.msra.mxu0 0.0
    %2889 = vmatprep.subr.mxu0 0.0
    %2890 = vmatpush1.msra.mxu0 0.0
    %2891 = vmatprep.subr.mxu0 0.0
    %2892 = vmatpush1.msra.mxu0 0.0
    %2893 = vmatprep.subr.mxu0 0.0
    %2894 = vmatpush1.msra.mxu0 0.0
    %2895 = vmatprep.subr.mxu0 0.0
    %2896 = vmatpush1.msra.mxu0 0.0
    %2897 = vmatprep.subr.mxu0 0.0
    %2898 = vmatpush1.msra.mxu0 0.0
    %2899 = vmatprep.subr.mxu0 0.0
    %2900 = vmatpush1.msra.mxu0 0.0
    %2901 = vmatprep.subr.mxu0 0.0
    %2902 = vmatpush1.msra.mxu0 0.0
    %2903 = vmatprep.subr.mxu0 0.0
    %2904 = vmatpush1.msra.mxu0 0.0
    %2905 = vmatprep.subr.mxu0 0.0
    %2906 = vmatpush1.msra.mxu0 0.0
    %2907 = vmatprep.subr.mxu0 0.0
    %2908 = vmatpush1.msra.mxu0 0.0
    %2909 = vmatprep.subr.mxu0 0.0
    %2910 = vmatpush1.msra.mxu0 0.0
    %2911 = vmatprep.subr.mxu0 0.0
    %2912 = vmatpush1.msra.mxu0 0.0
    %2913 = vmatprep.subr.mxu0 0.0
    %2914 = vmatpush1.msra.mxu0 0.0
    %2915 = vmatprep.subr.mxu0 0.0
    %2916 = vmatpush1.msra.mxu0 0.0
    %2917 = vmatprep.subr.mxu0 0.0
    %2918 = vmatpush1.msra.mxu0 0.0
    %2919 = vmatprep.subr.mxu0 0.0
    %2920 = vmatpush1.msra.mxu0 0.0
    %2921 = vmatprep.mubr.f32.mxu0 0.0
    %2922 = vmatmul.mubr.f32.gmra.mrb[0].mxu0 %v2850
    %v2923 = vpop.f32.mrb[0].mxu0
    %v2924 = vadd.f32 0.0, %v2923
    %v2925 = vpop.f32.mrb[0].mxu0
    %2926 = vmatprep.mubr.f32.mxu0 0.0
    %2927 = vmatmul.mubr.f32.gmra.mrb[0].mxu0 %v2853
    %v2928 = vpop.f32.mrb[0].mxu0
    %v2929 = vadd.f32 0.0, %v2928
    %v2930 = vpop.f32.mrb[0].mxu0
    %2931 = vdwg.mxu0
    %2932 = vst.msk [vmem:[#allocation4 + $0x9] sm:$0xff] %vm814, %v2924
    %2933 = vst.msk [vmem:[#allocation4 + $0x11] sm:$0x1] %vm1014, %v2929
    %v2934 = vld [vmem:[#allocation3 + $0x9] sm:$0xff]
    %v2935 = vld [vmem:[#allocation3 + $0x11] sm:$0x1]
    %v2936 = vmul.f32 %v2934, 0.25
    %v2937 = vmul.f32 %v2935, 0.25
    %2940 = vrot.lane.b32.xlu0 %v2936, 112
    %v2941 = vpop.permute.xlu0 %2940
    %2942 = vrot.lane.b32.xlu0 %v2937, 112
    %v2943 = vpop.permute.xlu0 %2942
    %2946 = vrot.lane.b32.xlu0 %v2934, 80
    %v2947 = vpop.permute.xlu0 %2946
    %2948 = vrot.lane.b32.xlu0 %v2935, 80
    %v2949 = vpop.permute.xlu0 %2948
    %v2950 = vsel %vm814, %v2941, 0
    %v2952 = vsel %vm814, %v2943, 0
    %v2954 = vsel %vm814, %v2947, 0
    %v2956 = vsel %vm814, %v2949, 0
    %2958 = vmatprep.subr.mxu0 0.0
    %2959 = vmatpush1.xpose.msra.mxu0 %v2954
    %2960 = vmatprep.subr.mxu0 0.0
    %2961 = vmatpush1.xpose.msra.mxu0 %v2956
    %2962 = vmatprep.subr.mxu0 0.0
    %2963 = vmatpush1.xpose.msra.mxu0 0.0
    %2964 = vmatprep.subr.mxu0 0.0
    %2965 = vmatpush1.xpose.msra.mxu0 0.0
    %2966 = vmatprep.subr.mxu0 0.0
    %2967 = vmatpush1.xpose.msra.mxu0 0.0
    %2968 = vmatprep.subr.mxu0 0.0
    %2969 = vmatpush1.xpose.msra.mxu0 0.0
    %2970 = vmatprep.subr.mxu0 0.0
    %2971 = vmatpush1.xpose.msra.mxu0 0.0
    %2972 = vmatprep.subr.mxu0 0.0
    %2973 = vmatpush1.xpose.msra.mxu0 0.0
    %2974 = vmatprep.subr.mxu0 0.0
    %2975 = vmatpush1.xpose.msra.mxu0 0.0
    %2976 = vmatprep.subr.mxu0 0.0
    %2977 = vmatpush1.xpose.msra.mxu0 0.0
    %2978 = vmatprep.subr.mxu0 0.0
    %2979 = vmatpush1.xpose.msra.mxu0 0.0
    %2980 = vmatprep.subr.mxu0 0.0
    %2981 = vmatpush1.xpose.msra.mxu0 0.0
    %2982 = vmatprep.subr.mxu0 0.0
    %2983 = vmatpush1.xpose.msra.mxu0 0.0
    %2984 = vmatprep.subr.mxu0 0.0
    %2985 = vmatpush1.xpose.msra.mxu0 0.0
    %2986 = vmatprep.subr.mxu0 0.0
    %2987 = vmatpush1.xpose.msra.mxu0 0.0
    %2988 = vmatprep.subr.mxu0 0.0
    %2989 = vmatpush1.xpose.msra.mxu0 0.0
    %2990 = vmatprep.subr.mxu0 0.0
    %2991 = vmatpush1.xpose.msra.mxu0 0.0
    %2992 = vmatprep.subr.mxu0 0.0
    %2993 = vmatpush1.xpose.msra.mxu0 0.0
    %2994 = vmatprep.subr.mxu0 0.0
    %2995 = vmatpush1.xpose.msra.mxu0 0.0
    %2996 = vmatprep.subr.mxu0 0.0
    %2997 = vmatpush1.xpose.msra.mxu0 0.0
    %2998 = vmatprep.subr.mxu0 0.0
    %2999 = vmatpush1.xpose.msra.mxu0 0.0
    %3000 = vmatprep.subr.mxu0 0.0
    %3001 = vmatpush1.xpose.msra.mxu0 0.0
    %3002 = vmatprep.subr.mxu0 0.0
    %3003 = vmatpush1.xpose.msra.mxu0 0.0
    %3004 = vmatprep.subr.mxu0 0.0
    %3005 = vmatpush1.xpose.msra.mxu0 0.0
    %3006 = vmatprep.subr.mxu0 0.0
    %3007 = vmatpush1.xpose.msra.mxu0 0.0
    %3008 = vmatprep.subr.mxu0 0.0
    %3009 = vmatpush1.xpose.msra.mxu0 0.0
    %3010 = vmatprep.subr.mxu0 0.0
    %3011 = vmatpush1.xpose.msra.mxu0 0.0
    %3012 = vmatprep.subr.mxu0 0.0
    %3013 = vmatpush1.xpose.msra.mxu0 0.0
    %3014 = vmatprep.subr.mxu0 0.0
    %3015 = vmatpush1.xpose.msra.mxu0 0.0
    %3016 = vmatprep.subr.mxu0 0.0
    %3017 = vmatpush1.xpose.msra.mxu0 0.0
    %3018 = vmatprep.subr.mxu0 0.0
    %3019 = vmatpush1.xpose.msra.mxu0 0.0
    %3020 = vmatprep.subr.mxu0 0.0
    %3021 = vmatpush1.xpose.msra.mxu0 0.0
    %3022 = vmatprep.mubr.f32.mxu0 0.0
    %3023 = vmatmul.mubr.f32.gmra.mrb[0].mxu0 %v2950
    %v3024 = vpop.f32.mrb[0].mxu0
    %v3025 = vadd.f32 0.0, %v3024
    %v3026 = vpop.f32.mrb[0].mxu0
    %3027 = vmatprep.mubr.f32.mxu0 0.0
    %3028 = vmatmul.mubr.f32.gmra.mrb[0].mxu0 %v2952
    %v3029 = vpop.f32.mrb[0].mxu0
    %v3030 = vadd.f32 0.0, %v3029
    %v3031 = vpop.f32.mrb[0].mxu0
    %3032 = vdwg.mxu0
    %v3033 = vsel %vm900, %v3025, -inf
    %3034 = vmax.xlane.f32.xlu0 %v3033
    %v3035 = vpop.xlane.xlu0 %3034
    %v3036 = vsel %vm904, %v3030, -inf
    %3037 = vmax.xlane.f32.xlu0 %v3036
    %v3038 = vpop.xlane.xlu0 %3037
    %v3039 = vsub.f32 %v3025, %v3035
    %v3040 = vsub.f32 %v3030, %v3038
    %v3041 = vmul.f32 %v3039, 1.442695
    %v3042 = vpow.pop %v3041
    %v3043 = vmul.f32 %v3040, 1.442695
    %v3044 = vpow.pop %v3043
    %v3045 = vsel %vm900, %v3042, 0.0
    %3046 = vadd.xlane.f32.xlu0 %v3045
    %v3047 = vpop.xlane.xlu0 %3046
    %v3048 = vsel %vm904, %v3044, 0.0
    %3049 = vadd.xlane.f32.xlu0 %v3048
    %v3050 = vpop.xlane.xlu0 %3049
    %v3051 = vrcp.pop %v3047
    %v3052 = vrcp.pop %v3050
    %v3053 = vmul.f32 %v3042, %v3051
    %v3054 = vmul.f32 %v3044, %v3052
    %3055 = vrot.lane.b32.xlu0 %v2934, 48
    %v3056 = vpop.permute.xlu0 %3055
    %3057 = vrot.lane.b32.xlu0 %v2935, 48
    %v3058 = vpop.permute.xlu0 %3057
    %v3061 = vsel %vm900, %v3053, 0
    %v3064 = vsel %vm900, %v3054, 0
    %v3066 = vsel %vm935, %v3058, 0
    %3068 = vmatprep.subr.mxu0 0.0
    %3069 = vmatpush1.msra.mxu0 %v3056
    %3070 = vmatprep.subr.mxu0 0.0
    %3071 = vmatpush1.msra.mxu0 %v3066
    %3072 = vmatprep.subr.mxu0 0.0
    %3073 = vmatpush1.msra.mxu0 0.0
    %3074 = vmatprep.subr.mxu0 0.0
    %3075 = vmatpush1.msra.mxu0 0.0
    %3076 = vmatprep.subr.mxu0 0.0
    %3077 = vmatpush1.msra.mxu0 0.0
    %3078 = vmatprep.subr.mxu0 0.0
    %3079 = vmatpush1.msra.mxu0 0.0
    %3080 = vmatprep.subr.mxu0 0.0
    %3081 = vmatpush1.msra.mxu0 0.0
    %3082 = vmatprep.subr.mxu0 0.0
    %3083 = vmatpush1.msra.mxu0 0.0
    %3084 = vmatprep.subr.mxu0 0.0
    %3085 = vmatpush1.msra.mxu0 0.0
    %3086 = vmatprep.subr.mxu0 0.0
    %3087 = vmatpush1.msra.mxu0 0.0
    %3088 = vmatprep.subr.mxu0 0.0
    %3089 = vmatpush1.msra.mxu0 0.0
    %3090 = vmatprep.subr.mxu0 0.0
    %3091 = vmatpush1.msra.mxu0 0.0
    %3092 = vmatprep.subr.mxu0 0.0
    %3093 = vmatpush1.msra.mxu0 0.0
    %3094 = vmatprep.subr.mxu0 0.0
    %3095 = vmatpush1.msra.mxu0 0.0
    %3096 = vmatprep.subr.mxu0 0.0
    %3097 = vmatpush1.msra.mxu0 0.0
    %3098 = vmatprep.subr.mxu0 0.0
    %3099 = vmatpush1.msra.mxu0 0.0
    %3100 = vmatprep.subr.mxu0 0.0
    %3101 = vmatpush1.msra.mxu0 0.0
    %3102 = vmatprep.subr.mxu0 0.0
    %3103 = vmatpush1.msra.mxu0 0.0
    %3104 = vmatprep.subr.mxu0 0.0
    %3105 = vmatpush1.msra.mxu0 0.0
    %3106 = vmatprep.subr.mxu0 0.0
    %3107 = vmatpush1.msra.mxu0 0.0
    %3108 = vmatprep.subr.mxu0 0.0
    %3109 = vmatpush1.msra.mxu0 0.0
    %3110 = vmatprep.subr.mxu0 0.0
    %3111 = vmatpush1.msra.mxu0 0.0
    %3112 = vmatprep.subr.mxu0 0.0
    %3113 = vmatpush1.msra.mxu0 0.0
    %3114 = vmatprep.subr.mxu0 0.0
    %3115 = vmatpush1.msra.mxu0 0.0
    %3116 = vmatprep.subr.mxu0 0.0
    %3117 = vmatpush1.msra.mxu0 0.0
    %3118 = vmatprep.subr.mxu0 0.0
    %3119 = vmatpush1.msra.mxu0 0.0
    %3120 = vmatprep.subr.mxu0 0.0
    %3121 = vmatpush1.msra.mxu0 0.0
    %3122 = vmatprep.subr.mxu0 0.0
    %3123 = vmatpush1.msra.mxu0 0.0
    %3124 = vmatprep.subr.mxu0 0.0
    %3125 = vmatpush1.msra.mxu0 0.0
    %3126 = vmatprep.subr.mxu0 0.0
    %3127 = vmatpush1.msra.mxu0 0.0
    %3128 = vmatprep.subr.mxu0 0.0
    %3129 = vmatpush1.msra.mxu0 0.0
    %3130 = vmatprep.subr.mxu0 0.0
    %3131 = vmatpush1.msra.mxu0 0.0
    %3132 = vmatprep.mubr.f32.mxu0 0.0
    %3133 = vmatmul.mubr.f32.gmra.mrb[0].mxu0 %v3061
    %v3134 = vpop.f32.mrb[0].mxu0
    %v3135 = vadd.f32 0.0, %v3134
    %v3136 = vpop.f32.mrb[0].mxu0
    %3137 = vmatprep.mubr.f32.mxu0 0.0
    %3138 = vmatmul.mubr.f32.gmra.mrb[0].mxu0 %v3064
    %v3139 = vpop.f32.mrb[0].mxu0
    %v3140 = vadd.f32 0.0, %v3139
    %v3141 = vpop.f32.mrb[0].mxu0
    %3142 = vdwg.mxu0
    %3145 = vrot.lane.b32.xlu0 %v3135, 16
    %v3146 = vpop.permute.xlu0 %3145
    %3147 = vrot.lane.b32.xlu0 %v3140, 16
    %v3148 = vpop.permute.xlu0 %3147
    %3151 = vst.msk [vmem:[#allocation4 + $0x9] sm:$0xff] %vm1233, %v3146
    %3152 = vst.msk [vmem:[#allocation4 + $0x11] sm:$0x1] %vm1235, %v3148
    %v3153 = vld [vmem:[#allocation4] sm:$0xff]
    %v3154 = vld [vmem:[#allocation4 + $0x8] sm:$0xff]
    %v3155 = vld [vmem:[#allocation4 + $0x10] sm:$0x3]
    %s3156 = scalar_lea.vmem %s10, 32
    %v3157 = vld [vmem:[%s3156] sm:$0xff]
    %v3158 = vld [vmem:[%s3156 + $0x8] sm:$0xff]
    %v3159 = vld [vmem:[%s3156 + $0x10] sm:$0xff]
    %v3160 = vld [vmem:[%s3156 + $0x18] sm:$0xff]
    %s3161 = scalar_lea.vmem %s11, 1
    %v3162 = vld [vmem:[%s3161] sm:$0x1]
    %v3164 = vlaneseq
    %v3165 = vshrl.u32 %v3164, 7
    %v3166 = vsub.s32 0, %v3165
    %v3167 = vrot.slane %v3162, %v3166
    %v3170 = vsel %vm639, %v3153, 0
    %v3173 = vsel %vm639, %v3154, 0
    %v3176 = vsel %vm639, %v3155, 0
    %3178 = vmatprep.subr.mxu0 0.0
    %3179 = vmatpush1.msra.mxu0 %v3157
    %3180 = vmatprep.subr.mxu0 0.0
    %3181 = vmatpush1.msra.mxu0 %v3158
    %3182 = vmatprep.subr.mxu0 0.0
    %3183 = vmatpush1.msra.mxu0 %v3159
    %3184 = vmatprep.subr.mxu0 0.0
    %3185 = vmatpush1.msra.mxu0 %v3160
    %3186 = vmatprep.subr.mxu0 0.0
    %3187 = vmatpush1.msra.mxu0 0.0
    %3188 = vmatprep.subr.mxu0 0.0
    %3189 = vmatpush1.msra.mxu0 0.0
    %3190 = vmatprep.subr.mxu0 0.0
    %3191 = vmatpush1.msra.mxu0 0.0
    %3192 = vmatprep.subr.mxu0 0.0
    %3193 = vmatpush1.msra.mxu0 0.0
    %3194 = vmatprep.subr.mxu0 0.0
    %3195 = vmatpush1.msra.mxu0 0.0
    %3196 = vmatprep.subr.mxu0 0.0
    %3197 = vmatpush1.msra.mxu0 0.0
    %3198 = vmatprep.subr.mxu0 0.0
    %3199 = vmatpush1.msra.mxu0 0.0
    %3200 = vmatprep.subr.mxu0 0.0
    %3201 = vmatpush1.msra.mxu0 0.0
    %3202 = vmatprep.subr.mxu0 0.0
    %3203 = vmatpush1.msra.mxu0 0.0
    %3204 = vmatprep.subr.mxu0 0.0
    %3205 = vmatpush1.msra.mxu0 0.0
    %3206 = vmatprep.subr.mxu0 0.0
    %3207 = vmatpush1.msra.mxu0 0.0
    %3208 = vmatprep.subr.mxu0 0.0
    %3209 = vmatpush1.msra.mxu0 0.0
    %3210 = vmatprep.subr.mxu0 0.0
    %3211 = vmatpush1.msra.mxu0 0.0
    %3212 = vmatprep.subr.mxu0 0.0
    %3213 = vmatpush1.msra.mxu0 0.0
    %3214 = vmatprep.subr.mxu0 0.0
    %3215 = vmatpush1.msra.mxu0 0.0
    %3216 = vmatprep.subr.mxu0 0.0
    %3217 = vmatpush1.msra.mxu0 0.0
    %3218 = vmatprep.subr.mxu0 0.0
    %3219 = vmatpush1.msra.mxu0 0.0
    %3220 = vmatprep.subr.mxu0 0.0
    %3221 = vmatpush1.msra.mxu0 0.0
    %3222 = vmatprep.subr.mxu0 0.0
    %3223 = vmatpush1.msra.mxu0 0.0
    %3224 = vmatprep.subr.mxu0 0.0
    %3225 = vmatpush1.msra.mxu0 0.0
    %3226 = vmatprep.subr.mxu0 0.0
    %3227 = vmatpush1.msra.mxu0 0.0
    %3228 = vmatprep.subr.mxu0 0.0
    %3229 = vmatpush1.msra.mxu0 0.0
    %3230 = vmatprep.subr.mxu0 0.0
    %3231 = vmatpush1.msra.mxu0 0.0
    %3232 = vmatprep.subr.mxu0 0.0
    %3233 = vmatpush1.msra.mxu0 0.0
    %3234 = vmatprep.subr.mxu0 0.0
    %3235 = vmatpush1.msra.mxu0 0.0
    %3236 = vmatprep.subr.mxu0 0.0
    %3237 = vmatpush1.msra.mxu0 0.0
    %3238 = vmatprep.subr.mxu0 0.0
    %3239 = vmatpush1.msra.mxu0 0.0
    %3240 = vmatprep.subr.mxu0 0.0
    %3241 = vmatpush1.msra.mxu0 0.0
    %3242 = vmatprep.mubr.f32.mxu0 0.0
    %3243 = vmatmul.mubr.f32.gmra.mrb[0].mxu0 %v3170
    %v3244 = vpop.f32.mrb[0].mxu0
    %v3245 = vadd.f32 %v3167, %v3244
    %v3246 = vpop.f32.mrb[0].mxu0
    %3247 = vmatprep.mubr.f32.mxu0 0.0
    %3248 = vmatmul.mubr.f32.gmra.mrb[0].mxu0 %v3173
    %v3249 = vpop.f32.mrb[0].mxu0
    %v3250 = vadd.f32 %v3167, %v3249
    %v3251 = vpop.f32.mrb[0].mxu0
    %3252 = vmatprep.mubr.f32.mxu0 0.0
    %3253 = vmatmul.mubr.f32.gmra.mrb[0].mxu0 %v3176
    %v3254 = vpop.f32.mrb[0].mxu0
    %v3255 = vadd.f32 %v3167, %v3254
    %v3256 = vpop.f32.mrb[0].mxu0
    %3257 = vdwg.mxu0
    %s3258 = scalar_lea.vmem %s12, 1
    %v3259 = vld [vmem:[%s3258] sm:$0x1]
    %v3261 = vlaneseq
    %v3262 = vshrl.u32 %v3261, 7
    %v3263 = vsub.s32 0, %v3262
    %v3264 = vrot.slane %v3259, %v3263
    %v3266 = vmul.f32 %v3245, %v3264
    %v3267 = vmul.f32 %v3250, %v3264
    %v3268 = vmul.f32 %v3255, %v3264
    %v3269 = vadd.f32 %v2132, %v3266
    %v3270 = vadd.f32 %v2133, %v3267
    %v3271 = vadd.f32 %v2134, %v3268
    %s3272 = scalar_lea.vmem %s13, 1
    %v3273 = vld [vmem:[%s3272] sm:$0x1]
    %s3274 = scalar_lea.vmem %s14, 1
    %v3275 = vld [vmem:[%s3274] sm:$0x1]
    %v3276 = vsel %vm639, %v3269, 0.0
    %3277 = vadd.xlane.f32.xlu0 %v3276
    %v3278 = vpop.xlane.xlu0 %3277
    %v3279 = vsel %vm639, %v3270, 0.0
    %3280 = vadd.xlane.f32.xlu0 %v3279
    %v3281 = vpop.xlane.xlu0 %3280
    %v3282 = vsel %vm646, %v3271, 0.0
    %3283 = vadd.xlane.f32.xlu0 %v3282
    %v3284 = vpop.xlane.xlu0 %3283
    %v3285 = vmul.f32 %v3278, %v650
    %v3286 = vmul.f32 %v3281, %v650
    %v3287 = vmul.f32 %v3284, %v650
    %v3288 = vsub.f32 %v3269, %v3285
    %v3289 = vsub.f32 %v3270, %v3286
    %v3290 = vsub.f32 %v3271, %v3287
    %v3291 = vmul.f32 %v3288, %v3288
    %v3292 = vmul.f32 %v3289, %v3289
    %v3293 = vmul.f32 %v3290, %v3290
    %v3294 = vsel %vm639, %v3291, 0.0
    %3295 = vadd.xlane.f32.xlu0 %v3294
    %v3296 = vpop.xlane.xlu0 %3295
    %v3297 = vsel %vm639, %v3292, 0.0
    %3298 = vadd.xlane.f32.xlu0 %v3297
    %v3299 = vpop.xlane.xlu0 %3298
    %v3300 = vsel %vm646, %v3293, 0.0
    %3301 = vadd.xlane.f32.xlu0 %v3300
    %v3302 = vpop.xlane.xlu0 %3301
    %v3303 = vmul.f32 %v3296, %v650
    %v3304 = vmul.f32 %v3299, %v650
    %v3305 = vmul.f32 %v3302, %v650
    %v3306 = vadd.f32 %v3303, 1e-06
    %v3307 = vadd.f32 %v3304, 1e-06
    %v3308 = vadd.f32 %v3305, 1e-06
    %v3309 = vrsqrt.pop %v3306
    %v3310 = vrsqrt.pop %v3307
    %v3311 = vrsqrt.pop %v3308
    %v3312 = vmul.f32 %v3288, %v3309
    %v3313 = vmul.f32 %v3289, %v3310
    %v3314 = vmul.f32 %v3290, %v3311
    %v3316 = vlaneseq
    %v3317 = vshrl.u32 %v3316, 7
    %v3318 = vsub.s32 0, %v3317
    %v3319 = vrot.slane %v3273, %v3318
    %v3321 = vmul.f32 %v3312, %v3319
    %v3322 = vmul.f32 %v3313, %v3319
    %v3323 = vmul.f32 %v3314, %v3319
    %v3325 = vlaneseq
    %v3326 = vshrl.u32 %v3325, 7
    %v3327 = vsub.s32 0, %v3326
    %v3328 = vrot.slane %v3275, %v3327
    %v3330 = vadd.f32 %v3321, %v3328
    %v3331 = vadd.f32 %v3322, %v3328
    %v3332 = vadd.f32 %v3323, %v3328
    %s3333 = scalar_lea.vmem %s15, 32
    %v3334 = vld [vmem:[%s3333] sm:$0xff]
    %v3335 = vld [vmem:[%s3333 + $0x8] sm:$0xff]
    %v3336 = vld [vmem:[%s3333 + $0x10] sm:$0xff]
    %v3337 = vld [vmem:[%s3333 + $0x18] sm:$0xff]
    %s3338 = scalar_lea.vmem %s16, 1
    %v3339 = vld [vmem:[%s3338] sm:$0x1]
    %v3341 = vlaneseq
    %v3342 = vshrl.u32 %v3341, 7
    %v3343 = vsub.s32 0, %v3342
    %v3344 = vrot.slane %v3339, %v3343
    %v3347 = vsel %vm639, %v3330, 0
    %v3350 = vsel %vm639, %v3331, 0
    %v3353 = vsel %vm639, %v3332, 0
    %3355 = vmatprep.subr.mxu0 0.0
    %3356 = vmatpush1.msra.mxu0 %v3334
    %3357 = vmatprep.subr.mxu0 0.0
    %3358 = vmatpush1.msra.mxu0 %v3335
    %3359 = vmatprep.subr.mxu0 0.0
    %3360 = vmatpush1.msra.mxu0 %v3336
    %3361 = vmatprep.subr.mxu0 0.0
    %3362 = vmatpush1.msra.mxu0 %v3337
    %3363 = vmatprep.subr.mxu0 0.0
    %3364 = vmatpush1.msra.mxu0 0.0
    %3365 = vmatprep.subr.mxu0 0.0
    %3366 = vmatpush1.msra.mxu0 0.0
    %3367 = vmatprep.subr.mxu0 0.0
    %3368 = vmatpush1.msra.mxu0 0.0
    %3369 = vmatprep.subr.mxu0 0.0
    %3370 = vmatpush1.msra.mxu0 0.0
    %3371 = vmatprep.subr.mxu0 0.0
    %3372 = vmatpush1.msra.mxu0 0.0
    %3373 = vmatprep.subr.mxu0 0.0
    %3374 = vmatpush1.msra.mxu0 0.0
    %3375 = vmatprep.subr.mxu0 0.0
    %3376 = vmatpush1.msra.mxu0 0.0
    %3377 = vmatprep.subr.mxu0 0.0
    %3378 = vmatpush1.msra.mxu0 0.0
    %3379 = vmatprep.subr.mxu0 0.0
    %3380 = vmatpush1.msra.mxu0 0.0
    %3381 = vmatprep.subr.mxu0 0.0
    %3382 = vmatpush1.msra.mxu0 0.0
    %3383 = vmatprep.subr.mxu0 0.0
    %3384 = vmatpush1.msra.mxu0 0.0
    %3385 = vmatprep.subr.mxu0 0.0
    %3386 = vmatpush1.msra.mxu0 0.0
    %3387 = vmatprep.subr.mxu0 0.0
    %3388 = vmatpush1.msra.mxu0 0.0
    %3389 = vmatprep.subr.mxu0 0.0
    %3390 = vmatpush1.msra.mxu0 0.0
    %3391 = vmatprep.subr.mxu0 0.0
    %3392 = vmatpush1.msra.mxu0 0.0
    %3393 = vmatprep.subr.mxu0 0.0
    %3394 = vmatpush1.msra.mxu0 0.0
    %3395 = vmatprep.subr.mxu0 0.0
    %3396 = vmatpush1.msra.mxu0 0.0
    %3397 = vmatprep.subr.mxu0 0.0
    %3398 = vmatpush1.msra.mxu0 0.0
    %3399 = vmatprep.subr.mxu0 0.0
    %3400 = vmatpush1.msra.mxu0 0.0
    %3401 = vmatprep.subr.mxu0 0.0
    %3402 = vmatpush1.msra.mxu0 0.0
    %3403 = vmatprep.subr.mxu0 0.0
    %3404 = vmatpush1.msra.mxu0 0.0
    %3405 = vmatprep.subr.mxu0 0.0
    %3406 = vmatpush1.msra.mxu0 0.0
    %3407 = vmatprep.subr.mxu0 0.0
    %3408 = vmatpush1.msra.mxu0 0.0
    %3409 = vmatprep.subr.mxu0 0.0
    %3410 = vmatpush1.msra.mxu0 0.0
    %3411 = vmatprep.subr.mxu0 0.0
    %3412 = vmatpush1.msra.mxu0 0.0
    %3413 = vmatprep.subr.mxu0 0.0
    %3414 = vmatpush1.msra.mxu0 0.0
    %3415 = vmatprep.subr.mxu0 0.0
    %3416 = vmatpush1.msra.mxu0 0.0
    %3417 = vmatprep.subr.mxu0 0.0
    %3418 = vmatpush1.msra.mxu0 0.0
    %3419 = vmatprep.mubr.f32.mxu0 0.0
    %3420 = vmatmul.mubr.f32.gmra.mrb[0].mxu0 %v3347
    %v3421 = vpop.f32.mrb[0].mxu0
    %v3422 = vadd.f32 %v3344, %v3421
    %v3423 = vpop.f32.mrb[0].mxu0
    %3424 = vmatprep.mubr.f32.mxu0 0.0
    %3425 = vmatmul.mubr.f32.gmra.mrb[0].mxu0 %v3350
    %v3426 = vpop.f32.mrb[0].mxu0
    %v3427 = vadd.f32 %v3344, %v3426
    %v3428 = vpop.f32.mrb[0].mxu0
    %3429 = vmatprep.mubr.f32.mxu0 0.0
    %3430 = vmatmul.mubr.f32.gmra.mrb[0].mxu0 %v3353
    %v3431 = vpop.f32.mrb[0].mxu0
    %v3432 = vadd.f32 %v3344, %v3431
    %v3433 = vpop.f32.mrb[0].mxu0
    %3434 = vdwg.mxu0
    %v3435 = vmul.f32 %v3422, 0.70710677
    %v3436 = vmul.f32 %v3427, 0.70710677
    %v3437 = vmul.f32 %v3432, 0.70710677
    %vm3438 = vcmp.ge.f32.partialorder %v3435, 0.0
    %vm3439 = vcmp.ge.f32.partialorder %v3436, 0.0
    %vm3440 = vcmp.ge.f32.partialorder %v3437, 0.0
    %v3441 = vsel %vm3438, 1.0, -1.0
    %v3442 = vsel %vm3439, 1.0, -1.0
    %v3443 = vsel %vm3440, 1.0, -1.0
    %v3444 = vand.u32 2147483647, %v3435
    %v3445 = vand.u32 2147483647, %v3436
    %v3446 = vand.u32 2147483647, %v3437
    %v3447 = vmul.f32 %v3444, 0.3275911
    %v3448 = vmul.f32 %v3445, 0.3275911
    %v3449 = vmul.f32 %v3446, 0.3275911
    %v3450 = vadd.f32 %v3447, 1.0
    %v3451 = vadd.f32 %v3448, 1.0
    %v3452 = vadd.f32 %v3449, 1.0
    %v3453 = vrcp.pop %v3450
    %v3454 = vmul.f32 1.0, %v3453
    %v3455 = vrcp.pop %v3451
    %v3456 = vmul.f32 1.0, %v3455
    %v3457 = vrcp.pop %v3452
    %v3458 = vmul.f32 1.0, %v3457
    %v3459 = vmul.f32 %v3454, 1.0614054
    %v3460 = vmul.f32 %v3456, 1.0614054
    %v3461 = vmul.f32 %v3458, 1.0614054
    %v3462 = vsub.f32 %v3459, 1.4531521
    %v3463 = vsub.f32 %v3460, 1.4531521
    %v3464 = vsub.f32 %v3461, 1.4531521
    %v3465 = vmul.f32 %v3462, %v3454
    %v3466 = vmul.f32 %v3463, %v3456
    %v3467 = vmul.f32 %v3464, %v3458
    %v3468 = vadd.f32 %v3465, 1.4214138
    %v3469 = vadd.f32 %v3466, 1.4214138
    %v3470 = vadd.f32 %v3467, 1.4214138
    %v3471 = vmul.f32 %v3468, %v3454
    %v3472 = vmul.f32 %v3469, %v3456
    %v3473 = vmul.f32 %v3470, %v3458
    %v3474 = vsub.f32 %v3471, 0.28449672
    %v3475 = vsub.f32 %v3472, 0.28449672
    %v3476 = vsub.f32 %v3473, 0.28449672
    %v3477 = vmul.f32 %v3474, %v3454
    %v3478 = vmul.f32 %v3475, %v3456
    %v3479 = vmul.f32 %v3476, %v3458
    %v3480 = vadd.f32 %v3477, 0.2548296
    %v3481 = vadd.f32 %v3478, 0.2548296
    %v3482 = vadd.f32 %v3479, 0.2548296
    %v3483 = vmul.f32 %v3480, %v3454
    %v3484 = vmul.f32 %v3481, %v3456
    %v3485 = vmul.f32 %v3482, %v3458
    %v3486 = vsub.f32 0.0, %v3444
    %v3487 = vsub.f32 0.0, %v3445
    %v3488 = vsub.f32 0.0, %v3446
    %v3489 = vmul.f32 %v3486, %v3444
    %v3490 = vmul.f32 %v3487, %v3445
    %v3491 = vmul.f32 %v3488, %v3446
    %v3492 = vmul.f32 %v3489, 1.442695
    %v3493 = vpow.pop %v3492
    %v3494 = vmul.f32 %v3490, 1.442695
    %v3495 = vpow.pop %v3494
    %v3496 = vmul.f32 %v3491, 1.442695
    %v3497 = vpow.pop %v3496
    %v3498 = vmul.f32 %v3483, %v3493
    %v3499 = vmul.f32 %v3484, %v3495
    %v3500 = vmul.f32 %v3485, %v3497
    %v3501 = vsub.f32 1.0, %v3498
    %v3502 = vsub.f32 1.0, %v3499
    %v3503 = vsub.f32 1.0, %v3500
    %v3504 = vmul.f32 %v3441, %v3501
    %v3505 = vmul.f32 %v3442, %v3502
    %v3506 = vmul.f32 %v3443, %v3503
    %v3507 = vmul.f32 %v3422, 0.5
    %v3508 = vmul.f32 %v3427, 0.5
    %v3509 = vmul.f32 %v3432, 0.5
    %v3510 = vadd.f32 %v3504, 1.0
    %v3511 = vadd.f32 %v3505, 1.0
    %v3512 = vadd.f32 %v3506, 1.0
    %v3513 = vmul.f32 %v3507, %v3510
    %v3514 = vmul.f32 %v3508, %v3511
    %v3515 = vmul.f32 %v3509, %v3512
    %s3516 = scalar_lea.vmem %s17, 128
    %v3517 = vld [vmem:[%s3516] sm:$0xff]
    %v3518 = vld [vmem:[%s3516 + $0x8] sm:$0xff]
    %v3519 = vld [vmem:[%s3516 + $0x10] sm:$0xff]
    %v3520 = vld [vmem:[%s3516 + $0x18] sm:$0xff]
    %v3521 = vld [vmem:[%s3516 + $0x20] sm:$0xff]
    %v3522 = vld [vmem:[%s3516 + $0x28] sm:$0xff]
    %v3523 = vld [vmem:[%s3516 + $0x30] sm:$0xff]
    %v3524 = vld [vmem:[%s3516 + $0x38] sm:$0xff]
    %v3525 = vld [vmem:[%s3516 + $0x40] sm:$0xff]
    %v3526 = vld [vmem:[%s3516 + $0x48] sm:$0xff]
    %v3527 = vld [vmem:[%s3516 + $0x50] sm:$0xff]
    %v3528 = vld [vmem:[%s3516 + $0x58] sm:$0xff]
    %v3529 = vld [vmem:[%s3516 + $0x60] sm:$0xff]
    %v3530 = vld [vmem:[%s3516 + $0x68] sm:$0xff]
    %v3531 = vld [vmem:[%s3516 + $0x70] sm:$0xff]
    %v3532 = vld [vmem:[%s3516 + $0x78] sm:$0xff]
    %s3533 = scalar_lea.vmem %s18, 1
    %v3534 = vld [vmem:[%s3533] sm:$0x1]
    %v3536 = vlaneseq
    %v3537 = vshrl.u32 %v3536, 7
    %v3538 = vsub.s32 0, %v3537
    %v3539 = vrot.slane %v3534, %v3538
    %3541 = vmatprep.subr.mxu0 0.0
    %3542 = vmatpush1.msra.mxu0 %v3517
    %3543 = vmatprep.subr.mxu0 0.0
    %3544 = vmatpush1.msra.mxu0 %v3518
    %3545 = vmatprep.subr.mxu0 0.0
    %3546 = vmatpush1.msra.mxu0 %v3519
    %3547 = vmatprep.subr.mxu0 0.0
    %3548 = vmatpush1.msra.mxu0 %v3520
    %3549 = vmatprep.subr.mxu0 0.0
    %3550 = vmatpush1.msra.mxu0 %v3521
    %3551 = vmatprep.subr.mxu0 0.0
    %3552 = vmatpush1.msra.mxu0 %v3522
    %3553 = vmatprep.subr.mxu0 0.0
    %3554 = vmatpush1.msra.mxu0 %v3523
    %3555 = vmatprep.subr.mxu0 0.0
    %3556 = vmatpush1.msra.mxu0 %v3524
    %3557 = vmatprep.subr.mxu0 0.0
    %3558 = vmatpush1.msra.mxu0 %v3525
    %3559 = vmatprep.subr.mxu0 0.0
    %3560 = vmatpush1.msra.mxu0 %v3526
    %3561 = vmatprep.subr.mxu0 0.0
    %3562 = vmatpush1.msra.mxu0 %v3527
    %3563 = vmatprep.subr.mxu0 0.0
    %3564 = vmatpush1.msra.mxu0 %v3528
    %3565 = vmatprep.subr.mxu0 0.0
    %3566 = vmatpush1.msra.mxu0 %v3529
    %3567 = vmatprep.subr.mxu0 0.0
    %3568 = vmatpush1.msra.mxu0 %v3530
    %3569 = vmatprep.subr.mxu0 0.0
    %3570 = vmatpush1.msra.mxu0 %v3531
    %3571 = vmatprep.subr.mxu0 0.0
    %3572 = vmatpush1.msra.mxu0 %v3532
    %3573 = vmatprep.subr.mxu0 0.0
    %3574 = vmatpush1.msra.mxu0 0.0
    %3575 = vmatprep.subr.mxu0 0.0
    %3576 = vmatpush1.msra.mxu0 0.0
    %3577 = vmatprep.subr.mxu0 0.0
    %3578 = vmatpush1.msra.mxu0 0.0
    %3579 = vmatprep.subr.mxu0 0.0
    %3580 = vmatpush1.msra.mxu0 0.0
    %3581 = vmatprep.subr.mxu0 0.0
    %3582 = vmatpush1.msra.mxu0 0.0
    %3583 = vmatprep.subr.mxu0 0.0
    %3584 = vmatpush1.msra.mxu0 0.0
    %3585 = vmatprep.subr.mxu0 0.0
    %3586 = vmatpush1.msra.mxu0 0.0
    %3587 = vmatprep.subr.mxu0 0.0
    %3588 = vmatpush1.msra.mxu0 0.0
    %3589 = vmatprep.subr.mxu0 0.0
    %3590 = vmatpush1.msra.mxu0 0.0
    %3591 = vmatprep.subr.mxu0 0.0
    %3592 = vmatpush1.msra.mxu0 0.0
    %3593 = vmatprep.subr.mxu0 0.0
    %3594 = vmatpush1.msra.mxu0 0.0
    %3595 = vmatprep.subr.mxu0 0.0
    %3596 = vmatpush1.msra.mxu0 0.0
    %3597 = vmatprep.subr.mxu0 0.0
    %3598 = vmatpush1.msra.mxu0 0.0
    %3599 = vmatprep.subr.mxu0 0.0
    %3600 = vmatpush1.msra.mxu0 0.0
    %3601 = vmatprep.subr.mxu0 0.0
    %3602 = vmatpush1.msra.mxu0 0.0
    %3603 = vmatprep.subr.mxu0 0.0
    %3604 = vmatpush1.msra.mxu0 0.0
    %3605 = vmatprep.mubr.f32.mxu0 0.0
    %3606 = vmatmul.mubr.f32.gmra.mrb[0].mxu0 %v3513
    %v3607 = vpop.f32.mrb[0].mxu0
    %v3608 = vadd.f32 %v3539, %v3607
    %v3609 = vpop.f32.mrb[0].mxu0
    %3610 = vmatprep.mubr.f32.mxu0 0.0
    %3611 = vmatmul.mubr.f32.gmra.mrb[0].mxu0 %v3514
    %v3612 = vpop.f32.mrb[0].mxu0
    %v3613 = vadd.f32 %v3539, %v3612
    %v3614 = vpop.f32.mrb[0].mxu0
    %3615 = vmatprep.mubr.f32.mxu0 0.0
    %3616 = vmatmul.mubr.f32.gmra.mrb[0].mxu0 %v3515
    %v3617 = vpop.f32.mrb[0].mxu0
    %v3618 = vadd.f32 %v3539, %v3617
    %v3619 = vpop.f32.mrb[0].mxu0
    %3620 = vdwg.mxu0
    %s3621 = scalar_lea.vmem %s19, 1
    %v3622 = vld [vmem:[%s3621] sm:$0x1]
    %v3624 = vlaneseq
    %v3625 = vshrl.u32 %v3624, 7
    %v3626 = vsub.s32 0, %v3625
    %v3627 = vrot.slane %v3622, %v3626
    %v3629 = vmul.f32 %v3608, %v3627
    %v3630 = vmul.f32 %v3613, %v3627
    %v3631 = vmul.f32 %v3618, %v3627
    %v3632 = vadd.f32 %v3269, %v3629
    %v3633 = vadd.f32 %v3270, %v3630
    %v3634 = vadd.f32 %v3271, %v3631
    %3635 = vst.msk [vmem:[#allocation2] sm:$0xff] %vm639, %v3632
    %3636 = vst.msk [vmem:[#allocation2 + $0x8] sm:$0xff] %vm639, %v3633
    %3637 = vst.msk [vmem:[#allocation2 + $0x10] sm:$0x3] %vm646, %v3634
    %v3638 = vld [vmem:[#allocation2] sm:$0x1]
    %3639 = vst.msk [vmem:[#allocation5] sm:$0x1] %vm164, %v3638
    %v3640 = vld [vmem:[#allocation2 + $0x9] sm:$0x1]
    %3641 = vst.msk [vmem:[#allocation5 + $0x1] sm:$0x1] %vm164, %v3640
    %v3642 = vld [vmem:[%s20] sm:$0x1]
    %v3643 = vld [vmem:[%s21] sm:$0x1]
    %v3644 = vld [vmem:[#allocation5] sm:$0x3]
    %v3645 = vsel %vm646, %v3644, 0.0
    %3646 = vadd.xlane.f32.xlu0 %v3645
    %v3647 = vpop.xlane.xlu0 %3646
    %v3648 = vmul.f32 %v3647, %v650
    %v3649 = vsub.f32 %v3644, %v3648
    %v3650 = vmul.f32 %v3649, %v3649
    %v3651 = vsel %vm646, %v3650, 0.0
    %3652 = vadd.xlane.f32.xlu0 %v3651
    %v3653 = vpop.xlane.xlu0 %3652
    %v3654 = vmul.f32 %v3653, %v650
    %v3655 = vadd.f32 %v3654, 1e-06
    %v3656 = vrsqrt.pop %v3655
    %v3657 = vmul.f32 %v3649, %v3656
    %v3659 = vlaneseq
    %v3660 = vshrl.u32 %v3659, 7
    %v3661 = vsub.s32 0, %v3660
    %v3662 = vrot.slane %v3642, %v3661
    %v3664 = vmul.f32 %v3657, %v3662
    %v3666 = vlaneseq
    %v3667 = vshrl.u32 %v3666, 7
    %v3668 = vsub.s32 0, %v3667
    %v3669 = vrot.slane %v3643, %v3668
    %v3671 = vadd.f32 %v3664, %v3669
    %v3672 = vsel %vm646, %v3671, 0.0
    %3673 = vadd.xlane.f32.xlu0 %v3672
    %v3674 = vpop.xlane.xlu0 %3673
    %v3675 = vmul.f32 %v3674, %v650
    %v3676 = vsub.f32 %v3671, %v3675
    %v3677 = vmul.f32 %v3676, %v3676
    %v3678 = vsel %vm646, %v3677, 0.0
    %3679 = vadd.xlane.f32.xlu0 %v3678
    %v3680 = vpop.xlane.xlu0 %3679
    %v3681 = vmul.f32 %v3680, %v650
    %v3682 = vadd.f32 %v3681, 1e-06
    %v3683 = vrsqrt.pop %v3682
    %v3684 = vmul.f32 %v3676, %v3683
    %v3685 = vmul.f32 %v3684, %v3662
    %v3686 = vadd.f32 %v3685, %v3669
    %v3687 = vld [vmem:[%s22] sm:$0xff]
    %v3688 = vld [vmem:[%s22 + $0x8] sm:$0xff]
    %v3689 = vld [vmem:[%s22 + $0x10] sm:$0xff]
    %v3690 = vld [vmem:[%s22 + $0x18] sm:$0xff]
    %v3691 = vld [vmem:[%s22 + $0x20] sm:$0xff]
    %v3692 = vld [vmem:[%s22 + $0x28] sm:$0xff]
    %v3693 = vld [vmem:[%s22 + $0x30] sm:$0xff]
    %v3694 = vld [vmem:[%s22 + $0x38] sm:$0xff]
    %v3695 = vld [vmem:[%s23] sm:$0x3]
    %v3697 = vlaneseq
    %v3698 = vshrl.u32 %v3697, 7
    %v3699 = vsub.s32 0, %v3698
    %v3700 = vrot.slane %v3695, %v3699
    %v3701 = vlaneseq
    %v3702 = vshrl.u32 %v3701, 7
    %v3703 = vsub.s32 1, %v3702
    %v3704 = vrot.slane %v3695, %v3703
    %v3708 = vsel %vm639, %v3686, 0
    %3710 = vmatprep.subr.mxu0 %v3688
    %3711 = vmatpush1.msra.mxu0 %v3687
    %3712 = vmatprep.subr.mxu0 %v3690
    %3713 = vmatpush1.msra.mxu0 %v3689
    %3714 = vmatprep.subr.mxu0 %v3692
    %3715 = vmatpush1.msra.mxu0 %v3691
    %3716 = vmatprep.subr.mxu0 %v3694
    %3717 = vmatpush1.msra.mxu0 %v3693
    %3718 = vmatprep.subr.mxu0 0.0
    %3719 = vmatpush1.msra.mxu0 0.0
    %3720 = vmatprep.subr.mxu0 0.0
    %3721 = vmatpush1.msra.mxu0 0.0
    %3722 = vmatprep.subr.mxu0 0.0
    %3723 = vmatpush1.msra.mxu0 0.0
    %3724 = vmatprep.subr.mxu0 0.0
    %3725 = vmatpush1.msra.mxu0 0.0
    %3726 = vmatprep.subr.mxu0 0.0
    %3727 = vmatpush1.msra.mxu0 0.0
    %3728 = vmatprep.subr.mxu0 0.0
    %3729 = vmatpush1.msra.mxu0 0.0
    %3730 = vmatprep.subr.mxu0 0.0
    %3731 = vmatpush1.msra.mxu0 0.0
    %3732 = vmatprep.subr.mxu0 0.0
    %3733 = vmatpush1.msra.mxu0 0.0
    %3734 = vmatprep.subr.mxu0 0.0
    %3735 = vmatpush1.msra.mxu0 0.0
    %3736 = vmatprep.subr.mxu0 0.0
    %3737 = vmatpush1.msra.mxu0 0.0
    %3738 = vmatprep.subr.mxu0 0.0
    %3739 = vmatpush1.msra.mxu0 0.0
    %3740 = vmatprep.subr.mxu0 0.0
    %3741 = vmatpush1.msra.mxu0 0.0
    %3742 = vmatprep.subr.mxu0 0.0
    %3743 = vmatpush1.msra.mxu0 0.0
    %3744 = vmatprep.subr.mxu0 0.0
    %3745 = vmatpush1.msra.mxu0 0.0
    %3746 = vmatprep.subr.mxu0 0.0
    %3747 = vmatpush1.msra.mxu0 0.0
    %3748 = vmatprep.subr.mxu0 0.0
    %3749 = vmatpush1.msra.mxu0 0.0
    %3750 = vmatprep.subr.mxu0 0.0
    %3751 = vmatpush1.msra.mxu0 0.0
    %3752 = vmatprep.subr.mxu0 0.0
    %3753 = vmatpush1.msra.mxu0 0.0
    %3754 = vmatprep.subr.mxu0 0.0
    %3755 = vmatpush1.msra.mxu0 0.0
    %3756 = vmatprep.subr.mxu0 0.0
    %3757 = vmatpush1.msra.mxu0 0.0
    %3758 = vmatprep.subr.mxu0 0.0
    %3759 = vmatpush1.msra.mxu0 0.0
    %3760 = vmatprep.subr.mxu0 0.0
    %3761 = vmatpush1.msra.mxu0 0.0
    %3762 = vmatprep.subr.mxu0 0.0
    %3763 = vmatpush1.msra.mxu0 0.0
    %3764 = vmatprep.subr.mxu0 0.0
    %3765 = vmatpush1.msra.mxu0 0.0
    %3766 = vmatprep.subr.mxu0 0.0
    %3767 = vmatpush1.msra.mxu0 0.0
    %3768 = vmatprep.subr.mxu0 0.0
    %3769 = vmatpush1.msra.mxu0 0.0
    %3770 = vmatprep.subr.mxu0 0.0
    %3771 = vmatpush1.msra.mxu0 0.0
    %3772 = vmatprep.subr.mxu0 0.0
    %3773 = vmatpush1.msra.mxu0 0.0
    %3774 = vmatprep.mubr.f32.mxu0 0.0
    %3775 = vmatmul.mubr.f32.gmra.mrb[0].mxu0 %v3708
    %v3776 = vpop.f32.mrb[0].mxu0
    %v3777 = vadd.f32 %v3700, %v3776
    %v3778 = vpop.f32.mrb[0].mxu0
    %v3779 = vadd.f32 %v3704, %v3778
    %3780 = vdwg.mxu0
    %v3781 = vmax.f32 %v3777, 0.0
    %v3782 = vmax.f32 %v3779, 0.0
    %v3783 = vld [vmem:[%s24] sm:$0xff]
    %v3784 = vld [vmem:[%s24 + $0x8] sm:$0xff]
    %v3785 = vld [vmem:[%s24 + $0x10] sm:$0xff]
    %v3786 = vld [vmem:[%s24 + $0x18] sm:$0xff]
    %v3787 = vld [vmem:[%s24 + $0x20] sm:$0xff]
    %v3788 = vld [vmem:[%s24 + $0x28] sm:$0xff]
    %v3789 = vld [vmem:[%s24 + $0x30] sm:$0xff]
    %v3790 = vld [vmem:[%s24 + $0x38] sm:$0xff]
    %v3791 = vld [vmem:[%s24 + $0x40] sm:$0xff]
    %v3792 = vld [vmem:[%s24 + $0x48] sm:$0xff]
    %v3793 = vld [vmem:[%s24 + $0x50] sm:$0xff]
    %v3794 = vld [vmem:[%s24 + $0x58] sm:$0xff]
    %v3795 = vld [vmem:[%s24 + $0x60] sm:$0xff]
    %v3796 = vld [vmem:[%s24 + $0x68] sm:$0xff]
    %v3797 = vld [vmem:[%s24 + $0x70] sm:$0xff]
    %v3798 = vld [vmem:[%s24 + $0x78] sm:$0xff]
    %v3799 = vld [vmem:[%s24 + $0x80] sm:$0xff]
    %v3800 = vld [vmem:[%s24 + $0x88] sm:$0xff]
    %v3801 = vld [vmem:[%s24 + $0x90] sm:$0xff]
    %v3802 = vld [vmem:[%s24 + $0x98] sm:$0xff]
    %v3803 = vld [vmem:[%s24 + $0xa0] sm:$0xff]
    %v3804 = vld [vmem:[%s24 + $0xa8] sm:$0xff]
    %v3805 = vld [vmem:[%s24 + $0xb0] sm:$0xff]
    %v3806 = vld [vmem:[%s24 + $0xb8] sm:$0xff]
    %v3807 = vld [vmem:[%s24 + $0xc0] sm:$0xff]
    %v3808 = vld [vmem:[%s24 + $0xc8] sm:$0xff]
    %v3809 = vld [vmem:[%s24 + $0xd0] sm:$0xff]
    %v3810 = vld [vmem:[%s24 + $0xd8] sm:$0xff]
    %v3811 = vld [vmem:[%s24 + $0xe0] sm:$0xff]
    %v3812 = vld [vmem:[%s24 + $0xe8] sm:$0xff]
    %v3813 = vld [vmem:[%s24 + $0xf0] sm:$0xff]
    %v3814 = vld [vmem:[%s24 + $0xf8] sm:$0xff]
    %v3815 = vld [vmem:[%s25] sm:$0x1]
    %v3817 = vlaneseq
    %v3818 = vshrl.u32 %v3817, 7
    %v3819 = vsub.s32 0, %v3818
    %v3820 = vrot.slane %v3815, %v3819
    %3822 = vmatprep.subr.mxu0 0.0
    %3823 = vmatpush1.msra.mxu0 %v3783
    %3824 = vmatprep.subr.mxu0 0.0
    %3825 = vmatpush1.msra.mxu0 %v3784
    %3826 = vmatprep.subr.mxu0 0.0
    %3827 = vmatpush1.msra.mxu0 %v3785
    %3828 = vmatprep.subr.mxu0 0.0
    %3829 = vmatpush1.msra.mxu0 %v3786
    %3830 = vmatprep.subr.mxu0 0.0
    %3831 = vmatpush1.msra.mxu0 %v3787
    %3832 = vmatprep.subr.mxu0 0.0
    %3833 = vmatpush1.msra.mxu0 %v3788
    %3834 = vmatprep.subr.mxu0 0.0
    %3835 = vmatpush1.msra.mxu0 %v3789
    %3836 = vmatprep.subr.mxu0 0.0
    %3837 = vmatpush1.msra.mxu0 %v3790
    %3838 = vmatprep.subr.mxu0 0.0
    %3839 = vmatpush1.msra.mxu0 %v3791
    %3840 = vmatprep.subr.mxu0 0.0
    %3841 = vmatpush1.msra.mxu0 %v3792
    %3842 = vmatprep.subr.mxu0 0.0
    %3843 = vmatpush1.msra.mxu0 %v3793
    %3844 = vmatprep.subr.mxu0 0.0
    %3845 = vmatpush1.msra.mxu0 %v3794
    %3846 = vmatprep.subr.mxu0 0.0
    %3847 = vmatpush1.msra.mxu0 %v3795
    %3848 = vmatprep.subr.mxu0 0.0
    %3849 = vmatpush1.msra.mxu0 %v3796
    %3850 = vmatprep.subr.mxu0 0.0
    %3851 = vmatpush1.msra.mxu0 %v3797
    %3852 = vmatprep.subr.mxu0 0.0
    %3853 = vmatpush1.msra.mxu0 %v3798
    %3854 = vmatprep.subr.mxu0 0.0
    %3855 = vmatpush1.msra.mxu0 %v3799
    %3856 = vmatprep.subr.mxu0 0.0
    %3857 = vmatpush1.msra.mxu0 %v3800
    %3858 = vmatprep.subr.mxu0 0.0
    %3859 = vmatpush1.msra.mxu0 %v3801
    %3860 = vmatprep.subr.mxu0 0.0
    %3861 = vmatpush1.msra.mxu0 %v3802
    %3862 = vmatprep.subr.mxu0 0.0
    %3863 = vmatpush1.msra.mxu0 %v3803
    %3864 = vmatprep.subr.mxu0 0.0
    %3865 = vmatpush1.msra.mxu0 %v3804
    %3866 = vmatprep.subr.mxu0 0.0
    %3867 = vmatpush1.msra.mxu0 %v3805
    %3868 = vmatprep.subr.mxu0 0.0
    %3869 = vmatpush1.msra.mxu0 %v3806
    %3870 = vmatprep.subr.mxu0 0.0
    %3871 = vmatpush1.msra.mxu0 %v3807
    %3872 = vmatprep.subr.mxu0 0.0
    %3873 = vmatpush1.msra.mxu0 %v3808
    %3874 = vmatprep.subr.mxu0 0.0
    %3875 = vmatpush1.msra.mxu0 %v3809
    %3876 = vmatprep.subr.mxu0 0.0
    %3877 = vmatpush1.msra.mxu0 %v3810
    %3878 = vmatprep.subr.mxu0 0.0
    %3879 = vmatpush1.msra.mxu0 %v3811
    %3880 = vmatprep.subr.mxu0 0.0
    %3881 = vmatpush1.msra.mxu0 %v3812
    %3882 = vmatprep.subr.mxu0 0.0
    %3883 = vmatpush1.msra.mxu0 %v3813
    %3884 = vmatprep.subr.mxu0 0.0
    %3885 = vmatpush1.msra.mxu0 %v3814
    %3886 = vmatprep.mubr.f32.mxu0 %v3782
    %3887 = vmatmul.mubr.f32.gmra.mrb[0].mxu0 %v3781
    %v3888 = vpop.f32.mrb[0].mxu0
    %v3889 = vadd.f32 %v3820, %v3888
    %v3890 = vpop.f32.mrb[0].mxu0
    %3891 = vdwg.mxu0
    %3892 = vst [vmem:[#allocation6] sm:$0x3] %v3889
    // Predicated region
    $region106: #{forward.1} parent=1 // pred_check
      _
    $region107: #{forward.1} parent=1 // pred_check_branch
      %3894 = sbr.rel (0) target = $region109
    $region108: #{forward.1} parent=1 // pred_region
      %s3896 = ssub.s32 32, 32
      %3897 = vsyncadd [#allocation7], %s3896
      %s3899 = sshll.u32 [#allocation6], 4
      %s3900 = int_to_ptr.vmem [resolvable:$true] %s3899
      %3902 = dma.vmem_to_hbm [thread:$0]  %s3900, 32, %s26, [#allocation7]
    $region109: #{forward.1} parent=1 // pred_fallthru
      _
    // Predicated region
    $region110: #{forward.1} parent=1 // pred_check
      _
    $region111: #{forward.1} parent=1 // pred_check_branch
      %3904 = sbr.rel (0) target = $region113
    $region112: #{forward.1} parent=1 // pred_region
      %3905 = dma.done [#allocation7], 32
    $region113: #{forward.1} parent=1 // pred_fallthru
      _
    %3906 = vsyncpa [#allocation7], 1

</llo_original>
